<compile_context>
chip_gen: v5e
topology: v5e:2x2
jax: 0.10.0
libtpu: 0.0.40
codegen_flags: <defaults>
</compile_context>

<pallas_src>
import functools
import math

import jax
import jax.numpy as jnp
from jax.experimental import pallas as pl
from jax.experimental.pallas import tpu as pltpu

# ----------------------- synthetic (small) BERT config -----------------------
BASE_VOCAB = 29              # underlying SubwordTextEncoder vocab size
VOCAB = BASE_VOCAB + 3       # BertLikeSentencePieceTextEncoder adds cls/sep/mask
CLS_IDX = VOCAB - 3
SEP_IDX = VOCAB - 2
MASK_IDX = VOCAB - 1
EOS_IDX = 1                  # eos id of the underlying text encoder

HIDDEN = 32
NUM_HEADS = 4
HEAD_DIM = HIDDEN // NUM_HEADS
INTERMEDIATE = 64
NUM_LAYERS = 2
MAX_POS = 16
LN_EPS = 1e-12

# ---- packed-parameter layout constants ----
W_IN = 192                    # [Wqkv (0:96) | pad | Wi (128:192)]  (bf16 slab, per layer)
FFN_IN_OFF = 128
VEC_W = 128                   # bias / LN rows padded to one full vreg row
VEC_PER_LAYER = 8             # bqkv, bo, ln1_g, ln1_b, bi, bo2, ln2_g, ln2_b
NUM_VEC_ROWS = 2 + VEC_PER_LAYER * NUM_LAYERS   # + emb_ln gamma/beta


# --------------------------------- kernel ------------------------------------
def _layernorm(h, gamma, beta):
    """h: (R, H) f32; gamma/beta: (1, H) f32."""
    mean = jnp.mean(h, axis=-1, keepdims=True)
    var = jnp.mean(jnp.square(h - mean), axis=-1, keepdims=True)
    return (h - mean) * jax.lax.rsqrt(var + LN_EPS) * gamma + beta


def _encoder_kernel(BB, S, ids_sm, wemb_ref, pos_ref, win_ref, wout_ref, vec_ref,
                    out_ref, x_stage):
    """One grid step processes BB samples of S tokens each (R = BB*S rows)."""
    H, I, NH, HD, L = HIDDEN, INTERMEDIATE, NUM_HEADS, HEAD_DIM, NUM_LAYERS
    bf16, f32 = jnp.bfloat16, jnp.float32
    R = BB * S

    # ---- embeddings: exact per-row gather from the f32 table, ids read from SMEM ----
    # (word + position + type0 embeddings; type embedding row 0 is folded into pos_ref)
    base = pl.program_id(0) * BB
    for r in range(R):
        tok = ids_sm[base + (r // S), r % S]
        row = wemb_ref[pl.ds(tok, 1), :] + pos_ref[(r % S):(r % S) + 1, :]
        x_stage[r:r + 1, :] = row
    h = x_stage[...]                                            # (R, H) f32

    x = _layernorm(h, vec_ref[0:1, 0:H], vec_ref[1:2, 0:H])

    layer_sum = jnp.zeros((R, H), f32)                          # stack(layers).sum(0)

    for l in range(L):
        vb = 2 + VEC_PER_LAYER * l
        bqkv = vec_ref[vb + 0:vb + 1, 0:3 * H]
        bo = vec_ref[vb + 1:vb + 2, 0:H]
        ln1g = vec_ref[vb + 2:vb + 3, 0:H]
        ln1b = vec_ref[vb + 3:vb + 4, 0:H]
        bi = vec_ref[vb + 4:vb + 5, 0:I]
        bo2 = vec_ref[vb + 5:vb + 6, 0:H]
        ln2g = vec_ref[vb + 6:vb + 7, 0:H]
        ln2b = vec_ref[vb + 7:vb + 8, 0:H]

        w_in_l = win_ref[l]                                     # (H, W_IN) bf16
        wqkv = w_in_l[:, 0:3 * H]                               # Q part pre-scaled by 1/sqrt(d)
        wi = w_in_l[:, FFN_IN_OFF:FFN_IN_OFF + I]
        w_out_l = wout_ref[l]                                   # (H + I, H) bf16
        wo = w_out_l[0:H, :]
        wo2 = w_out_l[H:H + I, :]

        # ---- self-attention: one merged QKV matmul over all BB*S rows ----
        qkv = jnp.dot(x.astype(bf16), wqkv, preferred_element_type=f32) + bqkv   # (R, 3H)

        ctx_rows = []
        for bb in range(BB):                                    # scores/context are per-sample
            r0 = bb * S
            qkv_s = qkv[r0:r0 + S, :].astype(bf16)              # (S, 3H)
            heads = []
            for hh in range(NH):
                lo = hh * HD
                q_h = qkv_s[:, lo:lo + HD]
                k_h = qkv_s[:, H + lo:H + lo + HD]
                v_h = qkv_s[:, 2 * H + lo:2 * H + lo + HD]
                s = jax.lax.dot_general(q_h, k_h, (((1,), (1,)), ((), ())),
                                        preferred_element_type=f32)     # (S, S), q @ k^T
                s = s - jnp.max(s, axis=-1, keepdims=True)
                p = jnp.exp(s)
                p = p * pl.reciprocal(jnp.sum(p, axis=-1, keepdims=True), approx=True)
                heads.append(jnp.dot(p.astype(bf16), v_h, preferred_element_type=f32))
            ctx_rows.append(jnp.concatenate(heads, axis=1))     # (S, H): heads in lane bands
        ctx = jnp.concatenate(ctx_rows, axis=0)                 # (R, H)

        # single output projection for all samples/heads
        attn = jnp.dot(ctx.astype(bf16), wo, preferred_element_type=f32) + bo
        x = _layernorm(attn + x, ln1g, ln1b)

        # ---- feed-forward ----
        inter = jnp.dot(x.astype(bf16), wi, preferred_element_type=f32) + bi
        # TODO(synk): pytorch-pretrained-bert uses erf-based GELU; tanh approximation used here.
        inter = 0.5 * inter * (1.0 + jnp.tanh(
            0.7978845608028654 * (inter + 0.044715 * inter * inter * inter)))
        ffn = jnp.dot(inter.astype(bf16), wo2, preferred_element_type=f32) + bo2
        x = _layernorm(ffn + x, ln2g, ln2b)

        layer_sum = layer_sum + x

    # full (BB*S, H) block written once; CLS rows dropped in the XLA wrapper.
    out_ref[...] = layer_sum


# ------------------------------ params & packing ------------------------------
def init_params(key):
    def nrm(k, shape, scale=0.02):
        return scale * jax.random.normal(k, shape, dtype=jnp.float32)

    L, H, I = NUM_LAYERS, HIDDEN, INTERMEDIATE
    keys = jax.random.split(key, 7)
    ln_init = jnp.tile(jnp.stack([jnp.ones((H,), jnp.float32),
                                  jnp.zeros((H,), jnp.float32)])[None], (L, 1, 1))
    return {
        "word_emb": nrm(keys[0], (VOCAB, H)),
        "pos_emb": nrm(keys[1], (MAX_POS, H)),
        "type_emb": nrm(keys[2], (2, H)),
        "emb_ln": jnp.stack([jnp.ones((H,), jnp.float32), jnp.zeros((H,), jnp.float32)]),
        "wqkv": nrm(keys[3], (L, H, 3 * H)),
        "bqkv": jnp.zeros((L, 1, 3 * H), jnp.float32),
        "wo": nrm(keys[4], (L, H, H)),
        "bo": jnp.zeros((L, 1, H), jnp.float32),
        "ln1": ln_init,
        "wi": nrm(keys[5], (L, H, I)),
        "bi": jnp.zeros((L, 1, I), jnp.float32),
        "wo2": nrm(keys[6], (L, I, H)),
        "bo2": jnp.zeros((L, 1, H), jnp.float32),
        "ln2": ln_init,
    }


def pack_params(p):
    """One-time packing of the module's state into the kernel's 5 input slabs."""
    L, H, I = NUM_LAYERS, HIDDEN, INTERMEDIATE
    scale = 1.0 / math.sqrt(HEAD_DIM)

    # fold the 1/sqrt(head_dim) attention scale into the Q projection
    wqkv = p["wqkv"].at[:, :, 0:H].multiply(scale)
    bqkv = p["bqkv"].at[:, :, 0:H].multiply(scale)

    # bf16 weight slabs (MXU inputs)
    w_in = jnp.zeros((L, H, W_IN), jnp.float32)
    w_in = w_in.at[:, :, 0:3 * H].set(wqkv)
    w_in = w_in.at[:, :, FFN_IN_OFF:FFN_IN_OFF + I].set(p["wi"])
    w_in = w_in.astype(jnp.bfloat16)
    w_out = jnp.concatenate([p["wo"], p["wo2"]], axis=1).astype(jnp.bfloat16)  # (L, H+I, H)

    # f32 bias / LayerNorm rows packed into one (rows, 128) slab
    def pad_row(v):
        v = v.reshape(1, -1)
        return jnp.pad(v, ((0, 0), (0, VEC_W - v.shape[1])))

    rows = [pad_row(p["emb_ln"][0]), pad_row(p["emb_ln"][1])]
    for l in range(L):
        rows += [pad_row(bqkv[l, 0]), pad_row(p["bo"][l, 0]),
                 pad_row(p["ln1"][l, 0]), pad_row(p["ln1"][l, 1]),
                 pad_row(p["bi"][l, 0]), pad_row(p["bo2"][l, 0]),
                 pad_row(p["ln2"][l, 0]), pad_row(p["ln2"][l, 1])]
    vecs = jnp.concatenate(rows, axis=0)                        # (NUM_VEC_ROWS, 128)

    # token_type_ids are all zero -> fold type embedding row 0 into the position table
    pos = p["pos_emb"] + p["type_emb"][0:1]

    return {"wemb": p["word_emb"], "pos": pos, "w_in": w_in, "w_out": w_out, "vecs": vecs}


# ------------------------------ model wrapper ----------------------------------
def bert_embedding_predictor(packed, labels):
    """Equivalent of BertEmbeddingPredictor.forward(labels) -> (B, T, HIDDEN)."""
    B, T = labels.shape
    S = T + 1
    assert S <= MAX_POS
    H, I, L = HIDDEN, INTERMEDIATE, NUM_LAYERS

    # -- generate_embedding() preprocessing (tiny int ops) --
    cls_ids = jnp.full((B, 1), CLS_IDX, dtype=labels.dtype)
    bert_labels = jnp.concatenate([cls_ids, labels], axis=1)                   # (B, S)
    bert_labels = jnp.where(bert_labels == EOS_IDX, SEP_IDX, bert_labels).astype(jnp.int32)

    # -- batch folding: BB samples per grid step --
    # B <= 8: single step (folding beats splitting at these tiny sizes);
    # B  > 8: BB = 8, so BB*S is 8-divisible and the grid has >= 2 parallel steps (v7x TCs).
    BB = B if B <= 8 else 8
    B_pad = -(-B // BB) * BB
    if B_pad != B:
        bert_labels = jnp.pad(bert_labels, ((0, B_pad - B), (0, 0)))           # pad ids = 0
    G = B_pad // BB

    kernel = functools.partial(_encoder_kernel, BB, S)
    const2 = lambda g, ids: (0, 0)
    const3 = lambda g, ids: (0, 0, 0)

    out = pl.pallas_call(
        kernel,
        out_shape=jax.ShapeDtypeStruct((B_pad * S, H), jnp.float32),
        grid_spec=pltpu.PrefetchScalarGridSpec(
            num_scalar_prefetch=1,                              # ids -> SMEM
            grid=(G,),
            in_specs=[
                pl.BlockSpec((VOCAB, H), const2),               # word embedding table (f32)
                pl.BlockSpec((MAX_POS, H), const2),             # pos (+type0) table (f32)
                pl.BlockSpec((L, H, W_IN), const3),             # [Wqkv | Wi] slab (bf16)
                pl.BlockSpec((L, H + I, H), const3),            # [Wo ; Wo2] slab (bf16)
                pl.BlockSpec((NUM_VEC_ROWS, VEC_W), const2),    # biases + LayerNorm params (f32)
            ],
            out_specs=pl.BlockSpec((BB * S, H), lambda g, ids: (g, 0)),
            scratch_shapes=[pltpu.VMEM((BB * S, H), jnp.float32)],
        ),
        compiler_params=pltpu.CompilerParams(dimension_semantics=("parallel",)),
    )(bert_labels, packed["wemb"], packed["pos"], packed["w_in"], packed["w_out"],
      packed["vecs"])

    # drop padded samples and the CLS position in XLA (cheap static slice)
    emb = out.reshape(B_pad, S, H)[:B, 1:, :]
    assert labels.shape == emb.shape[:-1]
    return emb


# ---------------------------------- main --------------------------------------
if __name__ == "__main__":
    key = jax.random.PRNGKey(0)
    pkey, lkey = jax.random.split(key)
    params = init_params(pkey)
    packed = pack_params(params)

    B, T = 2, 8
    labels = jax.random.randint(lkey, (B, T), 0, BASE_VOCAB, dtype=jnp.int32)
    labels = labels.at[0, 3].set(EOS_IDX)   # exercise the eos -> sep replacement

    out = jax.jit(bert_embedding_predictor)(packed, labels)
    out = jax.block_until_ready(out)

    assert out.shape == (B, T, HIDDEN), out.shape
    assert out.dtype == jnp.float32
    assert bool(jnp.all(jnp.isfinite(out)))
    print("KERNEL_OK")
</pallas_src>

<mosaic_0001>
module attributes {stable_mosaic.version = 11 : i64} {
  func.func @_encoder_kernel(%arg0: i32, %arg1: memref<2x9xi32, #tpu.memory_space<smem>>, %arg2: memref<32x32xf32, #tpu.memory_space<vmem>>, %arg3: memref<16x32xf32, #tpu.memory_space<vmem>>, %arg4: memref<2x32x192xbf16, #tpu.memory_space<vmem>>, %arg5: memref<2x96x32xbf16, #tpu.memory_space<vmem>>, %arg6: memref<18x128xf32, #tpu.memory_space<vmem>>, %arg7: memref<18x32xf32, #tpu.memory_space<vmem>>, %arg8: memref<18x32xf32, #tpu.memory_space<vmem>>) attributes {dimension_semantics = [#tpu.dimension_semantics<parallel>], iteration_bounds = array<i64: 1>, scalar_prefetch = 1 : i64, scratch_operands = 1 : i64, tpu.core_type = #tpu.core_type<tc>, window_params = [{pipeline_mode = #tpu.pipeline_mode<synchronous>, transform_indices = @transform_0, window_bounds = array<i64: 32, 32>}, {pipeline_mode = #tpu.pipeline_mode<synchronous>, transform_indices = @transform_1, window_bounds = array<i64: 16, 32>}, {pipeline_mode = #tpu.pipeline_mode<synchronous>, transform_indices = @transform_2, window_bounds = array<i64: 2, 32, 192>}, {pipeline_mode = #tpu.pipeline_mode<synchronous>, transform_indices = @transform_3, window_bounds = array<i64: 2, 96, 32>}, {pipeline_mode = #tpu.pipeline_mode<synchronous>, transform_indices = @transform_4, window_bounds = array<i64: 18, 128>}, {transform_indices = @transform_5, window_bounds = array<i64: 18, 32>}]} {
    %c2_i32 = arith.constant 2 : i32
    %0 = arith.muli %arg0, %c2_i32 : i32
    %c0_i32 = arith.constant 0 : i32
    %1 = arith.addi %0, %c0_i32 : i32
    %2 = arith.index_cast %1 : i32 to index
    %c0 = arith.constant 0 : index
    %3 = memref.load %arg1[%2, %c0] : memref<2x9xi32, #tpu.memory_space<smem>>
    %4 = arith.index_cast %3 : i32 to index
    %c0_0 = arith.constant 0 : index
    %5 = vector.load %arg2[%4, %c0_0] : memref<32x32xf32, #tpu.memory_space<vmem>>, vector<1x32xf32>
    %c0_1 = arith.constant 0 : index
    %c0_2 = arith.constant 0 : index
    %6 = vector.load %arg3[%c0_1, %c0_2] : memref<16x32xf32, #tpu.memory_space<vmem>>, vector<1x32xf32>
    %7 = arith.addf %5, %6 : vector<1x32xf32>
    %c0_3 = arith.constant 0 : index
    %c0_4 = arith.constant 0 : index
    %8 = vector.load %arg8[%c0_3, %c0_4] : memref<18x32xf32, #tpu.memory_space<vmem>>, vector<1x32xf32>
    tpu.vector_store %arg8[%c0_3, %c0_4], %7 {strides = array<i32>} : memref<18x32xf32, #tpu.memory_space<vmem>>, vector<1x32xf32>,
    %c0_i32_5 = arith.constant 0 : i32
    %9 = arith.addi %0, %c0_i32_5 : i32
    %10 = arith.index_cast %9 : i32 to index
    %c1 = arith.constant 1 : index
    %11 = memref.load %arg1[%10, %c1] : memref<2x9xi32, #tpu.memory_space<smem>>
    %12 = arith.index_cast %11 : i32 to index
    %c0_6 = arith.constant 0 : index
    %13 = vector.load %arg2[%12, %c0_6] : memref<32x32xf32, #tpu.memory_space<vmem>>, vector<1x32xf32>
    %c1_7 = arith.constant 1 : index
    %c0_8 = arith.constant 0 : index
    %14 = vector.load %arg3[%c1_7, %c0_8] : memref<16x32xf32, #tpu.memory_space<vmem>>, vector<1x32xf32>
    %15 = arith.addf %13, %14 : vector<1x32xf32>
    %c1_9 = arith.constant 1 : index
    %c0_10 = arith.constant 0 : index
    %16 = vector.load %arg8[%c1_9, %c0_10] : memref<18x32xf32, #tpu.memory_space<vmem>>, vector<1x32xf32>
    tpu.vector_store %arg8[%c1_9, %c0_10], %15 {strides = array<i32>} : memref<18x32xf32, #tpu.memory_space<vmem>>, vector<1x32xf32>,
    %c0_i32_11 = arith.constant 0 : i32
    %17 = arith.addi %0, %c0_i32_11 : i32
    %18 = arith.index_cast %17 : i32 to index
    %c2 = arith.constant 2 : index
    %19 = memref.load %arg1[%18, %c2] : memref<2x9xi32, #tpu.memory_space<smem>>
    %20 = arith.index_cast %19 : i32 to index
    %c0_12 = arith.constant 0 : index
    %21 = vector.load %arg2[%20, %c0_12] : memref<32x32xf32, #tpu.memory_space<vmem>>, vector<1x32xf32>
    %c2_13 = arith.constant 2 : index
    %c0_14 = arith.constant 0 : index
    %22 = vector.load %arg3[%c2_13, %c0_14] : memref<16x32xf32, #tpu.memory_space<vmem>>, vector<1x32xf32>
    %23 = arith.addf %21, %22 : vector<1x32xf32>
    %c2_15 = arith.constant 2 : index
    %c0_16 = arith.constant 0 : index
    %24 = vector.load %arg8[%c2_15, %c0_16] : memref<18x32xf32, #tpu.memory_space<vmem>>, vector<1x32xf32>
    tpu.vector_store %arg8[%c2_15, %c0_16], %23 {strides = array<i32>} : memref<18x32xf32, #tpu.memory_space<vmem>>, vector<1x32xf32>,
    %c0_i32_17 = arith.constant 0 : i32
    %25 = arith.addi %0, %c0_i32_17 : i32
    %26 = arith.index_cast %25 : i32 to index
    %c3 = arith.constant 3 : index
    %27 = memref.load %arg1[%26, %c3] : memref<2x9xi32, #tpu.memory_space<smem>>
    %28 = arith.index_cast %27 : i32 to index
    %c0_18 = arith.constant 0 : index
    %29 = vector.load %arg2[%28, %c0_18] : memref<32x32xf32, #tpu.memory_space<vmem>>, vector<1x32xf32>
    %c3_19 = arith.constant 3 : index
    %c0_20 = arith.constant 0 : index
    %30 = vector.load %arg3[%c3_19, %c0_20] : memref<16x32xf32, #tpu.memory_space<vmem>>, vector<1x32xf32>
    %31 = arith.addf %29, %30 : vector<1x32xf32>
    %c3_21 = arith.constant 3 : index
    %c0_22 = arith.constant 0 : index
    %32 = vector.load %arg8[%c3_21, %c0_22] : memref<18x32xf32, #tpu.memory_space<vmem>>, vector<1x32xf32>
    tpu.vector_store %arg8[%c3_21, %c0_22], %31 {strides = array<i32>} : memref<18x32xf32, #tpu.memory_space<vmem>>, vector<1x32xf32>,
    %c0_i32_23 = arith.constant 0 : i32
    %33 = arith.addi %0, %c0_i32_23 : i32
    %34 = arith.index_cast %33 : i32 to index
    %c4 = arith.constant 4 : index
    %35 = memref.load %arg1[%34, %c4] : memref<2x9xi32, #tpu.memory_space<smem>>
    %36 = arith.index_cast %35 : i32 to index
    %c0_24 = arith.constant 0 : index
    %37 = vector.load %arg2[%36, %c0_24] : memref<32x32xf32, #tpu.memory_space<vmem>>, vector<1x32xf32>
    %c4_25 = arith.constant 4 : index
    %c0_26 = arith.constant 0 : index
    %38 = vector.load %arg3[%c4_25, %c0_26] : memref<16x32xf32, #tpu.memory_space<vmem>>, vector<1x32xf32>
    %39 = arith.addf %37, %38 : vector<1x32xf32>
    %c4_27 = arith.constant 4 : index
    %c0_28 = arith.constant 0 : index
    %40 = vector.load %arg8[%c4_27, %c0_28] : memref<18x32xf32, #tpu.memory_space<vmem>>, vector<1x32xf32>
    tpu.vector_store %arg8[%c4_27, %c0_28], %39 {strides = array<i32>} : memref<18x32xf32, #tpu.memory_space<vmem>>, vector<1x32xf32>,
    %c0_i32_29 = arith.constant 0 : i32
    %41 = arith.addi %0, %c0_i32_29 : i32
    %42 = arith.index_cast %41 : i32 to index
    %c5 = arith.constant 5 : index
    %43 = memref.load %arg1[%42, %c5] : memref<2x9xi32, #tpu.memory_space<smem>>
    %44 = arith.index_cast %43 : i32 to index
    %c0_30 = arith.constant 0 : index
    %45 = vector.load %arg2[%44, %c0_30] : memref<32x32xf32, #tpu.memory_space<vmem>>, vector<1x32xf32>
    %c5_31 = arith.constant 5 : index
    %c0_32 = arith.constant 0 : index
    %46 = vector.load %arg3[%c5_31, %c0_32] : memref<16x32xf32, #tpu.memory_space<vmem>>, vector<1x32xf32>
    %47 = arith.addf %45, %46 : vector<1x32xf32>
    %c5_33 = arith.constant 5 : index
    %c0_34 = arith.constant 0 : index
    %48 = vector.load %arg8[%c5_33, %c0_34] : memref<18x32xf32, #tpu.memory_space<vmem>>, vector<1x32xf32>
    tpu.vector_store %arg8[%c5_33, %c0_34], %47 {strides = array<i32>} : memref<18x32xf32, #tpu.memory_space<vmem>>, vector<1x32xf32>,
    %c0_i32_35 = arith.constant 0 : i32
    %49 = arith.addi %0, %c0_i32_35 : i32
    %50 = arith.index_cast %49 : i32 to index
    %c6 = arith.constant 6 : index
    %51 = memref.load %arg1[%50, %c6] : memref<2x9xi32, #tpu.memory_space<smem>>
    %52 = arith.index_cast %51 : i32 to index
    %c0_36 = arith.constant 0 : index
    %53 = vector.load %arg2[%52, %c0_36] : memref<32x32xf32, #tpu.memory_space<vmem>>, vector<1x32xf32>
    %c6_37 = arith.constant 6 : index
    %c0_38 = arith.constant 0 : index
    %54 = vector.load %arg3[%c6_37, %c0_38] : memref<16x32xf32, #tpu.memory_space<vmem>>, vector<1x32xf32>
    %55 = arith.addf %53, %54 : vector<1x32xf32>
    %c6_39 = arith.constant 6 : index
    %c0_40 = arith.constant 0 : index
    %56 = vector.load %arg8[%c6_39, %c0_40] : memref<18x32xf32, #tpu.memory_space<vmem>>, vector<1x32xf32>
    tpu.vector_store %arg8[%c6_39, %c0_40], %55 {strides = array<i32>} : memref<18x32xf32, #tpu.memory_space<vmem>>, vector<1x32xf32>,
    %c0_i32_41 = arith.constant 0 : i32
    %57 = arith.addi %0, %c0_i32_41 : i32
    %58 = arith.index_cast %57 : i32 to index
    %c7 = arith.constant 7 : index
    %59 = memref.load %arg1[%58, %c7] : memref<2x9xi32, #tpu.memory_space<smem>>
    %60 = arith.index_cast %59 : i32 to index
    %c0_42 = arith.constant 0 : index
    %61 = vector.load %arg2[%60, %c0_42] : memref<32x32xf32, #tpu.memory_space<vmem>>, vector<1x32xf32>
    %c7_43 = arith.constant 7 : index
    %c0_44 = arith.constant 0 : index
    %62 = vector.load %arg3[%c7_43, %c0_44] : memref<16x32xf32, #tpu.memory_space<vmem>>, vector<1x32xf32>
    %63 = arith.addf %61, %62 : vector<1x32xf32>
    %c7_45 = arith.constant 7 : index
    %c0_46 = arith.constant 0 : index
    %64 = vector.load %arg8[%c7_45, %c0_46] : memref<18x32xf32, #tpu.memory_space<vmem>>, vector<1x32xf32>
    tpu.vector_store %arg8[%c7_45, %c0_46], %63 {strides = array<i32>} : memref<18x32xf32, #tpu.memory_space<vmem>>, vector<1x32xf32>,
    %c0_i32_47 = arith.constant 0 : i32
    %65 = arith.addi %0, %c0_i32_47 : i32
    %66 = arith.index_cast %65 : i32 to index
    %c8 = arith.constant 8 : index
    %67 = memref.load %arg1[%66, %c8] : memref<2x9xi32, #tpu.memory_space<smem>>
    %68 = arith.index_cast %67 : i32 to index
    %c0_48 = arith.constant 0 : index
    %69 = vector.load %arg2[%68, %c0_48] : memref<32x32xf32, #tpu.memory_space<vmem>>, vector<1x32xf32>
    %c8_49 = arith.constant 8 : index
    %c0_50 = arith.constant 0 : index
    %70 = vector.load %arg3[%c8_49, %c0_50] : memref<16x32xf32, #tpu.memory_space<vmem>>, vector<1x32xf32>
    %71 = arith.addf %69, %70 : vector<1x32xf32>
    %c8_51 = arith.constant 8 : index
    %c0_52 = arith.constant 0 : index
    %72 = vector.load %arg8[%c8_51, %c0_52] : memref<18x32xf32, #tpu.memory_space<vmem>>, vector<1x32xf32>
    tpu.vector_store %arg8[%c8_51, %c0_52], %71 {strides = array<i32>} : memref<18x32xf32, #tpu.memory_space<vmem>>, vector<1x32xf32>,
    %c1_i32 = arith.constant 1 : i32
    %73 = arith.addi %0, %c1_i32 : i32
    %74 = arith.index_cast %73 : i32 to index
    %c0_53 = arith.constant 0 : index
    %75 = memref.load %arg1[%74, %c0_53] : memref<2x9xi32, #tpu.memory_space<smem>>
    %76 = arith.index_cast %75 : i32 to index
    %c0_54 = arith.constant 0 : index
    %77 = vector.load %arg2[%76, %c0_54] : memref<32x32xf32, #tpu.memory_space<vmem>>, vector<1x32xf32>
    %c0_55 = arith.constant 0 : index
    %c0_56 = arith.constant 0 : index
    %78 = vector.load %arg3[%c0_55, %c0_56] : memref<16x32xf32, #tpu.memory_space<vmem>>, vector<1x32xf32>
    %79 = arith.addf %77, %78 : vector<1x32xf32>
    %c9 = arith.constant 9 : index
    %c0_57 = arith.constant 0 : index
    %80 = vector.load %arg8[%c9, %c0_57] : memref<18x32xf32, #tpu.memory_space<vmem>>, vector<1x32xf32>
    tpu.vector_store %arg8[%c9, %c0_57], %79 {strides = array<i32>} : memref<18x32xf32, #tpu.memory_space<vmem>>, vector<1x32xf32>,
    %c1_i32_58 = arith.constant 1 : i32
    %81 = arith.addi %0, %c1_i32_58 : i32
    %82 = arith.index_cast %81 : i32 to index
    %c1_59 = arith.constant 1 : index
    %83 = memref.load %arg1[%82, %c1_59] : memref<2x9xi32, #tpu.memory_space<smem>>
    %84 = arith.index_cast %83 : i32 to index
    %c0_60 = arith.constant 0 : index
    %85 = vector.load %arg2[%84, %c0_60] : memref<32x32xf32, #tpu.memory_space<vmem>>, vector<1x32xf32>
    %c1_61 = arith.constant 1 : index
    %c0_62 = arith.constant 0 : index
    %86 = vector.load %arg3[%c1_61, %c0_62] : memref<16x32xf32, #tpu.memory_space<vmem>>, vector<1x32xf32>
    %87 = arith.addf %85, %86 : vector<1x32xf32>
    %c10 = arith.constant 10 : index
    %c0_63 = arith.constant 0 : index
    %88 = vector.load %arg8[%c10, %c0_63] : memref<18x32xf32, #tpu.memory_space<vmem>>, vector<1x32xf32>
    tpu.vector_store %arg8[%c10, %c0_63], %87 {strides = array<i32>} : memref<18x32xf32, #tpu.memory_space<vmem>>, vector<1x32xf32>,
    %c1_i32_64 = arith.constant 1 : i32
    %89 = arith.addi %0, %c1_i32_64 : i32
    %90 = arith.index_cast %89 : i32 to index
    %c2_65 = arith.constant 2 : index
    %91 = memref.load %arg1[%90, %c2_65] : memref<2x9xi32, #tpu.memory_space<smem>>
    %92 = arith.index_cast %91 : i32 to index
    %c0_66 = arith.constant 0 : index
    %93 = vector.load %arg2[%92, %c0_66] : memref<32x32xf32, #tpu.memory_space<vmem>>, vector<1x32xf32>
    %c2_67 = arith.constant 2 : index
    %c0_68 = arith.constant 0 : index
    %94 = vector.load %arg3[%c2_67, %c0_68] : memref<16x32xf32, #tpu.memory_space<vmem>>, vector<1x32xf32>
    %95 = arith.addf %93, %94 : vector<1x32xf32>
    %c11 = arith.constant 11 : index
    %c0_69 = arith.constant 0 : index
    %96 = vector.load %arg8[%c11, %c0_69] : memref<18x32xf32, #tpu.memory_space<vmem>>, vector<1x32xf32>
    tpu.vector_store %arg8[%c11, %c0_69], %95 {strides = array<i32>} : memref<18x32xf32, #tpu.memory_space<vmem>>, vector<1x32xf32>,
    %c1_i32_70 = arith.constant 1 : i32
    %97 = arith.addi %0, %c1_i32_70 : i32
    %98 = arith.index_cast %97 : i32 to index
    %c3_71 = arith.constant 3 : index
    %99 = memref.load %arg1[%98, %c3_71] : memref<2x9xi32, #tpu.memory_space<smem>>
    %100 = arith.index_cast %99 : i32 to index
    %c0_72 = arith.constant 0 : index
    %101 = vector.load %arg2[%100, %c0_72] : memref<32x32xf32, #tpu.memory_space<vmem>>, vector<1x32xf32>
    %c3_73 = arith.constant 3 : index
    %c0_74 = arith.constant 0 : index
    %102 = vector.load %arg3[%c3_73, %c0_74] : memref<16x32xf32, #tpu.memory_space<vmem>>, vector<1x32xf32>
    %103 = arith.addf %101, %102 : vector<1x32xf32>
    %c12 = arith.constant 12 : index
    %c0_75 = arith.constant 0 : index
    %104 = vector.load %arg8[%c12, %c0_75] : memref<18x32xf32, #tpu.memory_space<vmem>>, vector<1x32xf32>
    tpu.vector_store %arg8[%c12, %c0_75], %103 {strides = array<i32>} : memref<18x32xf32, #tpu.memory_space<vmem>>, vector<1x32xf32>,
    %c1_i32_76 = arith.constant 1 : i32
    %105 = arith.addi %0, %c1_i32_76 : i32
    %106 = arith.index_cast %105 : i32 to index
    %c4_77 = arith.constant 4 : index
    %107 = memref.load %arg1[%106, %c4_77] : memref<2x9xi32, #tpu.memory_space<smem>>
    %108 = arith.index_cast %107 : i32 to index
    %c0_78 = arith.constant 0 : index
    %109 = vector.load %arg2[%108, %c0_78] : memref<32x32xf32, #tpu.memory_space<vmem>>, vector<1x32xf32>
    %c4_79 = arith.constant 4 : index
    %c0_80 = arith.constant 0 : index
    %110 = vector.load %arg3[%c4_79, %c0_80] : memref<16x32xf32, #tpu.memory_space<vmem>>, vector<1x32xf32>
    %111 = arith.addf %109, %110 : vector<1x32xf32>
    %c13 = arith.constant 13 : index
    %c0_81 = arith.constant 0 : index
    %112 = vector.load %arg8[%c13, %c0_81] : memref<18x32xf32, #tpu.memory_space<vmem>>, vector<1x32xf32>
    tpu.vector_store %arg8[%c13, %c0_81], %111 {strides = array<i32>} : memref<18x32xf32, #tpu.memory_space<vmem>>, vector<1x32xf32>,
    %c1_i32_82 = arith.constant 1 : i32
    %113 = arith.addi %0, %c1_i32_82 : i32
    %114 = arith.index_cast %113 : i32 to index
    %c5_83 = arith.constant 5 : index
    %115 = memref.load %arg1[%114, %c5_83] : memref<2x9xi32, #tpu.memory_space<smem>>
    %116 = arith.index_cast %115 : i32 to index
    %c0_84 = arith.constant 0 : index
    %117 = vector.load %arg2[%116, %c0_84] : memref<32x32xf32, #tpu.memory_space<vmem>>, vector<1x32xf32>
    %c5_85 = arith.constant 5 : index
    %c0_86 = arith.constant 0 : index
    %118 = vector.load %arg3[%c5_85, %c0_86] : memref<16x32xf32, #tpu.memory_space<vmem>>, vector<1x32xf32>
    %119 = arith.addf %117, %118 : vector<1x32xf32>
    %c14 = arith.constant 14 : index
    %c0_87 = arith.constant 0 : index
    %120 = vector.load %arg8[%c14, %c0_87] : memref<18x32xf32, #tpu.memory_space<vmem>>, vector<1x32xf32>
    tpu.vector_store %arg8[%c14, %c0_87], %119 {strides = array<i32>} : memref<18x32xf32, #tpu.memory_space<vmem>>, vector<1x32xf32>,
    %c1_i32_88 = arith.constant 1 : i32
    %121 = arith.addi %0, %c1_i32_88 : i32
    %122 = arith.index_cast %121 : i32 to index
    %c6_89 = arith.constant 6 : index
    %123 = memref.load %arg1[%122, %c6_89] : memref<2x9xi32, #tpu.memory_space<smem>>
    %124 = arith.index_cast %123 : i32 to index
    %c0_90 = arith.constant 0 : index
    %125 = vector.load %arg2[%124, %c0_90] : memref<32x32xf32, #tpu.memory_space<vmem>>, vector<1x32xf32>
    %c6_91 = arith.constant 6 : index
    %c0_92 = arith.constant 0 : index
    %126 = vector.load %arg3[%c6_91, %c0_92] : memref<16x32xf32, #tpu.memory_space<vmem>>, vector<1x32xf32>
    %127 = arith.addf %125, %126 : vector<1x32xf32>
    %c15 = arith.constant 15 : index
    %c0_93 = arith.constant 0 : index
    %128 = vector.load %arg8[%c15, %c0_93] : memref<18x32xf32, #tpu.memory_space<vmem>>, vector<1x32xf32>
    tpu.vector_store %arg8[%c15, %c0_93], %127 {strides = array<i32>} : memref<18x32xf32, #tpu.memory_space<vmem>>, vector<1x32xf32>,
    %c1_i32_94 = arith.constant 1 : i32
    %129 = arith.addi %0, %c1_i32_94 : i32
    %130 = arith.index_cast %129 : i32 to index
    %c7_95 = arith.constant 7 : index
    %131 = memref.load %arg1[%130, %c7_95] : memref<2x9xi32, #tpu.memory_space<smem>>
    %132 = arith.index_cast %131 : i32 to index
    %c0_96 = arith.constant 0 : index
    %133 = vector.load %arg2[%132, %c0_96] : memref<32x32xf32, #tpu.memory_space<vmem>>, vector<1x32xf32>
    %c7_97 = arith.constant 7 : index
    %c0_98 = arith.constant 0 : index
    %134 = vector.load %arg3[%c7_97, %c0_98] : memref<16x32xf32, #tpu.memory_space<vmem>>, vector<1x32xf32>
    %135 = arith.addf %133, %134 : vector<1x32xf32>
    %c16 = arith.constant 16 : index
    %c0_99 = arith.constant 0 : index
    %136 = vector.load %arg8[%c16, %c0_99] : memref<18x32xf32, #tpu.memory_space<vmem>>, vector<1x32xf32>
    tpu.vector_store %arg8[%c16, %c0_99], %135 {strides = array<i32>} : memref<18x32xf32, #tpu.memory_space<vmem>>, vector<1x32xf32>,
    %c1_i32_100 = arith.constant 1 : i32
    %137 = arith.addi %0, %c1_i32_100 : i32
    %138 = arith.index_cast %137 : i32 to index
    %c8_101 = arith.constant 8 : index
    %139 = memref.load %arg1[%138, %c8_101] : memref<2x9xi32, #tpu.memory_space<smem>>
    %140 = arith.index_cast %139 : i32 to index
    %c0_102 = arith.constant 0 : index
    %141 = vector.load %arg2[%140, %c0_102] : memref<32x32xf32, #tpu.memory_space<vmem>>, vector<1x32xf32>
    %c8_103 = arith.constant 8 : index
    %c0_104 = arith.constant 0 : index
    %142 = vector.load %arg3[%c8_103, %c0_104] : memref<16x32xf32, #tpu.memory_space<vmem>>, vector<1x32xf32>
    %143 = arith.addf %141, %142 : vector<1x32xf32>
    %c17 = arith.constant 17 : index
    %c0_105 = arith.constant 0 : index
    %144 = vector.load %arg8[%c17, %c0_105] : memref<18x32xf32, #tpu.memory_space<vmem>>, vector<1x32xf32>
    tpu.vector_store %arg8[%c17, %c0_105], %143 {strides = array<i32>} : memref<18x32xf32, #tpu.memory_space<vmem>>, vector<1x32xf32>,
    %c0_106 = arith.constant 0 : index
    %c0_107 = arith.constant 0 : index
    %145 = vector.load %arg8[%c0_106, %c0_107] : memref<18x32xf32, #tpu.memory_space<vmem>>, vector<18x32xf32>
    %c0_108 = arith.constant 0 : index
    %c0_109 = arith.constant 0 : index
    %146 = vector.load %arg6[%c0_108, %c0_109] : memref<18x128xf32, #tpu.memory_space<vmem>>, vector<1x32xf32>
    %c1_110 = arith.constant 1 : index
    %c0_111 = arith.constant 0 : index
    %147 = vector.load %arg6[%c1_110, %c0_111] : memref<18x128xf32, #tpu.memory_space<vmem>>, vector<1x32xf32>
    %cst = arith.constant dense<0.000000e+00> : vector<18xf32>
    %148 = vector.multi_reduction <add>, %145, %cst [1] : vector<18x32xf32> to vector<18xf32>
    %149 = vector.shape_cast %148 : vector<18xf32> to vector<18x1xf32>
    %cst_112 = arith.constant 3.200000e+01 : f32
    %150 = vector.broadcast %cst_112 : f32 to vector<18x1xf32>
    %151 = arith.divf %149, %150 : vector<18x1xf32>
    %152 = vector.broadcast %151 : vector<18x1xf32> to vector<18x32xf32>
    %153 = arith.subf %145, %152 : vector<18x32xf32>
    %154 = arith.mulf %153, %153 : vector<18x32xf32>
    %cst_113 = arith.constant dense<0.000000e+00> : vector<18xf32>
    %155 = vector.multi_reduction <add>, %154, %cst_113 [1] : vector<18x32xf32> to vector<18xf32>
    %156 = vector.shape_cast %155 : vector<18xf32> to vector<18x1xf32>
    %cst_114 = arith.constant 3.200000e+01 : f32
    %157 = vector.broadcast %cst_114 : f32 to vector<18x1xf32>
    %158 = arith.divf %156, %157 : vector<18x1xf32>
    %159 = vector.broadcast %151 : vector<18x1xf32> to vector<18x32xf32>
    %160 = arith.subf %145, %159 : vector<18x32xf32>
    %cst_115 = arith.constant 9.99999996E-13 : f32
    %161 = vector.broadcast %cst_115 : f32 to vector<18x1xf32>
    %162 = arith.addf %158, %161 : vector<18x1xf32>
    %163 = math.rsqrt %162 : vector<18x1xf32>
    %164 = vector.broadcast %163 : vector<18x1xf32> to vector<18x32xf32>
    %165 = arith.mulf %160, %164 : vector<18x32xf32>
    %166 = vector.broadcast %146 : vector<1x32xf32> to vector<18x32xf32>
    %167 = arith.mulf %165, %166 : vector<18x32xf32>
    %168 = vector.broadcast %147 : vector<1x32xf32> to vector<18x32xf32>
    %169 = arith.addf %167, %168 : vector<18x32xf32>
    %cst_116 = arith.constant 0.000000e+00 : f32
    %170 = vector.broadcast %cst_116 : f32 to vector<18x32xf32>
    %c2_117 = arith.constant 2 : index
    %c0_118 = arith.constant 0 : index
    %171 = vector.load %arg6[%c2_117, %c0_118] : memref<18x128xf32, #tpu.memory_space<vmem>>, vector<1x96xf32>
    %c3_119 = arith.constant 3 : index
    %c0_120 = arith.constant 0 : index
    %172 = vector.load %arg6[%c3_119, %c0_120] : memref<18x128xf32, #tpu.memory_space<vmem>>, vector<1x32xf32>
    %c4_121 = arith.constant 4 : index
    %c0_122 = arith.constant 0 : index
    %173 = vector.load %arg6[%c4_121, %c0_122] : memref<18x128xf32, #tpu.memory_space<vmem>>, vector<1x32xf32>
    %c5_123 = arith.constant 5 : index
    %c0_124 = arith.constant 0 : index
    %174 = vector.load %arg6[%c5_123, %c0_124] : memref<18x128xf32, #tpu.memory_space<vmem>>, vector<1x32xf32>
    %c6_125 = arith.constant 6 : index
    %c0_126 = arith.constant 0 : index
    %175 = vector.load %arg6[%c6_125, %c0_126] : memref<18x128xf32, #tpu.memory_space<vmem>>, vector<1x64xf32>
    %c7_127 = arith.constant 7 : index
    %c0_128 = arith.constant 0 : index
    %176 = vector.load %arg6[%c7_127, %c0_128] : memref<18x128xf32, #tpu.memory_space<vmem>>, vector<1x32xf32>
    %c8_129 = arith.constant 8 : index
    %c0_130 = arith.constant 0 : index
    %177 = vector.load %arg6[%c8_129, %c0_130] : memref<18x128xf32, #tpu.memory_space<vmem>>, vector<1x32xf32>
    %c9_131 = arith.constant 9 : index
    %c0_132 = arith.constant 0 : index
    %178 = vector.load %arg6[%c9_131, %c0_132] : memref<18x128xf32, #tpu.memory_space<vmem>>, vector<1x32xf32>
    %c0_133 = arith.constant 0 : index
    %c0_134 = arith.constant 0 : index
    %c0_135 = arith.constant 0 : index
    %179 = vector.load %arg4[%c0_133, %c0_134, %c0_135] : memref<2x32x192xbf16, #tpu.memory_space<vmem>>, vector<1x32x192xbf16>
    %180 = vector.shape_cast %179 : vector<1x32x192xbf16> to vector<32x192xbf16>
    %181 = vector.extract_strided_slice %180 {offsets = [0, 0], sizes = [32, 96], strides = [1, 1]} : vector<32x192xbf16> to vector<32x96xbf16>
    %182 = vector.extract_strided_slice %180 {offsets = [0, 128], sizes = [32, 64], strides = [1, 1]} : vector<32x192xbf16> to vector<32x64xbf16>
    %c0_136 = arith.constant 0 : index
    %c0_137 = arith.constant 0 : index
    %c0_138 = arith.constant 0 : index
    %183 = vector.load %arg5[%c0_136, %c0_137, %c0_138] : memref<2x96x32xbf16, #tpu.memory_space<vmem>>, vector<1x96x32xbf16>
    %184 = vector.shape_cast %183 : vector<1x96x32xbf16> to vector<96x32xbf16>
    %185 = vector.extract_strided_slice %184 {offsets = [0, 0], sizes = [32, 32], strides = [1, 1]} : vector<96x32xbf16> to vector<32x32xbf16>
    %186 = vector.extract_strided_slice %184 {offsets = [32, 0], sizes = [64, 32], strides = [1, 1]} : vector<96x32xbf16> to vector<64x32xbf16>
    %187 = arith.truncf %169 : vector<18x32xf32> to vector<18x32xbf16>
    %cst_139 = arith.constant dense<0.000000e+00> : vector<18x96xf32>
    %188 = tpu.matmul %187, %181, %cst_139 {dimension_numbers = #tpu.dot_dimension_numbers<[1], [0], [0], [1], [0, 0, 1, 1], [], []>} : vector<18x32xbf16>, vector<32x96xbf16>, vector<18x96xf32> -> vector<18x96xf32>
    %189 = vector.broadcast %171 : vector<1x96xf32> to vector<18x96xf32>
    %190 = arith.addf %188, %189 : vector<18x96xf32>
    %191 = vector.extract_strided_slice %190 {offsets = [0, 0], sizes = [9, 96], strides = [1, 1]} : vector<18x96xf32> to vector<9x96xf32>
    %192 = arith.truncf %191 : vector<9x96xf32> to vector<9x96xbf16>
    %193 = vector.extract_strided_slice %192 {offsets = [0, 0], sizes = [9, 8], strides = [1, 1]} : vector<9x96xbf16> to vector<9x8xbf16>
    %194 = vector.extract_strided_slice %192 {offsets = [0, 32], sizes = [9, 8], strides = [1, 1]} : vector<9x96xbf16> to vector<9x8xbf16>
    %195 = vector.extract_strided_slice %192 {offsets = [0, 64], sizes = [9, 8], strides = [1, 1]} : vector<9x96xbf16> to vector<9x8xbf16>
    %cst_140 = arith.constant dense<0.000000e+00> : vector<9x9xf32>
    %196 = tpu.matmul %193, %194, %cst_140 {dimension_numbers = #tpu.dot_dimension_numbers<[1], [1], [0], [0], [0, 0, 1, 0], [], []>} : vector<9x8xbf16>, vector<9x8xbf16>, vector<9x9xf32> -> vector<9x9xf32>
    %cst_141 = arith.constant dense<0xFF800000> : vector<9xf32>
    %197 = vector.multi_reduction <maximumf>, %196, %cst_141 [1] : vector<9x9xf32> to vector<9xf32>
    %198 = vector.shape_cast %197 : vector<9xf32> to vector<9x1xf32>
    %199 = vector.broadcast %198 : vector<9x1xf32> to vector<9x9xf32>
    %200 = arith.subf %196, %199 : vector<9x9xf32>
    %201 = math.exp %200 : vector<9x9xf32>
    %cst_142 = arith.constant dense<0.000000e+00> : vector<9xf32>
    %202 = vector.multi_reduction <add>, %201, %cst_142 [1] : vector<9x9xf32> to vector<9xf32>
    %203 = vector.shape_cast %202 : vector<9xf32> to vector<9x1xf32>
    %204 = tpu.reciprocal %203 {approx = true} : vector<9x1xf32> -> vector<9x1xf32>
    %205 = vector.broadcast %204 : vector<9x1xf32> to vector<9x9xf32>
    %206 = arith.mulf %201, %205 : vector<9x9xf32>
    %207 = arith.truncf %206 : vector<9x9xf32> to vector<9x9xbf16>
    %cst_143 = arith.constant dense<0.000000e+00> : vector<9x8xf32>
    %208 = tpu.matmul %207, %195, %cst_143 {dimension_numbers = #tpu.dot_dimension_numbers<[1], [0], [0], [1], [0, 0, 1, 1], [], []>} : vector<9x9xbf16>, vector<9x8xbf16>, vector<9x8xf32> -> vector<9x8xf32>
    %209 = vector.extract_strided_slice %192 {offsets = [0, 8], sizes = [9, 8], strides = [1, 1]} : vector<9x96xbf16> to vector<9x8xbf16>
    %210 = vector.extract_strided_slice %192 {offsets = [0, 40], sizes = [9, 8], strides = [1, 1]} : vector<9x96xbf16> to vector<9x8xbf16>
    %211 = vector.extract_strided_slice %192 {offsets = [0, 72], sizes = [9, 8], strides = [1, 1]} : vector<9x96xbf16> to vector<9x8xbf16>
    %cst_144 = arith.constant dense<0.000000e+00> : vector<9x9xf32>
    %212 = tpu.matmul %209, %210, %cst_144 {dimension_numbers = #tpu.dot_dimension_numbers<[1], [1], [0], [0], [0, 0, 1, 0], [], []>} : vector<9x8xbf16>, vector<9x8xbf16>, vector<9x9xf32> -> vector<9x9xf32>
    %cst_145 = arith.constant dense<0xFF800000> : vector<9xf32>
    %213 = vector.multi_reduction <maximumf>, %212, %cst_145 [1] : vector<9x9xf32> to vector<9xf32>
    %214 = vector.shape_cast %213 : vector<9xf32> to vector<9x1xf32>
    %215 = vector.broadcast %214 : vector<9x1xf32> to vector<9x9xf32>
    %216 = arith.subf %212, %215 : vector<9x9xf32>
    %217 = math.exp %216 : vector<9x9xf32>
    %cst_146 = arith.constant dense<0.000000e+00> : vector<9xf32>
    %218 = vector.multi_reduction <add>, %217, %cst_146 [1] : vector<9x9xf32> to vector<9xf32>
    %219 = vector.shape_cast %218 : vector<9xf32> to vector<9x1xf32>
    %220 = tpu.reciprocal %219 {approx = true} : vector<9x1xf32> -> vector<9x1xf32>
    %221 = vector.broadcast %220 : vector<9x1xf32> to vector<9x9xf32>
    %222 = arith.mulf %217, %221 : vector<9x9xf32>
    %223 = arith.truncf %222 : vector<9x9xf32> to vector<9x9xbf16>
    %cst_147 = arith.constant dense<0.000000e+00> : vector<9x8xf32>
    %224 = tpu.matmul %223, %211, %cst_147 {dimension_numbers = #tpu.dot_dimension_numbers<[1], [0], [0], [1], [0, 0, 1, 1], [], []>} : vector<9x9xbf16>, vector<9x8xbf16>, vector<9x8xf32> -> vector<9x8xf32>
    %225 = vector.extract_strided_slice %192 {offsets = [0, 16], sizes = [9, 8], strides = [1, 1]} : vector<9x96xbf16> to vector<9x8xbf16>
    %226 = vector.extract_strided_slice %192 {offsets = [0, 48], sizes = [9, 8], strides = [1, 1]} : vector<9x96xbf16> to vector<9x8xbf16>
    %227 = vector.extract_strided_slice %192 {offsets = [0, 80], sizes = [9, 8], strides = [1, 1]} : vector<9x96xbf16> to vector<9x8xbf16>
    %cst_148 = arith.constant dense<0.000000e+00> : vector<9x9xf32>
    %228 = tpu.matmul %225, %226, %cst_148 {dimension_numbers = #tpu.dot_dimension_numbers<[1], [1], [0], [0], [0, 0, 1, 0], [], []>} : vector<9x8xbf16>, vector<9x8xbf16>, vector<9x9xf32> -> vector<9x9xf32>
    %cst_149 = arith.constant dense<0xFF800000> : vector<9xf32>
    %229 = vector.multi_reduction <maximumf>, %228, %cst_149 [1] : vector<9x9xf32> to vector<9xf32>
    %230 = vector.shape_cast %229 : vector<9xf32> to vector<9x1xf32>
    %231 = vector.broadcast %230 : vector<9x1xf32> to vector<9x9xf32>
    %232 = arith.subf %228, %231 : vector<9x9xf32>
    %233 = math.exp %232 : vector<9x9xf32>
    %cst_150 = arith.constant dense<0.000000e+00> : vector<9xf32>
    %234 = vector.multi_reduction <add>, %233, %cst_150 [1] : vector<9x9xf32> to vector<9xf32>
    %235 = vector.shape_cast %234 : vector<9xf32> to vector<9x1xf32>
    %236 = tpu.reciprocal %235 {approx = true} : vector<9x1xf32> -> vector<9x1xf32>
    %237 = vector.broadcast %236 : vector<9x1xf32> to vector<9x9xf32>
    %238 = arith.mulf %233, %237 : vector<9x9xf32>
    %239 = arith.truncf %238 : vector<9x9xf32> to vector<9x9xbf16>
    %cst_151 = arith.constant dense<0.000000e+00> : vector<9x8xf32>
    %240 = tpu.matmul %239, %227, %cst_151 {dimension_numbers = #tpu.dot_dimension_numbers<[1], [0], [0], [1], [0, 0, 1, 1], [], []>} : vector<9x9xbf16>, vector<9x8xbf16>, vector<9x8xf32> -> vector<9x8xf32>
    %241 = vector.extract_strided_slice %192 {offsets = [0, 24], sizes = [9, 8], strides = [1, 1]} : vector<9x96xbf16> to vector<9x8xbf16>
    %242 = vector.extract_strided_slice %192 {offsets = [0, 56], sizes = [9, 8], strides = [1, 1]} : vector<9x96xbf16> to vector<9x8xbf16>
    %243 = vector.extract_strided_slice %192 {offsets = [0, 88], sizes = [9, 8], strides = [1, 1]} : vector<9x96xbf16> to vector<9x8xbf16>
    %cst_152 = arith.constant dense<0.000000e+00> : vector<9x9xf32>
    %244 = tpu.matmul %241, %242, %cst_152 {dimension_numbers = #tpu.dot_dimension_numbers<[1], [1], [0], [0], [0, 0, 1, 0], [], []>} : vector<9x8xbf16>, vector<9x8xbf16>, vector<9x9xf32> -> vector<9x9xf32>
    %cst_153 = arith.constant dense<0xFF800000> : vector<9xf32>
    %245 = vector.multi_reduction <maximumf>, %244, %cst_153 [1] : vector<9x9xf32> to vector<9xf32>
    %246 = vector.shape_cast %245 : vector<9xf32> to vector<9x1xf32>
    %247 = vector.broadcast %246 : vector<9x1xf32> to vector<9x9xf32>
    %248 = arith.subf %244, %247 : vector<9x9xf32>
    %249 = math.exp %248 : vector<9x9xf32>
    %cst_154 = arith.constant dense<0.000000e+00> : vector<9xf32>
    %250 = vector.multi_reduction <add>, %249, %cst_154 [1] : vector<9x9xf32> to vector<9xf32>
    %251 = vector.shape_cast %250 : vector<9xf32> to vector<9x1xf32>
    %252 = tpu.reciprocal %251 {approx = true} : vector<9x1xf32> -> vector<9x1xf32>
    %253 = vector.broadcast %252 : vector<9x1xf32> to vector<9x9xf32>
    %254 = arith.mulf %249, %253 : vector<9x9xf32>
    %255 = arith.truncf %254 : vector<9x9xf32> to vector<9x9xbf16>
    %cst_155 = arith.constant dense<0.000000e+00> : vector<9x8xf32>
    %256 = tpu.matmul %255, %243, %cst_155 {dimension_numbers = #tpu.dot_dimension_numbers<[1], [0], [0], [1], [0, 0, 1, 1], [], []>} : vector<9x9xbf16>, vector<9x8xbf16>, vector<9x8xf32> -> vector<9x8xf32>
    %257 = tpu.concatenate %208, %224, %240, %256 in 1 : vector<9x8xf32>, vector<9x8xf32>, vector<9x8xf32>, vector<9x8xf32> -> vector<9x32xf32>
    %258 = vector.extract_strided_slice %190 {offsets = [9, 0], sizes = [9, 96], strides = [1, 1]} : vector<18x96xf32> to vector<9x96xf32>
    %259 = arith.truncf %258 : vector<9x96xf32> to vector<9x96xbf16>
    %260 = vector.extract_strided_slice %259 {offsets = [0, 0], sizes = [9, 8], strides = [1, 1]} : vector<9x96xbf16> to vector<9x8xbf16>
    %261 = vector.extract_strided_slice %259 {offsets = [0, 32], sizes = [9, 8], strides = [1, 1]} : vector<9x96xbf16> to vector<9x8xbf16>
    %262 = vector.extract_strided_slice %259 {offsets = [0, 64], sizes = [9, 8], strides = [1, 1]} : vector<9x96xbf16> to vector<9x8xbf16>
    %cst_156 = arith.constant dense<0.000000e+00> : vector<9x9xf32>
    %263 = tpu.matmul %260, %261, %cst_156 {dimension_numbers = #tpu.dot_dimension_numbers<[1], [1], [0], [0], [0, 0, 1, 0], [], []>} : vector<9x8xbf16>, vector<9x8xbf16>, vector<9x9xf32> -> vector<9x9xf32>
    %cst_157 = arith.constant dense<0xFF800000> : vector<9xf32>
    %264 = vector.multi_reduction <maximumf>, %263, %cst_157 [1] : vector<9x9xf32> to vector<9xf32>
    %265 = vector.shape_cast %264 : vector<9xf32> to vector<9x1xf32>
    %266 = vector.broadcast %265 : vector<9x1xf32> to vector<9x9xf32>
    %267 = arith.subf %263, %266 : vector<9x9xf32>
    %268 = math.exp %267 : vector<9x9xf32>
    %cst_158 = arith.constant dense<0.000000e+00> : vector<9xf32>
    %269 = vector.multi_reduction <add>, %268, %cst_158 [1] : vector<9x9xf32> to vector<9xf32>
    %270 = vector.shape_cast %269 : vector<9xf32> to vector<9x1xf32>
    %271 = tpu.reciprocal %270 {approx = true} : vector<9x1xf32> -> vector<9x1xf32>
    %272 = vector.broadcast %271 : vector<9x1xf32> to vector<9x9xf32>
    %273 = arith.mulf %268, %272 : vector<9x9xf32>
    %274 = arith.truncf %273 : vector<9x9xf32> to vector<9x9xbf16>
    %cst_159 = arith.constant dense<0.000000e+00> : vector<9x8xf32>
    %275 = tpu.matmul %274, %262, %cst_159 {dimension_numbers = #tpu.dot_dimension_numbers<[1], [0], [0], [1], [0, 0, 1, 1], [], []>} : vector<9x9xbf16>, vector<9x8xbf16>, vector<9x8xf32> -> vector<9x8xf32>
    %276 = vector.extract_strided_slice %259 {offsets = [0, 8], sizes = [9, 8], strides = [1, 1]} : vector<9x96xbf16> to vector<9x8xbf16>
    %277 = vector.extract_strided_slice %259 {offsets = [0, 40], sizes = [9, 8], strides = [1, 1]} : vector<9x96xbf16> to vector<9x8xbf16>
    %278 = vector.extract_strided_slice %259 {offsets = [0, 72], sizes = [9, 8], strides = [1, 1]} : vector<9x96xbf16> to vector<9x8xbf16>
    %cst_160 = arith.constant dense<0.000000e+00> : vector<9x9xf32>
    %279 = tpu.matmul %276, %277, %cst_160 {dimension_numbers = #tpu.dot_dimension_numbers<[1], [1], [0], [0], [0, 0, 1, 0], [], []>} : vector<9x8xbf16>, vector<9x8xbf16>, vector<9x9xf32> -> vector<9x9xf32>
    %cst_161 = arith.constant dense<0xFF800000> : vector<9xf32>
    %280 = vector.multi_reduction <maximumf>, %279, %cst_161 [1] : vector<9x9xf32> to vector<9xf32>
    %281 = vector.shape_cast %280 : vector<9xf32> to vector<9x1xf32>
    %282 = vector.broadcast %281 : vector<9x1xf32> to vector<9x9xf32>
    %283 = arith.subf %279, %282 : vector<9x9xf32>
    %284 = math.exp %283 : vector<9x9xf32>
    %cst_162 = arith.constant dense<0.000000e+00> : vector<9xf32>
    %285 = vector.multi_reduction <add>, %284, %cst_162 [1] : vector<9x9xf32> to vector<9xf32>
    %286 = vector.shape_cast %285 : vector<9xf32> to vector<9x1xf32>
    %287 = tpu.reciprocal %286 {approx = true} : vector<9x1xf32> -> vector<9x1xf32>
    %288 = vector.broadcast %287 : vector<9x1xf32> to vector<9x9xf32>
    %289 = arith.mulf %284, %288 : vector<9x9xf32>
    %290 = arith.truncf %289 : vector<9x9xf32> to vector<9x9xbf16>
    %cst_163 = arith.constant dense<0.000000e+00> : vector<9x8xf32>
    %291 = tpu.matmul %290, %278, %cst_163 {dimension_numbers = #tpu.dot_dimension_numbers<[1], [0], [0], [1], [0, 0, 1, 1], [], []>} : vector<9x9xbf16>, vector<9x8xbf16>, vector<9x8xf32> -> vector<9x8xf32>
    %292 = vector.extract_strided_slice %259 {offsets = [0, 16], sizes = [9, 8], strides = [1, 1]} : vector<9x96xbf16> to vector<9x8xbf16>
    %293 = vector.extract_strided_slice %259 {offsets = [0, 48], sizes = [9, 8], strides = [1, 1]} : vector<9x96xbf16> to vector<9x8xbf16>
    %294 = vector.extract_strided_slice %259 {offsets = [0, 80], sizes = [9, 8], strides = [1, 1]} : vector<9x96xbf16> to vector<9x8xbf16>
    %cst_164 = arith.constant dense<0.000000e+00> : vector<9x9xf32>
    %295 = tpu.matmul %292, %293, %cst_164 {dimension_numbers = #tpu.dot_dimension_numbers<[1], [1], [0], [0], [0, 0, 1, 0], [], []>} : vector<9x8xbf16>, vector<9x8xbf16>, vector<9x9xf32> -> vector<9x9xf32>
    %cst_165 = arith.constant dense<0xFF800000> : vector<9xf32>
    %296 = vector.multi_reduction <maximumf>, %295, %cst_165 [1] : vector<9x9xf32> to vector<9xf32>
    %297 = vector.shape_cast %296 : vector<9xf32> to vector<9x1xf32>
    %298 = vector.broadcast %297 : vector<9x1xf32> to vector<9x9xf32>
    %299 = arith.subf %295, %298 : vector<9x9xf32>
    %300 = math.exp %299 : vector<9x9xf32>
    %cst_166 = arith.constant dense<0.000000e+00> : vector<9xf32>
    %301 = vector.multi_reduction <add>, %300, %cst_166 [1] : vector<9x9xf32> to vector<9xf32>
    %302 = vector.shape_cast %301 : vector<9xf32> to vector<9x1xf32>
    %303 = tpu.reciprocal %302 {approx = true} : vector<9x1xf32> -> vector<9x1xf32>
    %304 = vector.broadcast %303 : vector<9x1xf32> to vector<9x9xf32>
    %305 = arith.mulf %300, %304 : vector<9x9xf32>
    %306 = arith.truncf %305 : vector<9x9xf32> to vector<9x9xbf16>
    %cst_167 = arith.constant dense<0.000000e+00> : vector<9x8xf32>
    %307 = tpu.matmul %306, %294, %cst_167 {dimension_numbers = #tpu.dot_dimension_numbers<[1], [0], [0], [1], [0, 0, 1, 1], [], []>} : vector<9x9xbf16>, vector<9x8xbf16>, vector<9x8xf32> -> vector<9x8xf32>
    %308 = vector.extract_strided_slice %259 {offsets = [0, 24], sizes = [9, 8], strides = [1, 1]} : vector<9x96xbf16> to vector<9x8xbf16>
    %309 = vector.extract_strided_slice %259 {offsets = [0, 56], sizes = [9, 8], strides = [1, 1]} : vector<9x96xbf16> to vector<9x8xbf16>
    %310 = vector.extract_strided_slice %259 {offsets = [0, 88], sizes = [9, 8], strides = [1, 1]} : vector<9x96xbf16> to vector<9x8xbf16>
    %cst_168 = arith.constant dense<0.000000e+00> : vector<9x9xf32>
    %311 = tpu.matmul %308, %309, %cst_168 {dimension_numbers = #tpu.dot_dimension_numbers<[1], [1], [0], [0], [0, 0, 1, 0], [], []>} : vector<9x8xbf16>, vector<9x8xbf16>, vector<9x9xf32> -> vector<9x9xf32>
    %cst_169 = arith.constant dense<0xFF800000> : vector<9xf32>
    %312 = vector.multi_reduction <maximumf>, %311, %cst_169 [1] : vector<9x9xf32> to vector<9xf32>
    %313 = vector.shape_cast %312 : vector<9xf32> to vector<9x1xf32>
    %314 = vector.broadcast %313 : vector<9x1xf32> to vector<9x9xf32>
    %315 = arith.subf %311, %314 : vector<9x9xf32>
    %316 = math.exp %315 : vector<9x9xf32>
    %cst_170 = arith.constant dense<0.000000e+00> : vector<9xf32>
    %317 = vector.multi_reduction <add>, %316, %cst_170 [1] : vector<9x9xf32> to vector<9xf32>
    %318 = vector.shape_cast %317 : vector<9xf32> to vector<9x1xf32>
    %319 = tpu.reciprocal %318 {approx = true} : vector<9x1xf32> -> vector<9x1xf32>
    %320 = vector.broadcast %319 : vector<9x1xf32> to vector<9x9xf32>
    %321 = arith.mulf %316, %320 : vector<9x9xf32>
    %322 = arith.truncf %321 : vector<9x9xf32> to vector<9x9xbf16>
    %cst_171 = arith.constant dense<0.000000e+00> : vector<9x8xf32>
    %323 = tpu.matmul %322, %310, %cst_171 {dimension_numbers = #tpu.dot_dimension_numbers<[1], [0], [0], [1], [0, 0, 1, 1], [], []>} : vector<9x9xbf16>, vector<9x8xbf16>, vector<9x8xf32> -> vector<9x8xf32>
    %324 = tpu.concatenate %275, %291, %307, %323 in 1 : vector<9x8xf32>, vector<9x8xf32>, vector<9x8xf32>, vector<9x8xf32> -> vector<9x32xf32>
    %325 = tpu.concatenate %257, %324 in 0 : vector<9x32xf32>, vector<9x32xf32> -> vector<18x32xf32>
    %326 = arith.truncf %325 : vector<18x32xf32> to vector<18x32xbf16>
    %cst_172 = arith.constant dense<0.000000e+00> : vector<18x32xf32>
    %327 = tpu.matmul %326, %185, %cst_172 {dimension_numbers = #tpu.dot_dimension_numbers<[1], [0], [0], [1], [0, 0, 1, 1], [], []>} : vector<18x32xbf16>, vector<32x32xbf16>, vector<18x32xf32> -> vector<18x32xf32>
    %328 = vector.broadcast %172 : vector<1x32xf32> to vector<18x32xf32>
    %329 = arith.addf %327, %328 : vector<18x32xf32>
    %330 = arith.addf %329, %169 : vector<18x32xf32>
    %cst_173 = arith.constant dense<0.000000e+00> : vector<18xf32>
    %331 = vector.multi_reduction <add>, %330, %cst_173 [1] : vector<18x32xf32> to vector<18xf32>
    %332 = vector.shape_cast %331 : vector<18xf32> to vector<18x1xf32>
    %cst_174 = arith.constant 3.200000e+01 : f32
    %333 = vector.broadcast %cst_174 : f32 to vector<18x1xf32>
    %334 = arith.divf %332, %333 : vector<18x1xf32>
    %335 = vector.broadcast %334 : vector<18x1xf32> to vector<18x32xf32>
    %336 = arith.subf %330, %335 : vector<18x32xf32>
    %337 = arith.mulf %336, %336 : vector<18x32xf32>
    %cst_175 = arith.constant dense<0.000000e+00> : vector<18xf32>
    %338 = vector.multi_reduction <add>, %337, %cst_175 [1] : vector<18x32xf32> to vector<18xf32>
    %339 = vector.shape_cast %338 : vector<18xf32> to vector<18x1xf32>
    %cst_176 = arith.constant 3.200000e+01 : f32
    %340 = vector.broadcast %cst_176 : f32 to vector<18x1xf32>
    %341 = arith.divf %339, %340 : vector<18x1xf32>
    %342 = vector.broadcast %334 : vector<18x1xf32> to vector<18x32xf32>
    %343 = arith.subf %330, %342 : vector<18x32xf32>
    %cst_177 = arith.constant 9.99999996E-13 : f32
    %344 = vector.broadcast %cst_177 : f32 to vector<18x1xf32>
    %345 = arith.addf %341, %344 : vector<18x1xf32>
    %346 = math.rsqrt %345 : vector<18x1xf32>
    %347 = vector.broadcast %346 : vector<18x1xf32> to vector<18x32xf32>
    %348 = arith.mulf %343, %347 : vector<18x32xf32>
    %349 = vector.broadcast %173 : vector<1x32xf32> to vector<18x32xf32>
    %350 = arith.mulf %348, %349 : vector<18x32xf32>
    %351 = vector.broadcast %174 : vector<1x32xf32> to vector<18x32xf32>
    %352 = arith.addf %350, %351 : vector<18x32xf32>
    %353 = arith.truncf %352 : vector<18x32xf32> to vector<18x32xbf16>
    %cst_178 = arith.constant dense<0.000000e+00> : vector<18x64xf32>
    %354 = tpu.matmul %353, %182, %cst_178 {dimension_numbers = #tpu.dot_dimension_numbers<[1], [0], [0], [1], [0, 0, 1, 1], [], []>} : vector<18x32xbf16>, vector<32x64xbf16>, vector<18x64xf32> -> vector<18x64xf32>
    %355 = vector.broadcast %175 : vector<1x64xf32> to vector<18x64xf32>
    %356 = arith.addf %354, %355 : vector<18x64xf32>
    %cst_179 = arith.constant 5.000000e-01 : f32
    %357 = vector.broadcast %cst_179 : f32 to vector<18x64xf32>
    %358 = arith.mulf %357, %356 : vector<18x64xf32>
    %cst_180 = arith.constant 4.471500e-02 : f32
    %359 = vector.broadcast %cst_180 : f32 to vector<18x64xf32>
    %360 = arith.mulf %359, %356 : vector<18x64xf32>
    %361 = arith.mulf %360, %356 : vector<18x64xf32>
    %362 = arith.mulf %361, %356 : vector<18x64xf32>
    %363 = arith.addf %356, %362 : vector<18x64xf32>
    %cst_181 = arith.constant 0.797884583 : f32
    %364 = vector.broadcast %cst_181 : f32 to vector<18x64xf32>
    %365 = arith.mulf %364, %363 : vector<18x64xf32>
    %366 = math.tanh %365 : vector<18x64xf32>
    %cst_182 = arith.constant 1.000000e+00 : f32
    %367 = vector.broadcast %cst_182 : f32 to vector<18x64xf32>
    %368 = arith.addf %367, %366 : vector<18x64xf32>
    %369 = arith.mulf %358, %368 : vector<18x64xf32>
    %370 = arith.truncf %369 : vector<18x64xf32> to vector<18x64xbf16>
    %cst_183 = arith.constant dense<0.000000e+00> : vector<18x32xf32>
    %371 = tpu.matmul %370, %186, %cst_183 {dimension_numbers = #tpu.dot_dimension_numbers<[1], [0], [0], [1], [0, 0, 1, 1], [], []>} : vector<18x64xbf16>, vector<64x32xbf16>, vector<18x32xf32> -> vector<18x32xf32>
    %372 = vector.broadcast %176 : vector<1x32xf32> to vector<18x32xf32>
    %373 = arith.addf %371, %372 : vector<18x32xf32>
    %374 = arith.addf %373, %352 : vector<18x32xf32>
    %cst_184 = arith.constant dense<0.000000e+00> : vector<18xf32>
    %375 = vector.multi_reduction <add>, %374, %cst_184 [1] : vector<18x32xf32> to vector<18xf32>
    %376 = vector.shape_cast %375 : vector<18xf32> to vector<18x1xf32>
    %cst_185 = arith.constant 3.200000e+01 : f32
    %377 = vector.broadcast %cst_185 : f32 to vector<18x1xf32>
    %378 = arith.divf %376, %377 : vector<18x1xf32>
    %379 = vector.broadcast %378 : vector<18x1xf32> to vector<18x32xf32>
    %380 = arith.subf %374, %379 : vector<18x32xf32>
    %381 = arith.mulf %380, %380 : vector<18x32xf32>
    %cst_186 = arith.constant dense<0.000000e+00> : vector<18xf32>
    %382 = vector.multi_reduction <add>, %381, %cst_186 [1] : vector<18x32xf32> to vector<18xf32>
    %383 = vector.shape_cast %382 : vector<18xf32> to vector<18x1xf32>
    %cst_187 = arith.constant 3.200000e+01 : f32
    %384 = vector.broadcast %cst_187 : f32 to vector<18x1xf32>
    %385 = arith.divf %383, %384 : vector<18x1xf32>
    %386 = vector.broadcast %378 : vector<18x1xf32> to vector<18x32xf32>
    %387 = arith.subf %374, %386 : vector<18x32xf32>
    %cst_188 = arith.constant 9.99999996E-13 : f32
    %388 = vector.broadcast %cst_188 : f32 to vector<18x1xf32>
    %389 = arith.addf %385, %388 : vector<18x1xf32>
    %390 = math.rsqrt %389 : vector<18x1xf32>
    %391 = vector.broadcast %390 : vector<18x1xf32> to vector<18x32xf32>
    %392 = arith.mulf %387, %391 : vector<18x32xf32>
    %393 = vector.broadcast %177 : vector<1x32xf32> to vector<18x32xf32>
    %394 = arith.mulf %392, %393 : vector<18x32xf32>
    %395 = vector.broadcast %178 : vector<1x32xf32> to vector<18x32xf32>
    %396 = arith.addf %394, %395 : vector<18x32xf32>
    %397 = arith.addf %170, %396 : vector<18x32xf32>
    %c10_189 = arith.constant 10 : index
    %c0_190 = arith.constant 0 : index
    %398 = vector.load %arg6[%c10_189, %c0_190] : memref<18x128xf32, #tpu.memory_space<vmem>>, vector<1x96xf32>
    %c11_191 = arith.constant 11 : index
    %c0_192 = arith.constant 0 : index
    %399 = vector.load %arg6[%c11_191, %c0_192] : memref<18x128xf32, #tpu.memory_space<vmem>>, vector<1x32xf32>
    %c12_193 = arith.constant 12 : index
    %c0_194 = arith.constant 0 : index
    %400 = vector.load %arg6[%c12_193, %c0_194] : memref<18x128xf32, #tpu.memory_space<vmem>>, vector<1x32xf32>
    %c13_195 = arith.constant 13 : index
    %c0_196 = arith.constant 0 : index
    %401 = vector.load %arg6[%c13_195, %c0_196] : memref<18x128xf32, #tpu.memory_space<vmem>>, vector<1x32xf32>
    %c14_197 = arith.constant 14 : index
    %c0_198 = arith.constant 0 : index
    %402 = vector.load %arg6[%c14_197, %c0_198] : memref<18x128xf32, #tpu.memory_space<vmem>>, vector<1x64xf32>
    %c15_199 = arith.constant 15 : index
    %c0_200 = arith.constant 0 : index
    %403 = vector.load %arg6[%c15_199, %c0_200] : memref<18x128xf32, #tpu.memory_space<vmem>>, vector<1x32xf32>
    %c16_201 = arith.constant 16 : index
    %c0_202 = arith.constant 0 : index
    %404 = vector.load %arg6[%c16_201, %c0_202] : memref<18x128xf32, #tpu.memory_space<vmem>>, vector<1x32xf32>
    %c17_203 = arith.constant 17 : index
    %c0_204 = arith.constant 0 : index
    %405 = vector.load %arg6[%c17_203, %c0_204] : memref<18x128xf32, #tpu.memory_space<vmem>>, vector<1x32xf32>
    %c1_205 = arith.constant 1 : index
    %c0_206 = arith.constant 0 : index
    %c0_207 = arith.constant 0 : index
    %406 = vector.load %arg4[%c1_205, %c0_206, %c0_207] : memref<2x32x192xbf16, #tpu.memory_space<vmem>>, vector<1x32x192xbf16>
    %407 = vector.shape_cast %406 : vector<1x32x192xbf16> to vector<32x192xbf16>
    %408 = vector.extract_strided_slice %407 {offsets = [0, 0], sizes = [32, 96], strides = [1, 1]} : vector<32x192xbf16> to vector<32x96xbf16>
    %409 = vector.extract_strided_slice %407 {offsets = [0, 128], sizes = [32, 64], strides = [1, 1]} : vector<32x192xbf16> to vector<32x64xbf16>
    %c1_208 = arith.constant 1 : index
    %c0_209 = arith.constant 0 : index
    %c0_210 = arith.constant 0 : index
    %410 = vector.load %arg5[%c1_208, %c0_209, %c0_210] : memref<2x96x32xbf16, #tpu.memory_space<vmem>>, vector<1x96x32xbf16>
    %411 = vector.shape_cast %410 : vector<1x96x32xbf16> to vector<96x32xbf16>
    %412 = vector.extract_strided_slice %411 {offsets = [0, 0], sizes = [32, 32], strides = [1, 1]} : vector<96x32xbf16> to vector<32x32xbf16>
    %413 = vector.extract_strided_slice %411 {offsets = [32, 0], sizes = [64, 32], strides = [1, 1]} : vector<96x32xbf16> to vector<64x32xbf16>
    %414 = arith.truncf %396 : vector<18x32xf32> to vector<18x32xbf16>
    %cst_211 = arith.constant dense<0.000000e+00> : vector<18x96xf32>
    %415 = tpu.matmul %414, %408, %cst_211 {dimension_numbers = #tpu.dot_dimension_numbers<[1], [0], [0], [1], [0, 0, 1, 1], [], []>} : vector<18x32xbf16>, vector<32x96xbf16>, vector<18x96xf32> -> vector<18x96xf32>
    %416 = vector.broadcast %398 : vector<1x96xf32> to vector<18x96xf32>
    %417 = arith.addf %415, %416 : vector<18x96xf32>
    %418 = vector.extract_strided_slice %417 {offsets = [0, 0], sizes = [9, 96], strides = [1, 1]} : vector<18x96xf32> to vector<9x96xf32>
    %419 = arith.truncf %418 : vector<9x96xf32> to vector<9x96xbf16>
    %420 = vector.extract_strided_slice %419 {offsets = [0, 0], sizes = [9, 8], strides = [1, 1]} : vector<9x96xbf16> to vector<9x8xbf16>
    %421 = vector.extract_strided_slice %419 {offsets = [0, 32], sizes = [9, 8], strides = [1, 1]} : vector<9x96xbf16> to vector<9x8xbf16>
    %422 = vector.extract_strided_slice %419 {offsets = [0, 64], sizes = [9, 8], strides = [1, 1]} : vector<9x96xbf16> to vector<9x8xbf16>
    %cst_212 = arith.constant dense<0.000000e+00> : vector<9x9xf32>
    %423 = tpu.matmul %420, %421, %cst_212 {dimension_numbers = #tpu.dot_dimension_numbers<[1], [1], [0], [0], [0, 0, 1, 0], [], []>} : vector<9x8xbf16>, vector<9x8xbf16>, vector<9x9xf32> -> vector<9x9xf32>
    %cst_213 = arith.constant dense<0xFF800000> : vector<9xf32>
    %424 = vector.multi_reduction <maximumf>, %423, %cst_213 [1] : vector<9x9xf32> to vector<9xf32>
    %425 = vector.shape_cast %424 : vector<9xf32> to vector<9x1xf32>
    %426 = vector.broadcast %425 : vector<9x1xf32> to vector<9x9xf32>
    %427 = arith.subf %423, %426 : vector<9x9xf32>
    %428 = math.exp %427 : vector<9x9xf32>
    %cst_214 = arith.constant dense<0.000000e+00> : vector<9xf32>
    %429 = vector.multi_reduction <add>, %428, %cst_214 [1] : vector<9x9xf32> to vector<9xf32>
    %430 = vector.shape_cast %429 : vector<9xf32> to vector<9x1xf32>
    %431 = tpu.reciprocal %430 {approx = true} : vector<9x1xf32> -> vector<9x1xf32>
    %432 = vector.broadcast %431 : vector<9x1xf32> to vector<9x9xf32>
    %433 = arith.mulf %428, %432 : vector<9x9xf32>
    %434 = arith.truncf %433 : vector<9x9xf32> to vector<9x9xbf16>
    %cst_215 = arith.constant dense<0.000000e+00> : vector<9x8xf32>
    %435 = tpu.matmul %434, %422, %cst_215 {dimension_numbers = #tpu.dot_dimension_numbers<[1], [0], [0], [1], [0, 0, 1, 1], [], []>} : vector<9x9xbf16>, vector<9x8xbf16>, vector<9x8xf32> -> vector<9x8xf32>
    %436 = vector.extract_strided_slice %419 {offsets = [0, 8], sizes = [9, 8], strides = [1, 1]} : vector<9x96xbf16> to vector<9x8xbf16>
    %437 = vector.extract_strided_slice %419 {offsets = [0, 40], sizes = [9, 8], strides = [1, 1]} : vector<9x96xbf16> to vector<9x8xbf16>
    %438 = vector.extract_strided_slice %419 {offsets = [0, 72], sizes = [9, 8], strides = [1, 1]} : vector<9x96xbf16> to vector<9x8xbf16>
    %cst_216 = arith.constant dense<0.000000e+00> : vector<9x9xf32>
    %439 = tpu.matmul %436, %437, %cst_216 {dimension_numbers = #tpu.dot_dimension_numbers<[1], [1], [0], [0], [0, 0, 1, 0], [], []>} : vector<9x8xbf16>, vector<9x8xbf16>, vector<9x9xf32> -> vector<9x9xf32>
    %cst_217 = arith.constant dense<0xFF800000> : vector<9xf32>
    %440 = vector.multi_reduction <maximumf>, %439, %cst_217 [1] : vector<9x9xf32> to vector<9xf32>
    %441 = vector.shape_cast %440 : vector<9xf32> to vector<9x1xf32>
    %442 = vector.broadcast %441 : vector<9x1xf32> to vector<9x9xf32>
    %443 = arith.subf %439, %442 : vector<9x9xf32>
    %444 = math.exp %443 : vector<9x9xf32>
    %cst_218 = arith.constant dense<0.000000e+00> : vector<9xf32>
    %445 = vector.multi_reduction <add>, %444, %cst_218 [1] : vector<9x9xf32> to vector<9xf32>
    %446 = vector.shape_cast %445 : vector<9xf32> to vector<9x1xf32>
    %447 = tpu.reciprocal %446 {approx = true} : vector<9x1xf32> -> vector<9x1xf32>
    %448 = vector.broadcast %447 : vector<9x1xf32> to vector<9x9xf32>
    %449 = arith.mulf %444, %448 : vector<9x9xf32>
    %450 = arith.truncf %449 : vector<9x9xf32> to vector<9x9xbf16>
    %cst_219 = arith.constant dense<0.000000e+00> : vector<9x8xf32>
    %451 = tpu.matmul %450, %438, %cst_219 {dimension_numbers = #tpu.dot_dimension_numbers<[1], [0], [0], [1], [0, 0, 1, 1], [], []>} : vector<9x9xbf16>, vector<9x8xbf16>, vector<9x8xf32> -> vector<9x8xf32>
    %452 = vector.extract_strided_slice %419 {offsets = [0, 16], sizes = [9, 8], strides = [1, 1]} : vector<9x96xbf16> to vector<9x8xbf16>
    %453 = vector.extract_strided_slice %419 {offsets = [0, 48], sizes = [9, 8], strides = [1, 1]} : vector<9x96xbf16> to vector<9x8xbf16>
    %454 = vector.extract_strided_slice %419 {offsets = [0, 80], sizes = [9, 8], strides = [1, 1]} : vector<9x96xbf16> to vector<9x8xbf16>
    %cst_220 = arith.constant dense<0.000000e+00> : vector<9x9xf32>
    %455 = tpu.matmul %452, %453, %cst_220 {dimension_numbers = #tpu.dot_dimension_numbers<[1], [1], [0], [0], [0, 0, 1, 0], [], []>} : vector<9x8xbf16>, vector<9x8xbf16>, vector<9x9xf32> -> vector<9x9xf32>
    %cst_221 = arith.constant dense<0xFF800000> : vector<9xf32>
    %456 = vector.multi_reduction <maximumf>, %455, %cst_221 [1] : vector<9x9xf32> to vector<9xf32>
    %457 = vector.shape_cast %456 : vector<9xf32> to vector<9x1xf32>
    %458 = vector.broadcast %457 : vector<9x1xf32> to vector<9x9xf32>
    %459 = arith.subf %455, %458 : vector<9x9xf32>
    %460 = math.exp %459 : vector<9x9xf32>
    %cst_222 = arith.constant dense<0.000000e+00> : vector<9xf32>
    %461 = vector.multi_reduction <add>, %460, %cst_222 [1] : vector<9x9xf32> to vector<9xf32>
    %462 = vector.shape_cast %461 : vector<9xf32> to vector<9x1xf32>
    %463 = tpu.reciprocal %462 {approx = true} : vector<9x1xf32> -> vector<9x1xf32>
    %464 = vector.broadcast %463 : vector<9x1xf32> to vector<9x9xf32>
    %465 = arith.mulf %460, %464 : vector<9x9xf32>
    %466 = arith.truncf %465 : vector<9x9xf32> to vector<9x9xbf16>
    %cst_223 = arith.constant dense<0.000000e+00> : vector<9x8xf32>
    %467 = tpu.matmul %466, %454, %cst_223 {dimension_numbers = #tpu.dot_dimension_numbers<[1], [0], [0], [1], [0, 0, 1, 1], [], []>} : vector<9x9xbf16>, vector<9x8xbf16>, vector<9x8xf32> -> vector<9x8xf32>
    %468 = vector.extract_strided_slice %419 {offsets = [0, 24], sizes = [9, 8], strides = [1, 1]} : vector<9x96xbf16> to vector<9x8xbf16>
    %469 = vector.extract_strided_slice %419 {offsets = [0, 56], sizes = [9, 8], strides = [1, 1]} : vector<9x96xbf16> to vector<9x8xbf16>
    %470 = vector.extract_strided_slice %419 {offsets = [0, 88], sizes = [9, 8], strides = [1, 1]} : vector<9x96xbf16> to vector<9x8xbf16>
    %cst_224 = arith.constant dense<0.000000e+00> : vector<9x9xf32>
    %471 = tpu.matmul %468, %469, %cst_224 {dimension_numbers = #tpu.dot_dimension_numbers<[1], [1], [0], [0], [0, 0, 1, 0], [], []>} : vector<9x8xbf16>, vector<9x8xbf16>, vector<9x9xf32> -> vector<9x9xf32>
    %cst_225 = arith.constant dense<0xFF800000> : vector<9xf32>
    %472 = vector.multi_reduction <maximumf>, %471, %cst_225 [1] : vector<9x9xf32> to vector<9xf32>
    %473 = vector.shape_cast %472 : vector<9xf32> to vector<9x1xf32>
    %474 = vector.broadcast %473 : vector<9x1xf32> to vector<9x9xf32>
    %475 = arith.subf %471, %474 : vector<9x9xf32>
    %476 = math.exp %475 : vector<9x9xf32>
    %cst_226 = arith.constant dense<0.000000e+00> : vector<9xf32>
    %477 = vector.multi_reduction <add>, %476, %cst_226 [1] : vector<9x9xf32> to vector<9xf32>
    %478 = vector.shape_cast %477 : vector<9xf32> to vector<9x1xf32>
    %479 = tpu.reciprocal %478 {approx = true} : vector<9x1xf32> -> vector<9x1xf32>
    %480 = vector.broadcast %479 : vector<9x1xf32> to vector<9x9xf32>
    %481 = arith.mulf %476, %480 : vector<9x9xf32>
    %482 = arith.truncf %481 : vector<9x9xf32> to vector<9x9xbf16>
    %cst_227 = arith.constant dense<0.000000e+00> : vector<9x8xf32>
    %483 = tpu.matmul %482, %470, %cst_227 {dimension_numbers = #tpu.dot_dimension_numbers<[1], [0], [0], [1], [0, 0, 1, 1], [], []>} : vector<9x9xbf16>, vector<9x8xbf16>, vector<9x8xf32> -> vector<9x8xf32>
    %484 = tpu.concatenate %435, %451, %467, %483 in 1 : vector<9x8xf32>, vector<9x8xf32>, vector<9x8xf32>, vector<9x8xf32> -> vector<9x32xf32>
    %485 = vector.extract_strided_slice %417 {offsets = [9, 0], sizes = [9, 96], strides = [1, 1]} : vector<18x96xf32> to vector<9x96xf32>
    %486 = arith.truncf %485 : vector<9x96xf32> to vector<9x96xbf16>
    %487 = vector.extract_strided_slice %486 {offsets = [0, 0], sizes = [9, 8], strides = [1, 1]} : vector<9x96xbf16> to vector<9x8xbf16>
    %488 = vector.extract_strided_slice %486 {offsets = [0, 32], sizes = [9, 8], strides = [1, 1]} : vector<9x96xbf16> to vector<9x8xbf16>
    %489 = vector.extract_strided_slice %486 {offsets = [0, 64], sizes = [9, 8], strides = [1, 1]} : vector<9x96xbf16> to vector<9x8xbf16>
    %cst_228 = arith.constant dense<0.000000e+00> : vector<9x9xf32>
    %490 = tpu.matmul %487, %488, %cst_228 {dimension_numbers = #tpu.dot_dimension_numbers<[1], [1], [0], [0], [0, 0, 1, 0], [], []>} : vector<9x8xbf16>, vector<9x8xbf16>, vector<9x9xf32> -> vector<9x9xf32>
    %cst_229 = arith.constant dense<0xFF800000> : vector<9xf32>
    %491 = vector.multi_reduction <maximumf>, %490, %cst_229 [1] : vector<9x9xf32> to vector<9xf32>
    %492 = vector.shape_cast %491 : vector<9xf32> to vector<9x1xf32>
    %493 = vector.broadcast %492 : vector<9x1xf32> to vector<9x9xf32>
    %494 = arith.subf %490, %493 : vector<9x9xf32>
    %495 = math.exp %494 : vector<9x9xf32>
    %cst_230 = arith.constant dense<0.000000e+00> : vector<9xf32>
    %496 = vector.multi_reduction <add>, %495, %cst_230 [1] : vector<9x9xf32> to vector<9xf32>
    %497 = vector.shape_cast %496 : vector<9xf32> to vector<9x1xf32>
    %498 = tpu.reciprocal %497 {approx = true} : vector<9x1xf32> -> vector<9x1xf32>
    %499 = vector.broadcast %498 : vector<9x1xf32> to vector<9x9xf32>
    %500 = arith.mulf %495, %499 : vector<9x9xf32>
    %501 = arith.truncf %500 : vector<9x9xf32> to vector<9x9xbf16>
    %cst_231 = arith.constant dense<0.000000e+00> : vector<9x8xf32>
    %502 = tpu.matmul %501, %489, %cst_231 {dimension_numbers = #tpu.dot_dimension_numbers<[1], [0], [0], [1], [0, 0, 1, 1], [], []>} : vector<9x9xbf16>, vector<9x8xbf16>, vector<9x8xf32> -> vector<9x8xf32>
    %503 = vector.extract_strided_slice %486 {offsets = [0, 8], sizes = [9, 8], strides = [1, 1]} : vector<9x96xbf16> to vector<9x8xbf16>
    %504 = vector.extract_strided_slice %486 {offsets = [0, 40], sizes = [9, 8], strides = [1, 1]} : vector<9x96xbf16> to vector<9x8xbf16>
    %505 = vector.extract_strided_slice %486 {offsets = [0, 72], sizes = [9, 8], strides = [1, 1]} : vector<9x96xbf16> to vector<9x8xbf16>
    %cst_232 = arith.constant dense<0.000000e+00> : vector<9x9xf32>
    %506 = tpu.matmul %503, %504, %cst_232 {dimension_numbers = #tpu.dot_dimension_numbers<[1], [1], [0], [0], [0, 0, 1, 0], [], []>} : vector<9x8xbf16>, vector<9x8xbf16>, vector<9x9xf32> -> vector<9x9xf32>
    %cst_233 = arith.constant dense<0xFF800000> : vector<9xf32>
    %507 = vector.multi_reduction <maximumf>, %506, %cst_233 [1] : vector<9x9xf32> to vector<9xf32>
    %508 = vector.shape_cast %507 : vector<9xf32> to vector<9x1xf32>
    %509 = vector.broadcast %508 : vector<9x1xf32> to vector<9x9xf32>
    %510 = arith.subf %506, %509 : vector<9x9xf32>
    %511 = math.exp %510 : vector<9x9xf32>
    %cst_234 = arith.constant dense<0.000000e+00> : vector<9xf32>
    %512 = vector.multi_reduction <add>, %511, %cst_234 [1] : vector<9x9xf32> to vector<9xf32>
    %513 = vector.shape_cast %512 : vector<9xf32> to vector<9x1xf32>
    %514 = tpu.reciprocal %513 {approx = true} : vector<9x1xf32> -> vector<9x1xf32>
    %515 = vector.broadcast %514 : vector<9x1xf32> to vector<9x9xf32>
    %516 = arith.mulf %511, %515 : vector<9x9xf32>
    %517 = arith.truncf %516 : vector<9x9xf32> to vector<9x9xbf16>
    %cst_235 = arith.constant dense<0.000000e+00> : vector<9x8xf32>
    %518 = tpu.matmul %517, %505, %cst_235 {dimension_numbers = #tpu.dot_dimension_numbers<[1], [0], [0], [1], [0, 0, 1, 1], [], []>} : vector<9x9xbf16>, vector<9x8xbf16>, vector<9x8xf32> -> vector<9x8xf32>
    %519 = vector.extract_strided_slice %486 {offsets = [0, 16], sizes = [9, 8], strides = [1, 1]} : vector<9x96xbf16> to vector<9x8xbf16>
    %520 = vector.extract_strided_slice %486 {offsets = [0, 48], sizes = [9, 8], strides = [1, 1]} : vector<9x96xbf16> to vector<9x8xbf16>
    %521 = vector.extract_strided_slice %486 {offsets = [0, 80], sizes = [9, 8], strides = [1, 1]} : vector<9x96xbf16> to vector<9x8xbf16>
    %cst_236 = arith.constant dense<0.000000e+00> : vector<9x9xf32>
    %522 = tpu.matmul %519, %520, %cst_236 {dimension_numbers = #tpu.dot_dimension_numbers<[1], [1], [0], [0], [0, 0, 1, 0], [], []>} : vector<9x8xbf16>, vector<9x8xbf16>, vector<9x9xf32> -> vector<9x9xf32>
    %cst_237 = arith.constant dense<0xFF800000> : vector<9xf32>
    %523 = vector.multi_reduction <maximumf>, %522, %cst_237 [1] : vector<9x9xf32> to vector<9xf32>
    %524 = vector.shape_cast %523 : vector<9xf32> to vector<9x1xf32>
    %525 = vector.broadcast %524 : vector<9x1xf32> to vector<9x9xf32>
    %526 = arith.subf %522, %525 : vector<9x9xf32>
    %527 = math.exp %526 : vector<9x9xf32>
    %cst_238 = arith.constant dense<0.000000e+00> : vector<9xf32>
    %528 = vector.multi_reduction <add>, %527, %cst_238 [1] : vector<9x9xf32> to vector<9xf32>
    %529 = vector.shape_cast %528 : vector<9xf32> to vector<9x1xf32>
    %530 = tpu.reciprocal %529 {approx = true} : vector<9x1xf32> -> vector<9x1xf32>
    %531 = vector.broadcast %530 : vector<9x1xf32> to vector<9x9xf32>
    %532 = arith.mulf %527, %531 : vector<9x9xf32>
    %533 = arith.truncf %532 : vector<9x9xf32> to vector<9x9xbf16>
    %cst_239 = arith.constant dense<0.000000e+00> : vector<9x8xf32>
    %534 = tpu.matmul %533, %521, %cst_239 {dimension_numbers = #tpu.dot_dimension_numbers<[1], [0], [0], [1], [0, 0, 1, 1], [], []>} : vector<9x9xbf16>, vector<9x8xbf16>, vector<9x8xf32> -> vector<9x8xf32>
    %535 = vector.extract_strided_slice %486 {offsets = [0, 24], sizes = [9, 8], strides = [1, 1]} : vector<9x96xbf16> to vector<9x8xbf16>
    %536 = vector.extract_strided_slice %486 {offsets = [0, 56], sizes = [9, 8], strides = [1, 1]} : vector<9x96xbf16> to vector<9x8xbf16>
    %537 = vector.extract_strided_slice %486 {offsets = [0, 88], sizes = [9, 8], strides = [1, 1]} : vector<9x96xbf16> to vector<9x8xbf16>
    %cst_240 = arith.constant dense<0.000000e+00> : vector<9x9xf32>
    %538 = tpu.matmul %535, %536, %cst_240 {dimension_numbers = #tpu.dot_dimension_numbers<[1], [1], [0], [0], [0, 0, 1, 0], [], []>} : vector<9x8xbf16>, vector<9x8xbf16>, vector<9x9xf32> -> vector<9x9xf32>
    %cst_241 = arith.constant dense<0xFF800000> : vector<9xf32>
    %539 = vector.multi_reduction <maximumf>, %538, %cst_241 [1] : vector<9x9xf32> to vector<9xf32>
    %540 = vector.shape_cast %539 : vector<9xf32> to vector<9x1xf32>
    %541 = vector.broadcast %540 : vector<9x1xf32> to vector<9x9xf32>
    %542 = arith.subf %538, %541 : vector<9x9xf32>
    %543 = math.exp %542 : vector<9x9xf32>
    %cst_242 = arith.constant dense<0.000000e+00> : vector<9xf32>
    %544 = vector.multi_reduction <add>, %543, %cst_242 [1] : vector<9x9xf32> to vector<9xf32>
    %545 = vector.shape_cast %544 : vector<9xf32> to vector<9x1xf32>
    %546 = tpu.reciprocal %545 {approx = true} : vector<9x1xf32> -> vector<9x1xf32>
    %547 = vector.broadcast %546 : vector<9x1xf32> to vector<9x9xf32>
    %548 = arith.mulf %543, %547 : vector<9x9xf32>
    %549 = arith.truncf %548 : vector<9x9xf32> to vector<9x9xbf16>
    %cst_243 = arith.constant dense<0.000000e+00> : vector<9x8xf32>
    %550 = tpu.matmul %549, %537, %cst_243 {dimension_numbers = #tpu.dot_dimension_numbers<[1], [0], [0], [1], [0, 0, 1, 1], [], []>} : vector<9x9xbf16>, vector<9x8xbf16>, vector<9x8xf32> -> vector<9x8xf32>
    %551 = tpu.concatenate %502, %518, %534, %550 in 1 : vector<9x8xf32>, vector<9x8xf32>, vector<9x8xf32>, vector<9x8xf32> -> vector<9x32xf32>
    %552 = tpu.concatenate %484, %551 in 0 : vector<9x32xf32>, vector<9x32xf32> -> vector<18x32xf32>
    %553 = arith.truncf %552 : vector<18x32xf32> to vector<18x32xbf16>
    %cst_244 = arith.constant dense<0.000000e+00> : vector<18x32xf32>
    %554 = tpu.matmul %553, %412, %cst_244 {dimension_numbers = #tpu.dot_dimension_numbers<[1], [0], [0], [1], [0, 0, 1, 1], [], []>} : vector<18x32xbf16>, vector<32x32xbf16>, vector<18x32xf32> -> vector<18x32xf32>
    %555 = vector.broadcast %399 : vector<1x32xf32> to vector<18x32xf32>
    %556 = arith.addf %554, %555 : vector<18x32xf32>
    %557 = arith.addf %556, %396 : vector<18x32xf32>
    %cst_245 = arith.constant dense<0.000000e+00> : vector<18xf32>
    %558 = vector.multi_reduction <add>, %557, %cst_245 [1] : vector<18x32xf32> to vector<18xf32>
    %559 = vector.shape_cast %558 : vector<18xf32> to vector<18x1xf32>
    %cst_246 = arith.constant 3.200000e+01 : f32
    %560 = vector.broadcast %cst_246 : f32 to vector<18x1xf32>
    %561 = arith.divf %559, %560 : vector<18x1xf32>
    %562 = vector.broadcast %561 : vector<18x1xf32> to vector<18x32xf32>
    %563 = arith.subf %557, %562 : vector<18x32xf32>
    %564 = arith.mulf %563, %563 : vector<18x32xf32>
    %cst_247 = arith.constant dense<0.000000e+00> : vector<18xf32>
    %565 = vector.multi_reduction <add>, %564, %cst_247 [1] : vector<18x32xf32> to vector<18xf32>
    %566 = vector.shape_cast %565 : vector<18xf32> to vector<18x1xf32>
    %cst_248 = arith.constant 3.200000e+01 : f32
    %567 = vector.broadcast %cst_248 : f32 to vector<18x1xf32>
    %568 = arith.divf %566, %567 : vector<18x1xf32>
    %569 = vector.broadcast %561 : vector<18x1xf32> to vector<18x32xf32>
    %570 = arith.subf %557, %569 : vector<18x32xf32>
    %cst_249 = arith.constant 9.99999996E-13 : f32
    %571 = vector.broadcast %cst_249 : f32 to vector<18x1xf32>
    %572 = arith.addf %568, %571 : vector<18x1xf32>
    %573 = math.rsqrt %572 : vector<18x1xf32>
    %574 = vector.broadcast %573 : vector<18x1xf32> to vector<18x32xf32>
    %575 = arith.mulf %570, %574 : vector<18x32xf32>
    %576 = vector.broadcast %400 : vector<1x32xf32> to vector<18x32xf32>
    %577 = arith.mulf %575, %576 : vector<18x32xf32>
    %578 = vector.broadcast %401 : vector<1x32xf32> to vector<18x32xf32>
    %579 = arith.addf %577, %578 : vector<18x32xf32>
    %580 = arith.truncf %579 : vector<18x32xf32> to vector<18x32xbf16>
    %cst_250 = arith.constant dense<0.000000e+00> : vector<18x64xf32>
    %581 = tpu.matmul %580, %409, %cst_250 {dimension_numbers = #tpu.dot_dimension_numbers<[1], [0], [0], [1], [0, 0, 1, 1], [], []>} : vector<18x32xbf16>, vector<32x64xbf16>, vector<18x64xf32> -> vector<18x64xf32>
    %582 = vector.broadcast %402 : vector<1x64xf32> to vector<18x64xf32>
    %583 = arith.addf %581, %582 : vector<18x64xf32>
    %cst_251 = arith.constant 5.000000e-01 : f32
    %584 = vector.broadcast %cst_251 : f32 to vector<18x64xf32>
    %585 = arith.mulf %584, %583 : vector<18x64xf32>
    %cst_252 = arith.constant 4.471500e-02 : f32
    %586 = vector.broadcast %cst_252 : f32 to vector<18x64xf32>
    %587 = arith.mulf %586, %583 : vector<18x64xf32>
    %588 = arith.mulf %587, %583 : vector<18x64xf32>
    %589 = arith.mulf %588, %583 : vector<18x64xf32>
    %590 = arith.addf %583, %589 : vector<18x64xf32>
    %cst_253 = arith.constant 0.797884583 : f32
    %591 = vector.broadcast %cst_253 : f32 to vector<18x64xf32>
    %592 = arith.mulf %591, %590 : vector<18x64xf32>
    %593 = math.tanh %592 : vector<18x64xf32>
    %cst_254 = arith.constant 1.000000e+00 : f32
    %594 = vector.broadcast %cst_254 : f32 to vector<18x64xf32>
    %595 = arith.addf %594, %593 : vector<18x64xf32>
    %596 = arith.mulf %585, %595 : vector<18x64xf32>
    %597 = arith.truncf %596 : vector<18x64xf32> to vector<18x64xbf16>
    %cst_255 = arith.constant dense<0.000000e+00> : vector<18x32xf32>
    %598 = tpu.matmul %597, %413, %cst_255 {dimension_numbers = #tpu.dot_dimension_numbers<[1], [0], [0], [1], [0, 0, 1, 1], [], []>} : vector<18x64xbf16>, vector<64x32xbf16>, vector<18x32xf32> -> vector<18x32xf32>
    %599 = vector.broadcast %403 : vector<1x32xf32> to vector<18x32xf32>
    %600 = arith.addf %598, %599 : vector<18x32xf32>
    %601 = arith.addf %600, %579 : vector<18x32xf32>
    %cst_256 = arith.constant dense<0.000000e+00> : vector<18xf32>
    %602 = vector.multi_reduction <add>, %601, %cst_256 [1] : vector<18x32xf32> to vector<18xf32>
    %603 = vector.shape_cast %602 : vector<18xf32> to vector<18x1xf32>
    %cst_257 = arith.constant 3.200000e+01 : f32
    %604 = vector.broadcast %cst_257 : f32 to vector<18x1xf32>
    %605 = arith.divf %603, %604 : vector<18x1xf32>
    %606 = vector.broadcast %605 : vector<18x1xf32> to vector<18x32xf32>
    %607 = arith.subf %601, %606 : vector<18x32xf32>
    %608 = arith.mulf %607, %607 : vector<18x32xf32>
    %cst_258 = arith.constant dense<0.000000e+00> : vector<18xf32>
    %609 = vector.multi_reduction <add>, %608, %cst_258 [1] : vector<18x32xf32> to vector<18xf32>
    %610 = vector.shape_cast %609 : vector<18xf32> to vector<18x1xf32>
    %cst_259 = arith.constant 3.200000e+01 : f32
    %611 = vector.broadcast %cst_259 : f32 to vector<18x1xf32>
    %612 = arith.divf %610, %611 : vector<18x1xf32>
    %613 = vector.broadcast %605 : vector<18x1xf32> to vector<18x32xf32>
    %614 = arith.subf %601, %613 : vector<18x32xf32>
    %cst_260 = arith.constant 9.99999996E-13 : f32
    %615 = vector.broadcast %cst_260 : f32 to vector<18x1xf32>
    %616 = arith.addf %612, %615 : vector<18x1xf32>
    %617 = math.rsqrt %616 : vector<18x1xf32>
    %618 = vector.broadcast %617 : vector<18x1xf32> to vector<18x32xf32>
    %619 = arith.mulf %614, %618 : vector<18x32xf32>
    %620 = vector.broadcast %404 : vector<1x32xf32> to vector<18x32xf32>
    %621 = arith.mulf %619, %620 : vector<18x32xf32>
    %622 = vector.broadcast %405 : vector<1x32xf32> to vector<18x32xf32>
    %623 = arith.addf %621, %622 : vector<18x32xf32>
    %624 = arith.addf %397, %623 : vector<18x32xf32>
    %c0_261 = arith.constant 0 : index
    %c0_262 = arith.constant 0 : index
    %625 = vector.load %arg7[%c0_261, %c0_262] : memref<18x32xf32, #tpu.memory_space<vmem>>, vector<18x32xf32>
    tpu.vector_store %arg7[%c0_261, %c0_262], %624 {strides = array<i32>} : memref<18x32xf32, #tpu.memory_space<vmem>>, vector<18x32xf32>,
    return
  }
  func.func @transform_0(%arg0: i32, %arg1: memref<2x9xi32, #tpu.memory_space<smem>>) -> (i32, i32) {
    %c0_i32 = arith.constant 0 : i32
    %c0_i32_0 = arith.constant 0 : i32
    %c0_i32_1 = arith.constant 0 : i32
    return %c0_i32, %c0_i32_0 : i32, i32
  }
  func.func @transform_1(%arg0: i32, %arg1: memref<2x9xi32, #tpu.memory_space<smem>>) -> (i32, i32) {
    %c0_i32 = arith.constant 0 : i32
    %c0_i32_0 = arith.constant 0 : i32
    %c0_i32_1 = arith.constant 0 : i32
    return %c0_i32, %c0_i32_0 : i32, i32
  }
  func.func @transform_2(%arg0: i32, %arg1: memref<2x9xi32, #tpu.memory_space<smem>>) -> (i32, i32, i32) {
    %c0_i32 = arith.constant 0 : i32
    %c0_i32_0 = arith.constant 0 : i32
    %c0_i32_1 = arith.constant 0 : i32
    %c0_i32_2 = arith.constant 0 : i32
    return %c0_i32, %c0_i32_0, %c0_i32_1 : i32, i32, i32
  }
  func.func @transform_3(%arg0: i32, %arg1: memref<2x9xi32, #tpu.memory_space<smem>>) -> (i32, i32, i32) {
    %c0_i32 = arith.constant 0 : i32
    %c0_i32_0 = arith.constant 0 : i32
    %c0_i32_1 = arith.constant 0 : i32
    %c0_i32_2 = arith.constant 0 : i32
    return %c0_i32, %c0_i32_0, %c0_i32_1 : i32, i32, i32
  }
  func.func @transform_4(%arg0: i32, %arg1: memref<2x9xi32, #tpu.memory_space<smem>>) -> (i32, i32) {
    %c0_i32 = arith.constant 0 : i32
    %c0_i32_0 = arith.constant 0 : i32
    %c0_i32_1 = arith.constant 0 : i32
    return %c0_i32, %c0_i32_0 : i32, i32
  }
  func.func @transform_5(%arg0: i32, %arg1: memref<2x9xi32, #tpu.memory_space<smem>>) -> (i32, i32) {
    %c0_i32 = arith.constant 0 : i32
    %c0_i32_0 = arith.constant 0 : i32
    return %arg0, %c0_i32 : i32, i32
  }
}

</mosaic_0001>

<llo_original>
// kernel: bert_embedding_predictor.1
$region0: #{bert_embedding_predictor.1}
  #allocation0 [shape = 'u32[]', space=smem, size = 0x4, offset = 0x4, fixed_abs, tag = 'smem constant byte address 0x4 - core index']
  #allocation1 [shape = 'u32[72,128]{1,0:T(1,128)}', space=vmem, size = 0x9000, scoped, tag = 'internal scratch']
  #allocation2 [shape = 'f32[18,32]{1,0:T(8,128)}', space=vmem, size = 0x3000, scoped, tag = 'scratch operand']
  #allocation3 [shape = 's32[1]{0}', space=sflag, size = 0x4, scoped, tag = 'scoped memory for bert_embedding_predictor.1']
  #allocation4 [shape = 'u8[1024]{0}', space=smem, size = 0x400, scoped, tag = 'prefetched SMEM operand 0']
  %s0 = inlined_call_operand.vmem [shape: s32[2,9], index: 0, kind: input, shape index: {}]
  %s1 = inlined_call_operand.vmem [shape: f32[32,32], index: 1, kind: input, shape index: {}]
  %s2 = inlined_call_operand.hbm [shape: f32[16,32], index: 2, kind: input, shape index: {}]
  %s3 = inlined_call_operand.vmem [shape: bf16[2,32,192], index: 3, kind: input, shape index: {}]
  %s4 = inlined_call_operand.vmem [shape: bf16[2,96,32], index: 4, kind: input, shape index: {}]
  %s5 = inlined_call_operand.vmem [shape: f32[18,128], index: 5, kind: input, shape index: {}]
  %s6 = inlined_call_operand.vmem [shape: f32[18,32], index: 6, kind: output, shape index: {}]
  %s7 = sld [smem:[#allocation0]]
  $region34: #{bert_embedding_predictor.1} parent=0
    _
  %s9 = ssub.s32 1, %s7
  %s10 = scalar_select 0, %s9, %s7
  %s12 = sshll.u32 %s0, 4
  %s13 = int_to_ptr.vmem [resolvable:$true] %s12
  %15 = dma.vmem_to_smem %s13, 32, [#allocation4], [#allocation3]
  %17 = dma.done [#allocation3], 32
  %18 = sfence
  $region1: #{bert_embedding_predictor.1} parent=0
    #allocation5 [shape = 'u8[8192]{0}', space=vmem, size = 0x2000, scoped, tag = 'input window, operand 2, single buffered']
    #allocation6 [shape = 's32[1]{0}', space=sflag, size = 0x4, scoped, tag = 'scoped memory for bert_embedding_predictor.1']
    %19 = vsyncpa [#allocation6], 0
    // Predicated region
    $region2: #{bert_embedding_predictor.1} parent=1 // pred_check
      _
    $region3: #{bert_embedding_predictor.1} parent=1 // pred_check_branch
      %21 = sbr.rel (0) target = $region5
    $region4: #{bert_embedding_predictor.1} parent=1 // pred_region
      _
    $region5: #{bert_embedding_predictor.1} parent=1 // pred_fallthru
      _
    // Predicated region
    $region6: #{bert_embedding_predictor.1} parent=1 // pred_check
      _
    $region7: #{bert_embedding_predictor.1} parent=1 // pred_check_branch
      %23 = sbr.rel (0) target = $region9
    $region8: #{bert_embedding_predictor.1} parent=1 // pred_region
      %25 = vsyncadd [#allocation6], 0
      %s26 = sshll.u32 %s2, 4
      %s27 = int_to_ptr.hbm [resolvable:$true] %s26
      %s28 = sshll.u32 [#allocation5], 4
      %s29 = int_to_ptr.vmem [resolvable:$true] %s28
      %34 = dma.hbm_to_vmem [thread:$0]  %s27, 256, %s29, [#allocation6], 128, 128, 8
    $region9: #{bert_embedding_predictor.1} parent=1 // pred_fallthru
      _
    // Predicated region
    $region10: #{bert_embedding_predictor.1} parent=1 // pred_check
      _
    $region11: #{bert_embedding_predictor.1} parent=1 // pred_check_branch
      %36 = sbr.rel (0) target = $region13
    $region12: #{bert_embedding_predictor.1} parent=1 // pred_region
      _
    $region13: #{bert_embedding_predictor.1} parent=1 // pred_fallthru
      _
    // Predicated region
    $region14: #{bert_embedding_predictor.1} parent=1 // pred_check
      _
    $region15: #{bert_embedding_predictor.1} parent=1 // pred_check_branch
      %38 = sbr.rel (0) target = $region17
    $region16: #{bert_embedding_predictor.1} parent=1 // pred_region
      _
    $region17: #{bert_embedding_predictor.1} parent=1 // pred_fallthru
      _
    // Predicated region
    $region18: #{bert_embedding_predictor.1} parent=1 // pred_check
      _
    $region19: #{bert_embedding_predictor.1} parent=1 // pred_check_branch
      %40 = sbr.rel (0) target = $region21
    $region20: #{bert_embedding_predictor.1} parent=1 // pred_region
      _
    $region21: #{bert_embedding_predictor.1} parent=1 // pred_fallthru
      _
    // Predicated region
    $region22: #{bert_embedding_predictor.1} parent=1 // pred_check
      _
    $region23: #{bert_embedding_predictor.1} parent=1 // pred_check_branch
      %42 = sbr.rel (0) target = $region25
    $region24: #{bert_embedding_predictor.1} parent=1 // pred_region
      %44 = dma.done [#allocation6], 256
    $region25: #{bert_embedding_predictor.1} parent=1 // pred_fallthru
      _
    %s46 = smul.u32 0, 2
    %s47 = smul.u32 %s46, 128
    %s48 = sld [smem:[#allocation4 + %s47]]
    %s49 = scalar_lea.vmem %s1, %s48
    %v50 = vld [vmem:[%s49] sm:$0x1]
    %v51 = vld [vmem:[#allocation5] sm:$0x1]
    %v52 = vadd.f32 %v50, %v51
    %vm53 = vcmask 253952
    %54 = vst.msk [vmem:[#allocation2] sm:$0x1] %vm53, %v52
    %s55 = sadd.s32 %s47, 1
    %s56 = sld [smem:[#allocation4 + %s55]]
    %s57 = scalar_lea.vmem %s1, %s56
    %v58 = vld [vmem:[%s57] sm:$0x1]
    %v59 = vld [vmem:[#allocation5 + $0x1] sm:$0x1]
    %v60 = vadd.f32 %v58, %v59
    %61 = vst.msk [vmem:[#allocation2 + $0x1] sm:$0x1] %vm53, %v60
    %s62 = sadd.s32 %s47, 2
    %s63 = sld [smem:[#allocation4 + %s62]]
    %s64 = scalar_lea.vmem %s1, %s63
    %v65 = vld [vmem:[%s64] sm:$0x1]
    %v66 = vld [vmem:[#allocation5 + $0x2] sm:$0x1]
    %v67 = vadd.f32 %v65, %v66
    %68 = vst.msk [vmem:[#allocation2 + $0x2] sm:$0x1] %vm53, %v67
    %s69 = sadd.s32 %s47, 3
    %s70 = sld [smem:[#allocation4 + %s69]]
    %s71 = scalar_lea.vmem %s1, %s70
    %v72 = vld [vmem:[%s71] sm:$0x1]
    %v73 = vld [vmem:[#allocation5 + $0x3] sm:$0x1]
    %v74 = vadd.f32 %v72, %v73
    %75 = vst.msk [vmem:[#allocation2 + $0x3] sm:$0x1] %vm53, %v74
    %s76 = sadd.s32 %s47, 4
    %s77 = sld [smem:[#allocation4 + %s76]]
    %s78 = scalar_lea.vmem %s1, %s77
    %v79 = vld [vmem:[%s78] sm:$0x1]
    %v80 = vld [vmem:[#allocation5 + $0x4] sm:$0x1]
    %v81 = vadd.f32 %v79, %v80
    %82 = vst.msk [vmem:[#allocation2 + $0x4] sm:$0x1] %vm53, %v81
    %s83 = sadd.s32 %s47, 5
    %s84 = sld [smem:[#allocation4 + %s83]]
    %s85 = scalar_lea.vmem %s1, %s84
    %v86 = vld [vmem:[%s85] sm:$0x1]
    %v87 = vld [vmem:[#allocation5 + $0x5] sm:$0x1]
    %v88 = vadd.f32 %v86, %v87
    %89 = vst.msk [vmem:[#allocation2 + $0x5] sm:$0x1] %vm53, %v88
    %s90 = sadd.s32 %s47, 6
    %s91 = sld [smem:[#allocation4 + %s90]]
    %s92 = scalar_lea.vmem %s1, %s91
    %v93 = vld [vmem:[%s92] sm:$0x1]
    %v94 = vld [vmem:[#allocation5 + $0x6] sm:$0x1]
    %v95 = vadd.f32 %v93, %v94
    %96 = vst.msk [vmem:[#allocation2 + $0x6] sm:$0x1] %vm53, %v95
    %s97 = sadd.s32 %s47, 7
    %s98 = sld [smem:[#allocation4 + %s97]]
    %s99 = scalar_lea.vmem %s1, %s98
    %v100 = vld [vmem:[%s99] sm:$0x1]
    %v101 = vld [vmem:[#allocation5 + $0x7] sm:$0x1]
    %v102 = vadd.f32 %v100, %v101
    %103 = vst.msk [vmem:[#allocation2 + $0x7] sm:$0x1] %vm53, %v102
    %s104 = sadd.s32 %s47, 8
    %s105 = sld [smem:[#allocation4 + %s104]]
    %s106 = scalar_lea.vmem %s1, %s105
    %v107 = vld [vmem:[%s106] sm:$0x1]
    %v108 = vld [vmem:[#allocation5 + $0x8] sm:$0x1]
    %v109 = vadd.f32 %v107, %v108
    %110 = vst.msk [vmem:[#allocation2 + $0x8] sm:$0x1] %vm53, %v109
    %s111 = sadd.s32 %s46, 1
    %s112 = smul.u32 %s111, 128
    %s113 = sld [smem:[#allocation4 + %s112]]
    %s114 = scalar_lea.vmem %s1, %s113
    %v115 = vld [vmem:[%s114] sm:$0x1]
    %v116 = vld [vmem:[#allocation5] sm:$0x1]
    %v117 = vadd.f32 %v115, %v116
    %118 = vst.msk [vmem:[#allocation2 + $0x9] sm:$0x1] %vm53, %v117
    %s119 = sadd.s32 %s112, 1
    %s120 = sld [smem:[#allocation4 + %s119]]
    %s121 = scalar_lea.vmem %s1, %s120
    %v122 = vld [vmem:[%s121] sm:$0x1]
    %v123 = vld [vmem:[#allocation5 + $0x1] sm:$0x1]
    %v124 = vadd.f32 %v122, %v123
    %125 = vst.msk [vmem:[#allocation2 + $0xa] sm:$0x1] %vm53, %v124
    %s126 = sadd.s32 %s112, 2
    %s127 = sld [smem:[#allocation4 + %s126]]
    %s128 = scalar_lea.vmem %s1, %s127
    %v129 = vld [vmem:[%s128] sm:$0x1]
    %v130 = vld [vmem:[#allocation5 + $0x2] sm:$0x1]
    %v131 = vadd.f32 %v129, %v130
    %132 = vst.msk [vmem:[#allocation2 + $0xb] sm:$0x1] %vm53, %v131
    %s133 = sadd.s32 %s112, 3
    %s134 = sld [smem:[#allocation4 + %s133]]
    %s135 = scalar_lea.vmem %s1, %s134
    %v136 = vld [vmem:[%s135] sm:$0x1]
    %v137 = vld [vmem:[#allocation5 + $0x3] sm:$0x1]
    %v138 = vadd.f32 %v136, %v137
    %139 = vst.msk [vmem:[#allocation2 + $0xc] sm:$0x1] %vm53, %v138
    %s140 = sadd.s32 %s112, 4
    %s141 = sld [smem:[#allocation4 + %s140]]
    %s142 = scalar_lea.vmem %s1, %s141
    %v143 = vld [vmem:[%s142] sm:$0x1]
    %v144 = vld [vmem:[#allocation5 + $0x4] sm:$0x1]
    %v145 = vadd.f32 %v143, %v144
    %146 = vst.msk [vmem:[#allocation2 + $0xd] sm:$0x1] %vm53, %v145
    %s147 = sadd.s32 %s112, 5
    %s148 = sld [smem:[#allocation4 + %s147]]
    %s149 = scalar_lea.vmem %s1, %s148
    %v150 = vld [vmem:[%s149] sm:$0x1]
    %v151 = vld [vmem:[#allocation5 + $0x5] sm:$0x1]
    %v152 = vadd.f32 %v150, %v151
    %153 = vst.msk [vmem:[#allocation2 + $0xe] sm:$0x1] %vm53, %v152
    %s154 = sadd.s32 %s112, 6
    %s155 = sld [smem:[#allocation4 + %s154]]
    %s156 = scalar_lea.vmem %s1, %s155
    %v157 = vld [vmem:[%s156] sm:$0x1]
    %v158 = vld [vmem:[#allocation5 + $0x6] sm:$0x1]
    %v159 = vadd.f32 %v157, %v158
    %160 = vst.msk [vmem:[#allocation2 + $0xf] sm:$0x1] %vm53, %v159
    %s161 = sadd.s32 %s112, 7
    %s162 = sld [smem:[#allocation4 + %s161]]
    %s163 = scalar_lea.vmem %s1, %s162
    %v164 = vld [vmem:[%s163] sm:$0x1]
    %v165 = vld [vmem:[#allocation5 + $0x7] sm:$0x1]
    %v166 = vadd.f32 %v164, %v165
    %167 = vst.msk [vmem:[#allocation2 + $0x10] sm:$0x1] %vm53, %v166
    %s168 = sadd.s32 %s112, 8
    %s169 = sld [smem:[#allocation4 + %s168]]
    %s170 = scalar_lea.vmem %s1, %s169
    %v171 = vld [vmem:[%s170] sm:$0x1]
    %v172 = vld [vmem:[#allocation5 + $0x8] sm:$0x1]
    %v173 = vadd.f32 %v171, %v172
    %174 = vst.msk [vmem:[#allocation2 + $0x11] sm:$0x1] %vm53, %v173
    %v175 = vld [vmem:[#allocation2] sm:$0xff]
    %v176 = vld [vmem:[#allocation2 + $0x8] sm:$0xff]
    %v177 = vld [vmem:[#allocation2 + $0x10] sm:$0x3]
    %v178 = vld [vmem:[%s5] sm:$0x1]
    %v179 = vld [vmem:[%s5 + $0x1] sm:$0x1]
    %vm180 = vcmask 261120
    %v181 = vsel %vm180, %v175, 0.0
    %182 = vadd.xlane.f32.xlu0 %v181
    %v183 = vpop.xlane.xlu0 %182
    %v184 = vsel %vm180, %v176, 0.0
    %185 = vadd.xlane.f32.xlu0 %v184
    %v186 = vpop.xlane.xlu0 %185
    %vm187 = vcmask 254976
    %v188 = vsel %vm187, %v177, 0.0
    %189 = vadd.xlane.f32.xlu0 %v188
    %v190 = vpop.xlane.xlu0 %189
    %v191 = vrcp.pop 32.0
    %v192 = vmul.f32 32.0, %v191
    %v193 = vsub.f32 1.0, %v192
    %v194 = vmul.f32 %v191, %v193
    %v195 = vadd.f32 %v191, %v194
    %vm196 = vweird.f32 %v191
    %v197 = vsel %vm196, %v191, %v195
    %v198 = vmul.f32 %v183, %v197
    %v199 = vmul.f32 %v186, %v197
    %v200 = vmul.f32 %v190, %v197
    %v201 = vsub.f32 %v175, %v198
    %v202 = vsub.f32 %v176, %v199
    %v203 = vsub.f32 %v177, %v200
    %v204 = vmul.f32 %v201, %v201
    %v205 = vmul.f32 %v202, %v202
    %v206 = vmul.f32 %v203, %v203
    %v207 = vsel %vm180, %v204, 0.0
    %208 = vadd.xlane.f32.xlu0 %v207
    %v209 = vpop.xlane.xlu0 %208
    %v210 = vsel %vm180, %v205, 0.0
    %211 = vadd.xlane.f32.xlu0 %v210
    %v212 = vpop.xlane.xlu0 %211
    %v213 = vsel %vm187, %v206, 0.0
    %214 = vadd.xlane.f32.xlu0 %v213
    %v215 = vpop.xlane.xlu0 %214
    %v216 = vmul.f32 %v209, %v197
    %v217 = vmul.f32 %v212, %v197
    %v218 = vmul.f32 %v215, %v197
    %v219 = vadd.f32 %v216, 1e-12
    %v220 = vadd.f32 %v217, 1e-12
    %v221 = vadd.f32 %v218, 1e-12
    %v222 = vrsqrt.pop %v219
    %v223 = vmul.f32 %v222, %v219
    %v224 = vmul.f32 %v223, %v222
    %v225 = vmul.f32 0.5, %v224
    %v226 = vsub.f32 1.5, %v225
    %v227 = vmul.f32 %v222, %v226
    %vm228 = vweird.f32 %v219
    %vm229 = vweird.f32 %v222
    %vm230 = vmor %vm228, %vm229
    %v231 = vsel %vm230, %v222, %v227
    %v232 = vrsqrt.pop %v220
    %v233 = vmul.f32 %v232, %v220
    %v234 = vmul.f32 %v233, %v232
    %v235 = vmul.f32 0.5, %v234
    %v236 = vsub.f32 1.5, %v235
    %v237 = vmul.f32 %v232, %v236
    %vm238 = vweird.f32 %v220
    %vm239 = vweird.f32 %v232
    %vm240 = vmor %vm238, %vm239
    %v241 = vsel %vm240, %v232, %v237
    %v242 = vrsqrt.pop %v221
    %v243 = vmul.f32 %v242, %v221
    %v244 = vmul.f32 %v243, %v242
    %v245 = vmul.f32 0.5, %v244
    %v246 = vsub.f32 1.5, %v245
    %v247 = vmul.f32 %v242, %v246
    %vm248 = vweird.f32 %v221
    %vm249 = vweird.f32 %v242
    %vm250 = vmor %vm248, %vm249
    %v251 = vsel %vm250, %v242, %v247
    %v252 = vmul.f32 %v201, %v231
    %v253 = vmul.f32 %v202, %v241
    %v254 = vmul.f32 %v203, %v251
    %v255 = vperm.slane %v178, 0
    %v256 = vmul.f32 %v252, %v255
    %v257 = vmul.f32 %v253, %v255
    %v258 = vmul.f32 %v254, %v255
    %v259 = vperm.slane %v179, 0
    %v260 = vadd.f32 %v256, %v259
    %v261 = vadd.f32 %v257, %v259
    %v262 = vadd.f32 %v258, %v259
    %v263 = vld [vmem:[%s5 + $0x2] sm:$0x1]
    %v264 = vld [vmem:[%s5 + $0x3] sm:$0x1]
    %v265 = vld [vmem:[%s5 + $0x4] sm:$0x1]
    %v266 = vld [vmem:[%s5 + $0x5] sm:$0x1]
    %v267 = vld [vmem:[%s5 + $0x6] sm:$0x1]
    %v268 = vld [vmem:[%s5 + $0x7] sm:$0x1]
    %v269 = vld [vmem:[%s5 + $0x8] sm:$0x1]
    %v270 = vld [vmem:[%s5 + $0x9] sm:$0x1]
    %v271 = vld [vmem:[%s3] sm:$0xff]
    %v272 = vld [vmem:[%s3 + $0x8] sm:$0xff]
    %v273 = vld [vmem:[%s3 + $0x10] sm:$0xff]
    %v274 = vld [vmem:[%s3 + $0x18] sm:$0xff]
    %v275 = vld [vmem:[%s4] sm:$0xf]
    %v276 = vld [vmem:[%s4 + $0x4] sm:$0xf]
    %v277 = vld [vmem:[%s4 + $0x8] sm:$0xf]
    %v278 = vld [vmem:[%s4 + $0xc] sm:$0xf]
    %v279 = vld [vmem:[%s4 + $0x10] sm:$0xf]
    %v280 = vld [vmem:[%s4 + $0x14] sm:$0xf]
    %v281 = vld [vmem:[%s4 + $0x18] sm:$0xf]
    %v282 = vld [vmem:[%s4 + $0x1c] sm:$0xf]
    %v283 = vld [vmem:[%s4 + $0x20] sm:$0xf]
    %v284 = vld [vmem:[%s4 + $0x24] sm:$0xf]
    %v285 = vld [vmem:[%s4 + $0x28] sm:$0xf]
    %v286 = vld [vmem:[%s4 + $0x2c] sm:$0xf]
    %v287 = vpack.c.bf16 %v261, %v260
    %v288 = vpack.c.bf16 %v262, %v262
    %v289 = vperm.slane %v263, 0
    %v294 = vunpack.c.l.b16 %v271
    %v295 = vunpack.c.l.b16 %v272
    %v296 = vunpack.c.l.b16 %v273
    %v297 = vunpack.c.l.b16 %v274
    %v298 = vpack.c.b16 %v295, %v294
    %v299 = vpack.c.b16 %v297, %v296
    %v303 = vsel %vm180, %v287, 0
    %v306 = vsel %vm180, %v288, 0
    %308 = vmatpush.bf16.msra.mxu0 0
    %309 = vmatpush.bf16.msra.mxu0 0
    %310 = vmatpush.bf16.msra.mxu0 0
    %311 = vmatpush.bf16.msra.mxu0 0
    %312 = vmatpush.bf16.msra.mxu0 0
    %313 = vmatpush.bf16.msra.mxu0 0
    %314 = vmatpush.bf16.msra.mxu0 %v299
    %315 = vmatpush.bf16.msra.mxu0 %v298
    %316 = vmatmul.bf16.gmra.mxu0 %v303
    %v317 = vpop.f32.mrf.mxu0
    %v318 = vadd.f32 %v289, %v317
    %v319 = vpop.f32.mrf.mxu0
    %v320 = vadd.f32 %v289, %v319
    %321 = vmatmul.bf16.gmra.mxu0 %v306
    %v322 = vpop.f32.mrf.mxu0
    %v323 = vadd.f32 %v289, %v322
    %v324 = vpop.f32.mrf.mxu0
    %325 = vdwg.mxu0
    %v326 = vpack.c.bf16 %v318, %v318
    %v327 = vpack.c.bf16 %v320, %v320
    %v330 = vunpack.c.l.b16 %v326
    %v331 = vunpack.c.l.b16 %v327
    %v332 = vpack.c.b16 %v331, %v330
    %333 = vrot.lane.b32.xlu0 %v332, 96
    %v334 = vpop.permute.xlu0 %333
    %vm335 = vcmask 64512
    %v337 = vsel %vm335, %v332, 0
    %v340 = vsel %vm335, %v334, 0
    %342 = vmatpush.bf16.xpose.msra.mxu0 0
    %343 = vmatpush.bf16.xpose.msra.mxu0 0
    %344 = vmatpush.bf16.xpose.msra.mxu0 0
    %345 = vmatpush.bf16.xpose.msra.mxu0 0
    %346 = vmatpush.bf16.xpose.msra.mxu0 0
    %347 = vmatpush.bf16.xpose.msra.mxu0 0
    %348 = vmatpush.bf16.xpose.msra.mxu0 0
    %349 = vmatpush.bf16.xpose.msra.mxu0 %v340
    %350 = vmatmul.bf16.gmra.mxu0 %v337
    %v351 = vpop.f32.mrf.mxu0
    %v352 = vadd.f32 0.0, %v351
    %v353 = vpop.f32.mrf.mxu0
    %v354 = vadd.f32 0.0, %v353
    %355 = vdwg.mxu0
    %vm356 = vcmask 72704
    %v357 = vsel %vm356, %v352, -inf
    %358 = vmax.xlane.f32.xlu0 %v357
    %v359 = vpop.xlane.xlu0 %358
    %vm360 = vcmask 65536
    %v361 = vsel %vm360, %v354, -inf
    %362 = vmax.xlane.f32.xlu0 %v361
    %v363 = vpop.xlane.xlu0 %362
    %v364 = vsub.f32 %v352, %v359
    %v365 = vsub.f32 %v354, %v363
    %v366 = vmul.f32 %v364, 1.442695
    %v367 = vpow.pop %v366
    %v368 = vmul.f32 %v365, 1.442695
    %v369 = vpow.pop %v368
    %v370 = vsel %vm356, %v367, 0.0
    %371 = vadd.xlane.f32.xlu0 %v370
    %v372 = vpop.xlane.xlu0 %371
    %v373 = vsel %vm360, %v369, 0.0
    %374 = vadd.xlane.f32.xlu0 %v373
    %v375 = vpop.xlane.xlu0 %374
    %v376 = vrcp.pop %v372
    %v377 = vrcp.pop %v375
    %v378 = vmul.f32 %v367, %v376
    %v379 = vmul.f32 %v369, %v377
    %v380 = vpack.c.bf16 %v379, %v378
    %381 = vrot.lane.b32.xlu0 %v332, 64
    %v382 = vpop.permute.xlu0 %381
    %v384 = vsel %vm356, %v380, 0
    %vm386 = vcmask 1043456
    %vm387 = vcmask 1044480
    %v388 = vsel %vm386, 4294967295, 65535
    %v389 = vsel %vm387, %v388, 0
    %v391 = vand.u32 %v382, %v389
    %393 = vmatpush.bf16.msra.mxu0 0
    %394 = vmatpush.bf16.msra.mxu0 0
    %395 = vmatpush.bf16.msra.mxu0 0
    %396 = vmatpush.bf16.msra.mxu0 0
    %397 = vmatpush.bf16.msra.mxu0 0
    %398 = vmatpush.bf16.msra.mxu0 0
    %399 = vmatpush.bf16.msra.mxu0 0
    %400 = vmatpush.bf16.msra.mxu0 %v391
    %401 = vmatmul.bf16.gmra.mxu0 %v384
    %v402 = vpop.f32.mrf.mxu0
    %v403 = vadd.f32 0.0, %v402
    %v404 = vpop.f32.mrf.mxu0
    %v405 = vadd.f32 0.0, %v404
    %406 = vdwg.mxu0
    %407 = vrot.lane.b32.xlu0 %v332, 120
    %v408 = vpop.permute.xlu0 %407
    %409 = vrot.lane.b32.xlu0 %v332, 88
    %v410 = vpop.permute.xlu0 %409
    %v412 = vsel %vm335, %v408, 0
    %v415 = vsel %vm335, %v410, 0
    %417 = vmatpush.bf16.xpose.msra.mxu0 0
    %418 = vmatpush.bf16.xpose.msra.mxu0 0
    %419 = vmatpush.bf16.xpose.msra.mxu0 0
    %420 = vmatpush.bf16.xpose.msra.mxu0 0
    %421 = vmatpush.bf16.xpose.msra.mxu0 0
    %422 = vmatpush.bf16.xpose.msra.mxu0 0
    %423 = vmatpush.bf16.xpose.msra.mxu0 0
    %424 = vmatpush.bf16.xpose.msra.mxu0 %v415
    %425 = vmatmul.bf16.gmra.mxu0 %v412
    %v426 = vpop.f32.mrf.mxu0
    %v427 = vadd.f32 0.0, %v426
    %v428 = vpop.f32.mrf.mxu0
    %v429 = vadd.f32 0.0, %v428
    %430 = vdwg.mxu0
    %v431 = vsel %vm356, %v427, -inf
    %432 = vmax.xlane.f32.xlu0 %v431
    %v433 = vpop.xlane.xlu0 %432
    %v434 = vsel %vm360, %v429, -inf
    %435 = vmax.xlane.f32.xlu0 %v434
    %v436 = vpop.xlane.xlu0 %435
    %v437 = vsub.f32 %v427, %v433
    %v438 = vsub.f32 %v429, %v436
    %v439 = vmul.f32 %v437, 1.442695
    %v440 = vpow.pop %v439
    %v441 = vmul.f32 %v438, 1.442695
    %v442 = vpow.pop %v441
    %v443 = vsel %vm356, %v440, 0.0
    %444 = vadd.xlane.f32.xlu0 %v443
    %v445 = vpop.xlane.xlu0 %444
    %v446 = vsel %vm360, %v442, 0.0
    %447 = vadd.xlane.f32.xlu0 %v446
    %v448 = vpop.xlane.xlu0 %447
    %v449 = vrcp.pop %v445
    %v450 = vrcp.pop %v448
    %v451 = vmul.f32 %v440, %v449
    %v452 = vmul.f32 %v442, %v450
    %v453 = vpack.c.bf16 %v452, %v451
    %454 = vrot.lane.b32.xlu0 %v332, 56
    %v455 = vpop.permute.xlu0 %454
    %v457 = vsel %vm356, %v453, 0
    %v460 = vand.u32 %v455, %v389
    %462 = vmatpush.bf16.msra.mxu0 0
    %463 = vmatpush.bf16.msra.mxu0 0
    %464 = vmatpush.bf16.msra.mxu0 0
    %465 = vmatpush.bf16.msra.mxu0 0
    %466 = vmatpush.bf16.msra.mxu0 0
    %467 = vmatpush.bf16.msra.mxu0 0
    %468 = vmatpush.bf16.msra.mxu0 0
    %469 = vmatpush.bf16.msra.mxu0 %v460
    %470 = vmatmul.bf16.gmra.mxu0 %v457
    %v471 = vpop.f32.mrf.mxu0
    %v472 = vadd.f32 0.0, %v471
    %v473 = vpop.f32.mrf.mxu0
    %v474 = vadd.f32 0.0, %v473
    %475 = vdwg.mxu0
    %476 = vrot.lane.b32.xlu0 %v332, 112
    %v477 = vpop.permute.xlu0 %476
    %478 = vrot.lane.b32.xlu0 %v332, 80
    %v479 = vpop.permute.xlu0 %478
    %v481 = vsel %vm335, %v477, 0
    %v484 = vsel %vm335, %v479, 0
    %486 = vmatpush.bf16.xpose.msra.mxu0 0
    %487 = vmatpush.bf16.xpose.msra.mxu0 0
    %488 = vmatpush.bf16.xpose.msra.mxu0 0
    %489 = vmatpush.bf16.xpose.msra.mxu0 0
    %490 = vmatpush.bf16.xpose.msra.mxu0 0
    %491 = vmatpush.bf16.xpose.msra.mxu0 0
    %492 = vmatpush.bf16.xpose.msra.mxu0 0
    %493 = vmatpush.bf16.xpose.msra.mxu0 %v484
    %494 = vmatmul.bf16.gmra.mxu0 %v481
    %v495 = vpop.f32.mrf.mxu0
    %v496 = vadd.f32 0.0, %v495
    %v497 = vpop.f32.mrf.mxu0
    %v498 = vadd.f32 0.0, %v497
    %499 = vdwg.mxu0
    %v500 = vsel %vm356, %v496, -inf
    %501 = vmax.xlane.f32.xlu0 %v500
    %v502 = vpop.xlane.xlu0 %501
    %v503 = vsel %vm360, %v498, -inf
    %504 = vmax.xlane.f32.xlu0 %v503
    %v505 = vpop.xlane.xlu0 %504
    %v506 = vsub.f32 %v496, %v502
    %v507 = vsub.f32 %v498, %v505
    %v508 = vmul.f32 %v506, 1.442695
    %v509 = vpow.pop %v508
    %v510 = vmul.f32 %v507, 1.442695
    %v511 = vpow.pop %v510
    %v512 = vsel %vm356, %v509, 0.0
    %513 = vadd.xlane.f32.xlu0 %v512
    %v514 = vpop.xlane.xlu0 %513
    %v515 = vsel %vm360, %v511, 0.0
    %516 = vadd.xlane.f32.xlu0 %v515
    %v517 = vpop.xlane.xlu0 %516
    %v518 = vrcp.pop %v514
    %v519 = vrcp.pop %v517
    %v520 = vmul.f32 %v509, %v518
    %v521 = vmul.f32 %v511, %v519
    %v522 = vpack.c.bf16 %v521, %v520
    %523 = vrot.lane.b32.xlu0 %v332, 48
    %v524 = vpop.permute.xlu0 %523
    %v526 = vsel %vm356, %v522, 0
    %v529 = vand.u32 %v524, %v389
    %531 = vmatpush.bf16.msra.mxu0 0
    %532 = vmatpush.bf16.msra.mxu0 0
    %533 = vmatpush.bf16.msra.mxu0 0
    %534 = vmatpush.bf16.msra.mxu0 0
    %535 = vmatpush.bf16.msra.mxu0 0
    %536 = vmatpush.bf16.msra.mxu0 0
    %537 = vmatpush.bf16.msra.mxu0 0
    %538 = vmatpush.bf16.msra.mxu0 %v529
    %539 = vmatmul.bf16.gmra.mxu0 %v526
    %v540 = vpop.f32.mrf.mxu0
    %v541 = vadd.f32 0.0, %v540
    %v542 = vpop.f32.mrf.mxu0
    %v543 = vadd.f32 0.0, %v542
    %544 = vdwg.mxu0
    %545 = vrot.lane.b32.xlu0 %v332, 104
    %v546 = vpop.permute.xlu0 %545
    %547 = vrot.lane.b32.xlu0 %v332, 72
    %v548 = vpop.permute.xlu0 %547
    %v550 = vsel %vm335, %v546, 0
    %v553 = vsel %vm335, %v548, 0
    %555 = vmatpush.bf16.xpose.msra.mxu0 0
    %556 = vmatpush.bf16.xpose.msra.mxu0 0
    %557 = vmatpush.bf16.xpose.msra.mxu0 0
    %558 = vmatpush.bf16.xpose.msra.mxu0 0
    %559 = vmatpush.bf16.xpose.msra.mxu0 0
    %560 = vmatpush.bf16.xpose.msra.mxu0 0
    %561 = vmatpush.bf16.xpose.msra.mxu0 0
    %562 = vmatpush.bf16.xpose.msra.mxu0 %v553
    %563 = vmatmul.bf16.gmra.mxu0 %v550
    %v564 = vpop.f32.mrf.mxu0
    %v565 = vadd.f32 0.0, %v564
    %v566 = vpop.f32.mrf.mxu0
    %v567 = vadd.f32 0.0, %v566
    %568 = vdwg.mxu0
    %v569 = vsel %vm356, %v565, -inf
    %570 = vmax.xlane.f32.xlu0 %v569
    %v571 = vpop.xlane.xlu0 %570
    %v572 = vsel %vm360, %v567, -inf
    %573 = vmax.xlane.f32.xlu0 %v572
    %v574 = vpop.xlane.xlu0 %573
    %v575 = vsub.f32 %v565, %v571
    %v576 = vsub.f32 %v567, %v574
    %v577 = vmul.f32 %v575, 1.442695
    %v578 = vpow.pop %v577
    %v579 = vmul.f32 %v576, 1.442695
    %v580 = vpow.pop %v579
    %v581 = vsel %vm356, %v578, 0.0
    %582 = vadd.xlane.f32.xlu0 %v581
    %v583 = vpop.xlane.xlu0 %582
    %v584 = vsel %vm360, %v580, 0.0
    %585 = vadd.xlane.f32.xlu0 %v584
    %v586 = vpop.xlane.xlu0 %585
    %v587 = vrcp.pop %v583
    %v588 = vrcp.pop %v586
    %v589 = vmul.f32 %v578, %v587
    %v590 = vmul.f32 %v580, %v588
    %v591 = vpack.c.bf16 %v590, %v589
    %592 = vrot.lane.b32.xlu0 %v332, 40
    %v593 = vpop.permute.xlu0 %592
    %v595 = vsel %vm356, %v591, 0
    %v598 = vand.u32 %v593, %v389
    %600 = vmatpush.bf16.msra.mxu0 0
    %601 = vmatpush.bf16.msra.mxu0 0
    %602 = vmatpush.bf16.msra.mxu0 0
    %603 = vmatpush.bf16.msra.mxu0 0
    %604 = vmatpush.bf16.msra.mxu0 0
    %605 = vmatpush.bf16.msra.mxu0 0
    %606 = vmatpush.bf16.msra.mxu0 0
    %607 = vmatpush.bf16.msra.mxu0 %v598
    %608 = vmatmul.bf16.gmra.mxu0 %v595
    %v609 = vpop.f32.mrf.mxu0
    %v610 = vadd.f32 0.0, %v609
    %v611 = vpop.f32.mrf.mxu0
    %v612 = vadd.f32 0.0, %v611
    %613 = vdwg.mxu0
    %616 = vrot.lane.b32.xlu0 %v472, 8
    %v617 = vpop.permute.xlu0 %616
    %618 = vrot.lane.b32.xlu0 %v474, 8
    %v619 = vpop.permute.xlu0 %618
    %624 = vrot.lane.b32.xlu0 %v541, 16
    %v625 = vpop.permute.xlu0 %624
    %626 = vrot.lane.b32.xlu0 %v543, 16
    %v627 = vpop.permute.xlu0 %626
    %632 = vrot.lane.b32.xlu0 %v610, 24
    %v633 = vpop.permute.xlu0 %632
    %634 = vrot.lane.b32.xlu0 %v612, 24
    %v635 = vpop.permute.xlu0 %634
    %v638 = vsel %vm335, %v403, %v617
    %v639 = vsel %vm335, %v405, %v619
    %vm640 = vcmask 130048
    %v641 = vsel %vm640, %v638, %v625
    %v642 = vsel %vm640, %v639, %v627
    %vm643 = vcmask 195584
    %v644 = vsel %vm643, %v641, %v633
    %v645 = vsel %vm643, %v642, %v635
    %v646 = vpack.c.bf16 %v323, %v323
    %v648 = vunpack.c.l.b16 %v646
    %v649 = vpack.c.b16 %v648, %v331
    %v651 = vshrl.u32 %v649, 16
    %v653 = vshll.u32 %v649, 16
    %v655 = vrot.slane %v653, 1
    %v656 = vor.u32 %v651, %v655
    %657 = vrot.lane.b32.xlu0 %v656, 96
    %v658 = vpop.permute.xlu0 %657
    %v660 = vsel %vm335, %v656, 0
    %v663 = vsel %vm335, %v658, 0
    %665 = vmatpush.bf16.xpose.msra.mxu0 0
    %666 = vmatpush.bf16.xpose.msra.mxu0 0
    %667 = vmatpush.bf16.xpose.msra.mxu0 0
    %668 = vmatpush.bf16.xpose.msra.mxu0 0
    %669 = vmatpush.bf16.xpose.msra.mxu0 0
    %670 = vmatpush.bf16.xpose.msra.mxu0 0
    %671 = vmatpush.bf16.xpose.msra.mxu0 0
    %672 = vmatpush.bf16.xpose.msra.mxu0 %v663
    %673 = vmatmul.bf16.gmra.mxu0 %v660
    %v674 = vpop.f32.mrf.mxu0
    %v675 = vadd.f32 0.0, %v674
    %v676 = vpop.f32.mrf.mxu0
    %v677 = vadd.f32 0.0, %v676
    %678 = vdwg.mxu0
    %v679 = vsel %vm356, %v675, -inf
    %680 = vmax.xlane.f32.xlu0 %v679
    %v681 = vpop.xlane.xlu0 %680
    %v682 = vsel %vm360, %v677, -inf
    %683 = vmax.xlane.f32.xlu0 %v682
    %v684 = vpop.xlane.xlu0 %683
    %v685 = vsub.f32 %v675, %v681
    %v686 = vsub.f32 %v677, %v684
    %v687 = vmul.f32 %v685, 1.442695
    %v688 = vpow.pop %v687
    %v689 = vmul.f32 %v686, 1.442695
    %v690 = vpow.pop %v689
    %v691 = vsel %vm356, %v688, 0.0
    %692 = vadd.xlane.f32.xlu0 %v691
    %v693 = vpop.xlane.xlu0 %692
    %v694 = vsel %vm360, %v690, 0.0
    %695 = vadd.xlane.f32.xlu0 %v694
    %v696 = vpop.xlane.xlu0 %695
    %v697 = vrcp.pop %v693
    %v698 = vrcp.pop %v696
    %v699 = vmul.f32 %v688, %v697
    %v700 = vmul.f32 %v690, %v698
    %v701 = vpack.c.bf16 %v700, %v699
    %702 = vrot.lane.b32.xlu0 %v656, 64
    %v703 = vpop.permute.xlu0 %702
    %v705 = vsel %vm356, %v701, 0
    %v708 = vand.u32 %v703, %v389
    %710 = vmatpush.bf16.msra.mxu0 0
    %711 = vmatpush.bf16.msra.mxu0 0
    %712 = vmatpush.bf16.msra.mxu0 0
    %713 = vmatpush.bf16.msra.mxu0 0
    %714 = vmatpush.bf16.msra.mxu0 0
    %715 = vmatpush.bf16.msra.mxu0 0
    %716 = vmatpush.bf16.msra.mxu0 0
    %717 = vmatpush.bf16.msra.mxu0 %v708
    %718 = vmatmul.bf16.gmra.mxu0 %v705
    %v719 = vpop.f32.mrf.mxu0
    %v720 = vadd.f32 0.0, %v719
    %v721 = vpop.f32.mrf.mxu0
    %v722 = vadd.f32 0.0, %v721
    %723 = vdwg.mxu0
    %724 = vrot.lane.b32.xlu0 %v656, 120
    %v725 = vpop.permute.xlu0 %724
    %726 = vrot.lane.b32.xlu0 %v656, 88
    %v727 = vpop.permute.xlu0 %726
    %v729 = vsel %vm335, %v725, 0
    %v732 = vsel %vm335, %v727, 0
    %734 = vmatpush.bf16.xpose.msra.mxu0 0
    %735 = vmatpush.bf16.xpose.msra.mxu0 0
    %736 = vmatpush.bf16.xpose.msra.mxu0 0
    %737 = vmatpush.bf16.xpose.msra.mxu0 0
    %738 = vmatpush.bf16.xpose.msra.mxu0 0
    %739 = vmatpush.bf16.xpose.msra.mxu0 0
    %740 = vmatpush.bf16.xpose.msra.mxu0 0
    %741 = vmatpush.bf16.xpose.msra.mxu0 %v732
    %742 = vmatmul.bf16.gmra.mxu0 %v729
    %v743 = vpop.f32.mrf.mxu0
    %v744 = vadd.f32 0.0, %v743
    %v745 = vpop.f32.mrf.mxu0
    %v746 = vadd.f32 0.0, %v745
    %747 = vdwg.mxu0
    %v748 = vsel %vm356, %v744, -inf
    %749 = vmax.xlane.f32.xlu0 %v748
    %v750 = vpop.xlane.xlu0 %749
    %v751 = vsel %vm360, %v746, -inf
    %752 = vmax.xlane.f32.xlu0 %v751
    %v753 = vpop.xlane.xlu0 %752
    %v754 = vsub.f32 %v744, %v750
    %v755 = vsub.f32 %v746, %v753
    %v756 = vmul.f32 %v754, 1.442695
    %v757 = vpow.pop %v756
    %v758 = vmul.f32 %v755, 1.442695
    %v759 = vpow.pop %v758
    %v760 = vsel %vm356, %v757, 0.0
    %761 = vadd.xlane.f32.xlu0 %v760
    %v762 = vpop.xlane.xlu0 %761
    %v763 = vsel %vm360, %v759, 0.0
    %764 = vadd.xlane.f32.xlu0 %v763
    %v765 = vpop.xlane.xlu0 %764
    %v766 = vrcp.pop %v762
    %v767 = vrcp.pop %v765
    %v768 = vmul.f32 %v757, %v766
    %v769 = vmul.f32 %v759, %v767
    %v770 = vpack.c.bf16 %v769, %v768
    %771 = vrot.lane.b32.xlu0 %v656, 56
    %v772 = vpop.permute.xlu0 %771
    %v774 = vsel %vm356, %v770, 0
    %v777 = vand.u32 %v772, %v389
    %779 = vmatpush.bf16.msra.mxu0 0
    %780 = vmatpush.bf16.msra.mxu0 0
    %781 = vmatpush.bf16.msra.mxu0 0
    %782 = vmatpush.bf16.msra.mxu0 0
    %783 = vmatpush.bf16.msra.mxu0 0
    %784 = vmatpush.bf16.msra.mxu0 0
    %785 = vmatpush.bf16.msra.mxu0 0
    %786 = vmatpush.bf16.msra.mxu0 %v777
    %787 = vmatmul.bf16.gmra.mxu0 %v774
    %v788 = vpop.f32.mrf.mxu0
    %v789 = vadd.f32 0.0, %v788
    %v790 = vpop.f32.mrf.mxu0
    %v791 = vadd.f32 0.0, %v790
    %792 = vdwg.mxu0
    %793 = vrot.lane.b32.xlu0 %v656, 112
    %v794 = vpop.permute.xlu0 %793
    %795 = vrot.lane.b32.xlu0 %v656, 80
    %v796 = vpop.permute.xlu0 %795
    %v798 = vsel %vm335, %v794, 0
    %v801 = vsel %vm335, %v796, 0
    %803 = vmatpush.bf16.xpose.msra.mxu0 0
    %804 = vmatpush.bf16.xpose.msra.mxu0 0
    %805 = vmatpush.bf16.xpose.msra.mxu0 0
    %806 = vmatpush.bf16.xpose.msra.mxu0 0
    %807 = vmatpush.bf16.xpose.msra.mxu0 0
    %808 = vmatpush.bf16.xpose.msra.mxu0 0
    %809 = vmatpush.bf16.xpose.msra.mxu0 0
    %810 = vmatpush.bf16.xpose.msra.mxu0 %v801
    %811 = vmatmul.bf16.gmra.mxu0 %v798
    %v812 = vpop.f32.mrf.mxu0
    %v813 = vadd.f32 0.0, %v812
    %v814 = vpop.f32.mrf.mxu0
    %v815 = vadd.f32 0.0, %v814
    %816 = vdwg.mxu0
    %v817 = vsel %vm356, %v813, -inf
    %818 = vmax.xlane.f32.xlu0 %v817
    %v819 = vpop.xlane.xlu0 %818
    %v820 = vsel %vm360, %v815, -inf
    %821 = vmax.xlane.f32.xlu0 %v820
    %v822 = vpop.xlane.xlu0 %821
    %v823 = vsub.f32 %v813, %v819
    %v824 = vsub.f32 %v815, %v822
    %v825 = vmul.f32 %v823, 1.442695
    %v826 = vpow.pop %v825
    %v827 = vmul.f32 %v824, 1.442695
    %v828 = vpow.pop %v827
    %v829 = vsel %vm356, %v826, 0.0
    %830 = vadd.xlane.f32.xlu0 %v829
    %v831 = vpop.xlane.xlu0 %830
    %v832 = vsel %vm360, %v828, 0.0
    %833 = vadd.xlane.f32.xlu0 %v832
    %v834 = vpop.xlane.xlu0 %833
    %v835 = vrcp.pop %v831
    %v836 = vrcp.pop %v834
    %v837 = vmul.f32 %v826, %v835
    %v838 = vmul.f32 %v828, %v836
    %v839 = vpack.c.bf16 %v838, %v837
    %840 = vrot.lane.b32.xlu0 %v656, 48
    %v841 = vpop.permute.xlu0 %840
    %v843 = vsel %vm356, %v839, 0
    %v846 = vand.u32 %v841, %v389
    %848 = vmatpush.bf16.msra.mxu0 0
    %849 = vmatpush.bf16.msra.mxu0 0
    %850 = vmatpush.bf16.msra.mxu0 0
    %851 = vmatpush.bf16.msra.mxu0 0
    %852 = vmatpush.bf16.msra.mxu0 0
    %853 = vmatpush.bf16.msra.mxu0 0
    %854 = vmatpush.bf16.msra.mxu0 0
    %855 = vmatpush.bf16.msra.mxu0 %v846
    %856 = vmatmul.bf16.gmra.mxu0 %v843
    %v857 = vpop.f32.mrf.mxu0
    %v858 = vadd.f32 0.0, %v857
    %v859 = vpop.f32.mrf.mxu0
    %v860 = vadd.f32 0.0, %v859
    %861 = vdwg.mxu0
    %862 = vrot.lane.b32.xlu0 %v656, 104
    %v863 = vpop.permute.xlu0 %862
    %864 = vrot.lane.b32.xlu0 %v656, 72
    %v865 = vpop.permute.xlu0 %864
    %v867 = vsel %vm335, %v863, 0
    %v870 = vsel %vm335, %v865, 0
    %872 = vmatpush.bf16.xpose.msra.mxu0 0
    %873 = vmatpush.bf16.xpose.msra.mxu0 0
    %874 = vmatpush.bf16.xpose.msra.mxu0 0
    %875 = vmatpush.bf16.xpose.msra.mxu0 0
    %876 = vmatpush.bf16.xpose.msra.mxu0 0
    %877 = vmatpush.bf16.xpose.msra.mxu0 0
    %878 = vmatpush.bf16.xpose.msra.mxu0 0
    %879 = vmatpush.bf16.xpose.msra.mxu0 %v870
    %880 = vmatmul.bf16.gmra.mxu0 %v867
    %v881 = vpop.f32.mrf.mxu0
    %v882 = vadd.f32 0.0, %v881
    %v883 = vpop.f32.mrf.mxu0
    %v884 = vadd.f32 0.0, %v883
    %885 = vdwg.mxu0
    %v886 = vsel %vm356, %v882, -inf
    %887 = vmax.xlane.f32.xlu0 %v886
    %v888 = vpop.xlane.xlu0 %887
    %v889 = vsel %vm360, %v884, -inf
    %890 = vmax.xlane.f32.xlu0 %v889
    %v891 = vpop.xlane.xlu0 %890
    %v892 = vsub.f32 %v882, %v888
    %v893 = vsub.f32 %v884, %v891
    %v894 = vmul.f32 %v892, 1.442695
    %v895 = vpow.pop %v894
    %v896 = vmul.f32 %v893, 1.442695
    %v897 = vpow.pop %v896
    %v898 = vsel %vm356, %v895, 0.0
    %899 = vadd.xlane.f32.xlu0 %v898
    %v900 = vpop.xlane.xlu0 %899
    %v901 = vsel %vm360, %v897, 0.0
    %902 = vadd.xlane.f32.xlu0 %v901
    %v903 = vpop.xlane.xlu0 %902
    %v904 = vrcp.pop %v900
    %v905 = vrcp.pop %v903
    %v906 = vmul.f32 %v895, %v904
    %v907 = vmul.f32 %v897, %v905
    %v908 = vpack.c.bf16 %v907, %v906
    %909 = vrot.lane.b32.xlu0 %v656, 40
    %v910 = vpop.permute.xlu0 %909
    %v912 = vsel %vm356, %v908, 0
    %v915 = vand.u32 %v910, %v389
    %917 = vmatpush.bf16.msra.mxu0 0
    %918 = vmatpush.bf16.msra.mxu0 0
    %919 = vmatpush.bf16.msra.mxu0 0
    %920 = vmatpush.bf16.msra.mxu0 0
    %921 = vmatpush.bf16.msra.mxu0 0
    %922 = vmatpush.bf16.msra.mxu0 0
    %923 = vmatpush.bf16.msra.mxu0 0
    %924 = vmatpush.bf16.msra.mxu0 %v915
    %925 = vmatmul.bf16.gmra.mxu0 %v912
    %v926 = vpop.f32.mrf.mxu0
    %v927 = vadd.f32 0.0, %v926
    %v928 = vpop.f32.mrf.mxu0
    %v929 = vadd.f32 0.0, %v928
    %930 = vdwg.mxu0
    %933 = vrot.lane.b32.xlu0 %v789, 8
    %v934 = vpop.permute.xlu0 %933
    %935 = vrot.lane.b32.xlu0 %v791, 8
    %v936 = vpop.permute.xlu0 %935
    %941 = vrot.lane.b32.xlu0 %v858, 16
    %v942 = vpop.permute.xlu0 %941
    %943 = vrot.lane.b32.xlu0 %v860, 16
    %v944 = vpop.permute.xlu0 %943
    %949 = vrot.lane.b32.xlu0 %v927, 24
    %v950 = vpop.permute.xlu0 %949
    %951 = vrot.lane.b32.xlu0 %v929, 24
    %v952 = vpop.permute.xlu0 %951
    %v955 = vsel %vm335, %v720, %v934
    %v956 = vsel %vm335, %v722, %v936
    %v957 = vsel %vm640, %v955, %v942
    %v958 = vsel %vm640, %v956, %v944
    %v959 = vsel %vm643, %v957, %v950
    %v960 = vsel %vm643, %v958, %v952
    %vm963 = vcmask 1040384
    %v964 = vrot.slane %v959, 7
    %v965 = vrot.slane %v960, 7
    %v966 = vsel %vm963, %v964, %v965
    %v969 = vsel %vm963, %v645, %v964
    %v970 = vpack.c.bf16 %v969, %v644
    %v971 = vpack.c.bf16 %v966, %v966
    %v972 = vperm.slane %v264, 0
    %v977 = vunpack.c.l.b16 %v275
    %v978 = vunpack.c.l.b16 %v276
    %v979 = vunpack.c.l.b16 %v277
    %v980 = vunpack.c.l.b16 %v278
    %v981 = vpack.c.b16 %v978, %v977
    %v982 = vpack.c.b16 %v980, %v979
    %v986 = vsel %vm180, %v970, 0
    %v989 = vsel %vm180, %v971, 0
    %991 = vmatpush.bf16.msra.mxu0 0
    %992 = vmatpush.bf16.msra.mxu0 0
    %993 = vmatpush.bf16.msra.mxu0 0
    %994 = vmatpush.bf16.msra.mxu0 0
    %995 = vmatpush.bf16.msra.mxu0 0
    %996 = vmatpush.bf16.msra.mxu0 0
    %997 = vmatpush.bf16.msra.mxu0 %v982
    %998 = vmatpush.bf16.msra.mxu0 %v981
    %999 = vmatmul.bf16.gmra.mxu0 %v986
    %v1000 = vpop.f32.mrf.mxu0
    %v1001 = vadd.f32 %v972, %v1000
    %v1002 = vpop.f32.mrf.mxu0
    %v1003 = vadd.f32 %v972, %v1002
    %1004 = vmatmul.bf16.gmra.mxu0 %v989
    %v1005 = vpop.f32.mrf.mxu0
    %v1006 = vadd.f32 %v972, %v1005
    %v1007 = vpop.f32.mrf.mxu0
    %1008 = vdwg.mxu0
    %v1009 = vadd.f32 %v1001, %v260
    %v1010 = vadd.f32 %v1003, %v261
    %v1011 = vadd.f32 %v1006, %v262
    %v1012 = vsel %vm180, %v1009, 0.0
    %1013 = vadd.xlane.f32.xlu0 %v1012
    %v1014 = vpop.xlane.xlu0 %1013
    %v1015 = vsel %vm180, %v1010, 0.0
    %1016 = vadd.xlane.f32.xlu0 %v1015
    %v1017 = vpop.xlane.xlu0 %1016
    %v1018 = vsel %vm187, %v1011, 0.0
    %1019 = vadd.xlane.f32.xlu0 %v1018
    %v1020 = vpop.xlane.xlu0 %1019
    %v1021 = vmul.f32 %v1014, %v197
    %v1022 = vmul.f32 %v1017, %v197
    %v1023 = vmul.f32 %v1020, %v197
    %v1024 = vsub.f32 %v1009, %v1021
    %v1025 = vsub.f32 %v1010, %v1022
    %v1026 = vsub.f32 %v1011, %v1023
    %v1027 = vmul.f32 %v1024, %v1024
    %v1028 = vmul.f32 %v1025, %v1025
    %v1029 = vmul.f32 %v1026, %v1026
    %v1030 = vsel %vm180, %v1027, 0.0
    %1031 = vadd.xlane.f32.xlu0 %v1030
    %v1032 = vpop.xlane.xlu0 %1031
    %v1033 = vsel %vm180, %v1028, 0.0
    %1034 = vadd.xlane.f32.xlu0 %v1033
    %v1035 = vpop.xlane.xlu0 %1034
    %v1036 = vsel %vm187, %v1029, 0.0
    %1037 = vadd.xlane.f32.xlu0 %v1036
    %v1038 = vpop.xlane.xlu0 %1037
    %v1039 = vmul.f32 %v1032, %v197
    %v1040 = vmul.f32 %v1035, %v197
    %v1041 = vmul.f32 %v1038, %v197
    %v1042 = vadd.f32 %v1039, 1e-12
    %v1043 = vadd.f32 %v1040, 1e-12
    %v1044 = vadd.f32 %v1041, 1e-12
    %v1045 = vrsqrt.pop %v1042
    %v1046 = vmul.f32 %v1045, %v1042
    %v1047 = vmul.f32 %v1046, %v1045
    %v1048 = vmul.f32 0.5, %v1047
    %v1049 = vsub.f32 1.5, %v1048
    %v1050 = vmul.f32 %v1045, %v1049
    %vm1051 = vweird.f32 %v1042
    %vm1052 = vweird.f32 %v1045
    %vm1053 = vmor %vm1051, %vm1052
    %v1054 = vsel %vm1053, %v1045, %v1050
    %v1055 = vrsqrt.pop %v1043
    %v1056 = vmul.f32 %v1055, %v1043
    %v1057 = vmul.f32 %v1056, %v1055
    %v1058 = vmul.f32 0.5, %v1057
    %v1059 = vsub.f32 1.5, %v1058
    %v1060 = vmul.f32 %v1055, %v1059
    %vm1061 = vweird.f32 %v1043
    %vm1062 = vweird.f32 %v1055
    %vm1063 = vmor %vm1061, %vm1062
    %v1064 = vsel %vm1063, %v1055, %v1060
    %v1065 = vrsqrt.pop %v1044
    %v1066 = vmul.f32 %v1065, %v1044
    %v1067 = vmul.f32 %v1066, %v1065
    %v1068 = vmul.f32 0.5, %v1067
    %v1069 = vsub.f32 1.5, %v1068
    %v1070 = vmul.f32 %v1065, %v1069
    %vm1071 = vweird.f32 %v1044
    %vm1072 = vweird.f32 %v1065
    %vm1073 = vmor %vm1071, %vm1072
    %v1074 = vsel %vm1073, %v1065, %v1070
    %v1075 = vmul.f32 %v1024, %v1054
    %v1076 = vmul.f32 %v1025, %v1064
    %v1077 = vmul.f32 %v1026, %v1074
    %v1078 = vperm.slane %v265, 0
    %v1079 = vmul.f32 %v1075, %v1078
    %v1080 = vmul.f32 %v1076, %v1078
    %v1081 = vmul.f32 %v1077, %v1078
    %v1082 = vperm.slane %v266, 0
    %v1083 = vadd.f32 %v1079, %v1082
    %v1084 = vadd.f32 %v1080, %v1082
    %v1085 = vadd.f32 %v1081, %v1082
    %v1086 = vpack.c.bf16 %v1084, %v1083
    %v1087 = vpack.c.bf16 %v1085, %v1085
    %v1088 = vperm.slane %v267, 0
    %v1089 = vunpack.c.h.b16 %v271
    %v1090 = vunpack.c.h.b16 %v272
    %v1091 = vunpack.c.h.b16 %v273
    %v1092 = vunpack.c.h.b16 %v274
    %v1093 = vpack.c.b16 %v1090, %v1089
    %v1094 = vpack.c.b16 %v1092, %v1091
    %v1098 = vsel %vm180, %v1086, 0
    %v1101 = vsel %vm180, %v1087, 0
    %1103 = vmatpush.bf16.msra.mxu0 0
    %1104 = vmatpush.bf16.msra.mxu0 0
    %1105 = vmatpush.bf16.msra.mxu0 0
    %1106 = vmatpush.bf16.msra.mxu0 0
    %1107 = vmatpush.bf16.msra.mxu0 0
    %1108 = vmatpush.bf16.msra.mxu0 0
    %1109 = vmatpush.bf16.msra.mxu0 %v1094
    %1110 = vmatpush.bf16.msra.mxu0 %v1093
    %1111 = vmatmul.bf16.gmra.mxu0 %v1098
    %v1112 = vpop.f32.mrf.mxu0
    %v1113 = vadd.f32 %v1088, %v1112
    %v1114 = vpop.f32.mrf.mxu0
    %v1115 = vadd.f32 %v1088, %v1114
    %1116 = vmatmul.bf16.gmra.mxu0 %v1101
    %v1117 = vpop.f32.mrf.mxu0
    %v1118 = vadd.f32 %v1088, %v1117
    %v1119 = vpop.f32.mrf.mxu0
    %1120 = vdwg.mxu0
    %v1121 = vmul.f32 %v1113, 0.5
    %v1122 = vmul.f32 %v1115, 0.5
    %v1123 = vmul.f32 %v1118, 0.5
    %v1124 = vmul.f32 %v1113, 0.044715
    %v1125 = vmul.f32 %v1115, 0.044715
    %v1126 = vmul.f32 %v1118, 0.044715
    %v1127 = vmul.f32 %v1124, %v1113
    %v1128 = vmul.f32 %v1125, %v1115
    %v1129 = vmul.f32 %v1126, %v1118
    %v1130 = vmul.f32 %v1127, %v1113
    %v1131 = vmul.f32 %v1128, %v1115
    %v1132 = vmul.f32 %v1129, %v1118
    %v1133 = vadd.f32 %v1113, %v1130
    %v1134 = vadd.f32 %v1115, %v1131
    %v1135 = vadd.f32 %v1118, %v1132
    %v1136 = vmul.f32 %v1133, 0.7978846
    %v1137 = vmul.f32 %v1134, 0.7978846
    %v1138 = vmul.f32 %v1135, 0.7978846
    %v1139 = vtanh.pop %v1136
    %v1140 = vtanh.pop %v1137
    %v1141 = vtanh.pop %v1138
    %v1142 = vadd.f32 %v1139, 1.0
    %v1143 = vadd.f32 %v1140, 1.0
    %v1144 = vadd.f32 %v1141, 1.0
    %v1145 = vmul.f32 %v1121, %v1142
    %v1146 = vmul.f32 %v1122, %v1143
    %v1147 = vmul.f32 %v1123, %v1144
    %v1148 = vpack.c.bf16 %v1146, %v1145
    %v1149 = vpack.c.bf16 %v1147, %v1147
    %v1150 = vperm.slane %v268, 0
    %v1159 = vunpack.c.l.b16 %v279
    %v1160 = vunpack.c.l.b16 %v280
    %v1161 = vunpack.c.l.b16 %v281
    %v1162 = vunpack.c.l.b16 %v282
    %v1163 = vunpack.c.l.b16 %v283
    %v1164 = vunpack.c.l.b16 %v284
    %v1165 = vunpack.c.l.b16 %v285
    %v1166 = vunpack.c.l.b16 %v286
    %v1167 = vpack.c.b16 %v1160, %v1159
    %v1168 = vpack.c.b16 %v1162, %v1161
    %v1169 = vpack.c.b16 %v1164, %v1163
    %v1170 = vpack.c.b16 %v1166, %v1165
    %vm1175 = vcmask 523264
    %v1177 = vsel %vm1175, %v1148, 0
    %v1180 = vsel %vm1175, %v1149, 0
    %1182 = vmatpush.bf16.msra.mxu0 0
    %1183 = vmatpush.bf16.msra.mxu0 0
    %1184 = vmatpush.bf16.msra.mxu0 0
    %1185 = vmatpush.bf16.msra.mxu0 0
    %1186 = vmatpush.bf16.msra.mxu0 %v1170
    %1187 = vmatpush.bf16.msra.mxu0 %v1169
    %1188 = vmatpush.bf16.msra.mxu0 %v1168
    %1189 = vmatpush.bf16.msra.mxu0 %v1167
    %1190 = vmatmul.bf16.gmra.mxu0 %v1177
    %v1191 = vpop.f32.mrf.mxu0
    %v1192 = vadd.f32 %v1150, %v1191
    %v1193 = vpop.f32.mrf.mxu0
    %v1194 = vadd.f32 %v1150, %v1193
    %1195 = vmatmul.bf16.gmra.mxu0 %v1180
    %v1196 = vpop.f32.mrf.mxu0
    %v1197 = vadd.f32 %v1150, %v1196
    %v1198 = vpop.f32.mrf.mxu0
    %1199 = vdwg.mxu0
    %v1200 = vadd.f32 %v1192, %v1083
    %v1201 = vadd.f32 %v1194, %v1084
    %v1202 = vadd.f32 %v1197, %v1085
    %v1203 = vsel %vm180, %v1200, 0.0
    %1204 = vadd.xlane.f32.xlu0 %v1203
    %v1205 = vpop.xlane.xlu0 %1204
    %v1206 = vsel %vm180, %v1201, 0.0
    %1207 = vadd.xlane.f32.xlu0 %v1206
    %v1208 = vpop.xlane.xlu0 %1207
    %v1209 = vsel %vm187, %v1202, 0.0
    %1210 = vadd.xlane.f32.xlu0 %v1209
    %v1211 = vpop.xlane.xlu0 %1210
    %v1212 = vmul.f32 %v1205, %v197
    %v1213 = vmul.f32 %v1208, %v197
    %v1214 = vmul.f32 %v1211, %v197
    %v1215 = vsub.f32 %v1200, %v1212
    %v1216 = vsub.f32 %v1201, %v1213
    %v1217 = vsub.f32 %v1202, %v1214
    %v1218 = vmul.f32 %v1215, %v1215
    %v1219 = vmul.f32 %v1216, %v1216
    %v1220 = vmul.f32 %v1217, %v1217
    %v1221 = vsel %vm180, %v1218, 0.0
    %1222 = vadd.xlane.f32.xlu0 %v1221
    %v1223 = vpop.xlane.xlu0 %1222
    %v1224 = vsel %vm180, %v1219, 0.0
    %1225 = vadd.xlane.f32.xlu0 %v1224
    %v1226 = vpop.xlane.xlu0 %1225
    %v1227 = vsel %vm187, %v1220, 0.0
    %1228 = vadd.xlane.f32.xlu0 %v1227
    %v1229 = vpop.xlane.xlu0 %1228
    %v1230 = vmul.f32 %v1223, %v197
    %v1231 = vmul.f32 %v1226, %v197
    %v1232 = vmul.f32 %v1229, %v197
    %v1233 = vadd.f32 %v1230, 1e-12
    %v1234 = vadd.f32 %v1231, 1e-12
    %v1235 = vadd.f32 %v1232, 1e-12
    %v1236 = vrsqrt.pop %v1233
    %v1237 = vmul.f32 %v1236, %v1233
    %v1238 = vmul.f32 %v1237, %v1236
    %v1239 = vmul.f32 0.5, %v1238
    %v1240 = vsub.f32 1.5, %v1239
    %v1241 = vmul.f32 %v1236, %v1240
    %vm1242 = vweird.f32 %v1233
    %vm1243 = vweird.f32 %v1236
    %vm1244 = vmor %vm1242, %vm1243
    %v1245 = vsel %vm1244, %v1236, %v1241
    %v1246 = vrsqrt.pop %v1234
    %v1247 = vmul.f32 %v1246, %v1234
    %v1248 = vmul.f32 %v1247, %v1246
    %v1249 = vmul.f32 0.5, %v1248
    %v1250 = vsub.f32 1.5, %v1249
    %v1251 = vmul.f32 %v1246, %v1250
    %vm1252 = vweird.f32 %v1234
    %vm1253 = vweird.f32 %v1246
    %vm1254 = vmor %vm1252, %vm1253
    %v1255 = vsel %vm1254, %v1246, %v1251
    %v1256 = vrsqrt.pop %v1235
    %v1257 = vmul.f32 %v1256, %v1235
    %v1258 = vmul.f32 %v1257, %v1256
    %v1259 = vmul.f32 0.5, %v1258
    %v1260 = vsub.f32 1.5, %v1259
    %v1261 = vmul.f32 %v1256, %v1260
    %vm1262 = vweird.f32 %v1235
    %vm1263 = vweird.f32 %v1256
    %vm1264 = vmor %vm1262, %vm1263
    %v1265 = vsel %vm1264, %v1256, %v1261
    %v1266 = vmul.f32 %v1215, %v1245
    %v1267 = vmul.f32 %v1216, %v1255
    %v1268 = vmul.f32 %v1217, %v1265
    %v1269 = vperm.slane %v269, 0
    %v1270 = vmul.f32 %v1266, %v1269
    %v1271 = vmul.f32 %v1267, %v1269
    %v1272 = vmul.f32 %v1268, %v1269
    %v1273 = vperm.slane %v270, 0
    %v1274 = vadd.f32 %v1270, %v1273
    %v1275 = vadd.f32 %v1271, %v1273
    %v1276 = vadd.f32 %v1272, %v1273
    %v1277 = vadd.f32 %v1274, 0.0
    %v1278 = vadd.f32 %v1275, 0.0
    %v1279 = vadd.f32 %v1276, 0.0
    %v1280 = vld [vmem:[%s5 + $0xa] sm:$0x1]
    %v1281 = vld [vmem:[%s5 + $0xb] sm:$0x1]
    %v1282 = vld [vmem:[%s5 + $0xc] sm:$0x1]
    %v1283 = vld [vmem:[%s5 + $0xd] sm:$0x1]
    %v1284 = vld [vmem:[%s5 + $0xe] sm:$0x1]
    %v1285 = vld [vmem:[%s5 + $0xf] sm:$0x1]
    %v1286 = vld [vmem:[%s5 + $0x10] sm:$0x1]
    %v1287 = vld [vmem:[%s5 + $0x11] sm:$0x1]
    %s1288 = scalar_lea.vmem %s3, 32
    %v1289 = vld [vmem:[%s1288] sm:$0xff]
    %v1290 = vld [vmem:[%s1288 + $0x8] sm:$0xff]
    %v1291 = vld [vmem:[%s1288 + $0x10] sm:$0xff]
    %v1292 = vld [vmem:[%s1288 + $0x18] sm:$0xff]
    %s1293 = scalar_lea.vmem %s4, 48
    %v1294 = vld [vmem:[%s1293] sm:$0xf]
    %v1295 = vld [vmem:[%s1293 + $0x4] sm:$0xf]
    %v1296 = vld [vmem:[%s1293 + $0x8] sm:$0xf]
    %v1297 = vld [vmem:[%s1293 + $0xc] sm:$0xf]
    %v1298 = vld [vmem:[%s1293 + $0x10] sm:$0xf]
    %v1299 = vld [vmem:[%s1293 + $0x14] sm:$0xf]
    %v1300 = vld [vmem:[%s1293 + $0x18] sm:$0xf]
    %v1301 = vld [vmem:[%s1293 + $0x1c] sm:$0xf]
    %v1302 = vld [vmem:[%s1293 + $0x20] sm:$0xf]
    %v1303 = vld [vmem:[%s1293 + $0x24] sm:$0xf]
    %v1304 = vld [vmem:[%s1293 + $0x28] sm:$0xf]
    %v1305 = vld [vmem:[%s1293 + $0x2c] sm:$0xf]
    %v1306 = vpack.c.bf16 %v1275, %v1274
    %v1307 = vpack.c.bf16 %v1276, %v1276
    %v1308 = vperm.slane %v1280, 0
    %v1313 = vunpack.c.l.b16 %v1289
    %v1314 = vunpack.c.l.b16 %v1290
    %v1315 = vunpack.c.l.b16 %v1291
    %v1316 = vunpack.c.l.b16 %v1292
    %v1317 = vpack.c.b16 %v1314, %v1313
    %v1318 = vpack.c.b16 %v1316, %v1315
    %v1322 = vsel %vm180, %v1306, 0
    %v1325 = vsel %vm180, %v1307, 0
    %1327 = vmatpush.bf16.msra.mxu0 0
    %1328 = vmatpush.bf16.msra.mxu0 0
    %1329 = vmatpush.bf16.msra.mxu0 0
    %1330 = vmatpush.bf16.msra.mxu0 0
    %1331 = vmatpush.bf16.msra.mxu0 0
    %1332 = vmatpush.bf16.msra.mxu0 0
    %1333 = vmatpush.bf16.msra.mxu0 %v1318
    %1334 = vmatpush.bf16.msra.mxu0 %v1317
    %1335 = vmatmul.bf16.gmra.mxu0 %v1322
    %v1336 = vpop.f32.mrf.mxu0
    %v1337 = vadd.f32 %v1308, %v1336
    %v1338 = vpop.f32.mrf.mxu0
    %v1339 = vadd.f32 %v1308, %v1338
    %1340 = vmatmul.bf16.gmra.mxu0 %v1325
    %v1341 = vpop.f32.mrf.mxu0
    %v1342 = vadd.f32 %v1308, %v1341
    %v1343 = vpop.f32.mrf.mxu0
    %1344 = vdwg.mxu0
    %v1345 = vpack.c.bf16 %v1337, %v1337
    %v1346 = vpack.c.bf16 %v1339, %v1339
    %v1349 = vunpack.c.l.b16 %v1345
    %v1350 = vunpack.c.l.b16 %v1346
    %v1351 = vpack.c.b16 %v1350, %v1349
    %1352 = vrot.lane.b32.xlu0 %v1351, 96
    %v1353 = vpop.permute.xlu0 %1352
    %v1355 = vsel %vm335, %v1351, 0
    %v1358 = vsel %vm335, %v1353, 0
    %1360 = vmatpush.bf16.xpose.msra.mxu0 0
    %1361 = vmatpush.bf16.xpose.msra.mxu0 0
    %1362 = vmatpush.bf16.xpose.msra.mxu0 0
    %1363 = vmatpush.bf16.xpose.msra.mxu0 0
    %1364 = vmatpush.bf16.xpose.msra.mxu0 0
    %1365 = vmatpush.bf16.xpose.msra.mxu0 0
    %1366 = vmatpush.bf16.xpose.msra.mxu0 0
    %1367 = vmatpush.bf16.xpose.msra.mxu0 %v1358
    %1368 = vmatmul.bf16.gmra.mxu0 %v1355
    %v1369 = vpop.f32.mrf.mxu0
    %v1370 = vadd.f32 0.0, %v1369
    %v1371 = vpop.f32.mrf.mxu0
    %v1372 = vadd.f32 0.0, %v1371
    %1373 = vdwg.mxu0
    %v1374 = vsel %vm356, %v1370, -inf
    %1375 = vmax.xlane.f32.xlu0 %v1374
    %v1376 = vpop.xlane.xlu0 %1375
    %v1377 = vsel %vm360, %v1372, -inf
    %1378 = vmax.xlane.f32.xlu0 %v1377
    %v1379 = vpop.xlane.xlu0 %1378
    %v1380 = vsub.f32 %v1370, %v1376
    %v1381 = vsub.f32 %v1372, %v1379
    %v1382 = vmul.f32 %v1380, 1.442695
    %v1383 = vpow.pop %v1382
    %v1384 = vmul.f32 %v1381, 1.442695
    %v1385 = vpow.pop %v1384
    %v1386 = vsel %vm356, %v1383, 0.0
    %1387 = vadd.xlane.f32.xlu0 %v1386
    %v1388 = vpop.xlane.xlu0 %1387
    %v1389 = vsel %vm360, %v1385, 0.0
    %1390 = vadd.xlane.f32.xlu0 %v1389
    %v1391 = vpop.xlane.xlu0 %1390
    %v1392 = vrcp.pop %v1388
    %v1393 = vrcp.pop %v1391
    %v1394 = vmul.f32 %v1383, %v1392
    %v1395 = vmul.f32 %v1385, %v1393
    %v1396 = vpack.c.bf16 %v1395, %v1394
    %1397 = vrot.lane.b32.xlu0 %v1351, 64
    %v1398 = vpop.permute.xlu0 %1397
    %v1400 = vsel %vm356, %v1396, 0
    %v1403 = vand.u32 %v1398, %v389
    %1405 = vmatpush.bf16.msra.mxu0 0
    %1406 = vmatpush.bf16.msra.mxu0 0
    %1407 = vmatpush.bf16.msra.mxu0 0
    %1408 = vmatpush.bf16.msra.mxu0 0
    %1409 = vmatpush.bf16.msra.mxu0 0
    %1410 = vmatpush.bf16.msra.mxu0 0
    %1411 = vmatpush.bf16.msra.mxu0 0
    %1412 = vmatpush.bf16.msra.mxu0 %v1403
    %1413 = vmatmul.bf16.gmra.mxu0 %v1400
    %v1414 = vpop.f32.mrf.mxu0
    %v1415 = vadd.f32 0.0, %v1414
    %v1416 = vpop.f32.mrf.mxu0
    %v1417 = vadd.f32 0.0, %v1416
    %1418 = vdwg.mxu0
    %1419 = vrot.lane.b32.xlu0 %v1351, 120
    %v1420 = vpop.permute.xlu0 %1419
    %1421 = vrot.lane.b32.xlu0 %v1351, 88
    %v1422 = vpop.permute.xlu0 %1421
    %v1424 = vsel %vm335, %v1420, 0
    %v1427 = vsel %vm335, %v1422, 0
    %1429 = vmatpush.bf16.xpose.msra.mxu0 0
    %1430 = vmatpush.bf16.xpose.msra.mxu0 0
    %1431 = vmatpush.bf16.xpose.msra.mxu0 0
    %1432 = vmatpush.bf16.xpose.msra.mxu0 0
    %1433 = vmatpush.bf16.xpose.msra.mxu0 0
    %1434 = vmatpush.bf16.xpose.msra.mxu0 0
    %1435 = vmatpush.bf16.xpose.msra.mxu0 0
    %1436 = vmatpush.bf16.xpose.msra.mxu0 %v1427
    %1437 = vmatmul.bf16.gmra.mxu0 %v1424
    %v1438 = vpop.f32.mrf.mxu0
    %v1439 = vadd.f32 0.0, %v1438
    %v1440 = vpop.f32.mrf.mxu0
    %v1441 = vadd.f32 0.0, %v1440
    %1442 = vdwg.mxu0
    %v1443 = vsel %vm356, %v1439, -inf
    %1444 = vmax.xlane.f32.xlu0 %v1443
    %v1445 = vpop.xlane.xlu0 %1444
    %v1446 = vsel %vm360, %v1441, -inf
    %1447 = vmax.xlane.f32.xlu0 %v1446
    %v1448 = vpop.xlane.xlu0 %1447
    %v1449 = vsub.f32 %v1439, %v1445
    %v1450 = vsub.f32 %v1441, %v1448
    %v1451 = vmul.f32 %v1449, 1.442695
    %v1452 = vpow.pop %v1451
    %v1453 = vmul.f32 %v1450, 1.442695
    %v1454 = vpow.pop %v1453
    %v1455 = vsel %vm356, %v1452, 0.0
    %1456 = vadd.xlane.f32.xlu0 %v1455
    %v1457 = vpop.xlane.xlu0 %1456
    %v1458 = vsel %vm360, %v1454, 0.0
    %1459 = vadd.xlane.f32.xlu0 %v1458
    %v1460 = vpop.xlane.xlu0 %1459
    %v1461 = vrcp.pop %v1457
    %v1462 = vrcp.pop %v1460
    %v1463 = vmul.f32 %v1452, %v1461
    %v1464 = vmul.f32 %v1454, %v1462
    %v1465 = vpack.c.bf16 %v1464, %v1463
    %1466 = vrot.lane.b32.xlu0 %v1351, 56
    %v1467 = vpop.permute.xlu0 %1466
    %v1469 = vsel %vm356, %v1465, 0
    %v1472 = vand.u32 %v1467, %v389
    %1474 = vmatpush.bf16.msra.mxu0 0
    %1475 = vmatpush.bf16.msra.mxu0 0
    %1476 = vmatpush.bf16.msra.mxu0 0
    %1477 = vmatpush.bf16.msra.mxu0 0
    %1478 = vmatpush.bf16.msra.mxu0 0
    %1479 = vmatpush.bf16.msra.mxu0 0
    %1480 = vmatpush.bf16.msra.mxu0 0
    %1481 = vmatpush.bf16.msra.mxu0 %v1472
    %1482 = vmatmul.bf16.gmra.mxu0 %v1469
    %v1483 = vpop.f32.mrf.mxu0
    %v1484 = vadd.f32 0.0, %v1483
    %v1485 = vpop.f32.mrf.mxu0
    %v1486 = vadd.f32 0.0, %v1485
    %1487 = vdwg.mxu0
    %1488 = vrot.lane.b32.xlu0 %v1351, 112
    %v1489 = vpop.permute.xlu0 %1488
    %1490 = vrot.lane.b32.xlu0 %v1351, 80
    %v1491 = vpop.permute.xlu0 %1490
    %v1493 = vsel %vm335, %v1489, 0
    %v1496 = vsel %vm335, %v1491, 0
    %1498 = vmatpush.bf16.xpose.msra.mxu0 0
    %1499 = vmatpush.bf16.xpose.msra.mxu0 0
    %1500 = vmatpush.bf16.xpose.msra.mxu0 0
    %1501 = vmatpush.bf16.xpose.msra.mxu0 0
    %1502 = vmatpush.bf16.xpose.msra.mxu0 0
    %1503 = vmatpush.bf16.xpose.msra.mxu0 0
    %1504 = vmatpush.bf16.xpose.msra.mxu0 0
    %1505 = vmatpush.bf16.xpose.msra.mxu0 %v1496
    %1506 = vmatmul.bf16.gmra.mxu0 %v1493
    %v1507 = vpop.f32.mrf.mxu0
    %v1508 = vadd.f32 0.0, %v1507
    %v1509 = vpop.f32.mrf.mxu0
    %v1510 = vadd.f32 0.0, %v1509
    %1511 = vdwg.mxu0
    %v1512 = vsel %vm356, %v1508, -inf
    %1513 = vmax.xlane.f32.xlu0 %v1512
    %v1514 = vpop.xlane.xlu0 %1513
    %v1515 = vsel %vm360, %v1510, -inf
    %1516 = vmax.xlane.f32.xlu0 %v1515
    %v1517 = vpop.xlane.xlu0 %1516
    %v1518 = vsub.f32 %v1508, %v1514
    %v1519 = vsub.f32 %v1510, %v1517
    %v1520 = vmul.f32 %v1518, 1.442695
    %v1521 = vpow.pop %v1520
    %v1522 = vmul.f32 %v1519, 1.442695
    %v1523 = vpow.pop %v1522
    %v1524 = vsel %vm356, %v1521, 0.0
    %1525 = vadd.xlane.f32.xlu0 %v1524
    %v1526 = vpop.xlane.xlu0 %1525
    %v1527 = vsel %vm360, %v1523, 0.0
    %1528 = vadd.xlane.f32.xlu0 %v1527
    %v1529 = vpop.xlane.xlu0 %1528
    %v1530 = vrcp.pop %v1526
    %v1531 = vrcp.pop %v1529
    %v1532 = vmul.f32 %v1521, %v1530
    %v1533 = vmul.f32 %v1523, %v1531
    %v1534 = vpack.c.bf16 %v1533, %v1532
    %1535 = vrot.lane.b32.xlu0 %v1351, 48
    %v1536 = vpop.permute.xlu0 %1535
    %v1538 = vsel %vm356, %v1534, 0
    %v1541 = vand.u32 %v1536, %v389
    %1543 = vmatpush.bf16.msra.mxu0 0
    %1544 = vmatpush.bf16.msra.mxu0 0
    %1545 = vmatpush.bf16.msra.mxu0 0
    %1546 = vmatpush.bf16.msra.mxu0 0
    %1547 = vmatpush.bf16.msra.mxu0 0
    %1548 = vmatpush.bf16.msra.mxu0 0
    %1549 = vmatpush.bf16.msra.mxu0 0
    %1550 = vmatpush.bf16.msra.mxu0 %v1541
    %1551 = vmatmul.bf16.gmra.mxu0 %v1538
    %v1552 = vpop.f32.mrf.mxu0
    %v1553 = vadd.f32 0.0, %v1552
    %v1554 = vpop.f32.mrf.mxu0
    %v1555 = vadd.f32 0.0, %v1554
    %1556 = vdwg.mxu0
    %1557 = vrot.lane.b32.xlu0 %v1351, 104
    %v1558 = vpop.permute.xlu0 %1557
    %1559 = vrot.lane.b32.xlu0 %v1351, 72
    %v1560 = vpop.permute.xlu0 %1559
    %v1562 = vsel %vm335, %v1558, 0
    %v1565 = vsel %vm335, %v1560, 0
    %1567 = vmatpush.bf16.xpose.msra.mxu0 0
    %1568 = vmatpush.bf16.xpose.msra.mxu0 0
    %1569 = vmatpush.bf16.xpose.msra.mxu0 0
    %1570 = vmatpush.bf16.xpose.msra.mxu0 0
    %1571 = vmatpush.bf16.xpose.msra.mxu0 0
    %1572 = vmatpush.bf16.xpose.msra.mxu0 0
    %1573 = vmatpush.bf16.xpose.msra.mxu0 0
    %1574 = vmatpush.bf16.xpose.msra.mxu0 %v1565
    %1575 = vmatmul.bf16.gmra.mxu0 %v1562
    %v1576 = vpop.f32.mrf.mxu0
    %v1577 = vadd.f32 0.0, %v1576
    %v1578 = vpop.f32.mrf.mxu0
    %v1579 = vadd.f32 0.0, %v1578
    %1580 = vdwg.mxu0
    %v1581 = vsel %vm356, %v1577, -inf
    %1582 = vmax.xlane.f32.xlu0 %v1581
    %v1583 = vpop.xlane.xlu0 %1582
    %v1584 = vsel %vm360, %v1579, -inf
    %1585 = vmax.xlane.f32.xlu0 %v1584
    %v1586 = vpop.xlane.xlu0 %1585
    %v1587 = vsub.f32 %v1577, %v1583
    %v1588 = vsub.f32 %v1579, %v1586
    %v1589 = vmul.f32 %v1587, 1.442695
    %v1590 = vpow.pop %v1589
    %v1591 = vmul.f32 %v1588, 1.442695
    %v1592 = vpow.pop %v1591
    %v1593 = vsel %vm356, %v1590, 0.0
    %1594 = vadd.xlane.f32.xlu0 %v1593
    %v1595 = vpop.xlane.xlu0 %1594
    %v1596 = vsel %vm360, %v1592, 0.0
    %1597 = vadd.xlane.f32.xlu0 %v1596
    %v1598 = vpop.xlane.xlu0 %1597
    %v1599 = vrcp.pop %v1595
    %v1600 = vrcp.pop %v1598
    %v1601 = vmul.f32 %v1590, %v1599
    %v1602 = vmul.f32 %v1592, %v1600
    %v1603 = vpack.c.bf16 %v1602, %v1601
    %1604 = vrot.lane.b32.xlu0 %v1351, 40
    %v1605 = vpop.permute.xlu0 %1604
    %v1607 = vsel %vm356, %v1603, 0
    %v1610 = vand.u32 %v1605, %v389
    %1612 = vmatpush.bf16.msra.mxu0 0
    %1613 = vmatpush.bf16.msra.mxu0 0
    %1614 = vmatpush.bf16.msra.mxu0 0
    %1615 = vmatpush.bf16.msra.mxu0 0
    %1616 = vmatpush.bf16.msra.mxu0 0
    %1617 = vmatpush.bf16.msra.mxu0 0
    %1618 = vmatpush.bf16.msra.mxu0 0
    %1619 = vmatpush.bf16.msra.mxu0 %v1610
    %1620 = vmatmul.bf16.gmra.mxu0 %v1607
    %v1621 = vpop.f32.mrf.mxu0
    %v1622 = vadd.f32 0.0, %v1621
    %v1623 = vpop.f32.mrf.mxu0
    %v1624 = vadd.f32 0.0, %v1623
    %1625 = vdwg.mxu0
    %1628 = vrot.lane.b32.xlu0 %v1484, 8
    %v1629 = vpop.permute.xlu0 %1628
    %1630 = vrot.lane.b32.xlu0 %v1486, 8
    %v1631 = vpop.permute.xlu0 %1630
    %1636 = vrot.lane.b32.xlu0 %v1553, 16
    %v1637 = vpop.permute.xlu0 %1636
    %1638 = vrot.lane.b32.xlu0 %v1555, 16
    %v1639 = vpop.permute.xlu0 %1638
    %1644 = vrot.lane.b32.xlu0 %v1622, 24
    %v1645 = vpop.permute.xlu0 %1644
    %1646 = vrot.lane.b32.xlu0 %v1624, 24
    %v1647 = vpop.permute.xlu0 %1646
    %v1650 = vsel %vm335, %v1415, %v1629
    %v1651 = vsel %vm335, %v1417, %v1631
    %v1652 = vsel %vm640, %v1650, %v1637
    %v1653 = vsel %vm640, %v1651, %v1639
    %v1654 = vsel %vm643, %v1652, %v1645
    %v1655 = vsel %vm643, %v1653, %v1647
    %v1656 = vpack.c.bf16 %v1342, %v1342
    %v1658 = vunpack.c.l.b16 %v1656
    %v1659 = vpack.c.b16 %v1658, %v1350
    %v1661 = vshrl.u32 %v1659, 16
    %v1663 = vshll.u32 %v1659, 16
    %v1665 = vrot.slane %v1663, 1
    %v1666 = vor.u32 %v1661, %v1665
    %1667 = vrot.lane.b32.xlu0 %v1666, 96
    %v1668 = vpop.permute.xlu0 %1667
    %v1670 = vsel %vm335, %v1666, 0
    %v1673 = vsel %vm335, %v1668, 0
    %1675 = vmatpush.bf16.xpose.msra.mxu0 0
    %1676 = vmatpush.bf16.xpose.msra.mxu0 0
    %1677 = vmatpush.bf16.xpose.msra.mxu0 0
    %1678 = vmatpush.bf16.xpose.msra.mxu0 0
    %1679 = vmatpush.bf16.xpose.msra.mxu0 0
    %1680 = vmatpush.bf16.xpose.msra.mxu0 0
    %1681 = vmatpush.bf16.xpose.msra.mxu0 0
    %1682 = vmatpush.bf16.xpose.msra.mxu0 %v1673
    %1683 = vmatmul.bf16.gmra.mxu0 %v1670
    %v1684 = vpop.f32.mrf.mxu0
    %v1685 = vadd.f32 0.0, %v1684
    %v1686 = vpop.f32.mrf.mxu0
    %v1687 = vadd.f32 0.0, %v1686
    %1688 = vdwg.mxu0
    %v1689 = vsel %vm356, %v1685, -inf
    %1690 = vmax.xlane.f32.xlu0 %v1689
    %v1691 = vpop.xlane.xlu0 %1690
    %v1692 = vsel %vm360, %v1687, -inf
    %1693 = vmax.xlane.f32.xlu0 %v1692
    %v1694 = vpop.xlane.xlu0 %1693
    %v1695 = vsub.f32 %v1685, %v1691
    %v1696 = vsub.f32 %v1687, %v1694
    %v1697 = vmul.f32 %v1695, 1.442695
    %v1698 = vpow.pop %v1697
    %v1699 = vmul.f32 %v1696, 1.442695
    %v1700 = vpow.pop %v1699
    %v1701 = vsel %vm356, %v1698, 0.0
    %1702 = vadd.xlane.f32.xlu0 %v1701
    %v1703 = vpop.xlane.xlu0 %1702
    %v1704 = vsel %vm360, %v1700, 0.0
    %1705 = vadd.xlane.f32.xlu0 %v1704
    %v1706 = vpop.xlane.xlu0 %1705
    %v1707 = vrcp.pop %v1703
    %v1708 = vrcp.pop %v1706
    %v1709 = vmul.f32 %v1698, %v1707
    %v1710 = vmul.f32 %v1700, %v1708
    %v1711 = vpack.c.bf16 %v1710, %v1709
    %1712 = vrot.lane.b32.xlu0 %v1666, 64
    %v1713 = vpop.permute.xlu0 %1712
    %v1715 = vsel %vm356, %v1711, 0
    %v1718 = vand.u32 %v1713, %v389
    %1720 = vmatpush.bf16.msra.mxu0 0
    %1721 = vmatpush.bf16.msra.mxu0 0
    %1722 = vmatpush.bf16.msra.mxu0 0
    %1723 = vmatpush.bf16.msra.mxu0 0
    %1724 = vmatpush.bf16.msra.mxu0 0
    %1725 = vmatpush.bf16.msra.mxu0 0
    %1726 = vmatpush.bf16.msra.mxu0 0
    %1727 = vmatpush.bf16.msra.mxu0 %v1718
    %1728 = vmatmul.bf16.gmra.mxu0 %v1715
    %v1729 = vpop.f32.mrf.mxu0
    %v1730 = vadd.f32 0.0, %v1729
    %v1731 = vpop.f32.mrf.mxu0
    %v1732 = vadd.f32 0.0, %v1731
    %1733 = vdwg.mxu0
    %1734 = vrot.lane.b32.xlu0 %v1666, 120
    %v1735 = vpop.permute.xlu0 %1734
    %1736 = vrot.lane.b32.xlu0 %v1666, 88
    %v1737 = vpop.permute.xlu0 %1736
    %v1739 = vsel %vm335, %v1735, 0
    %v1742 = vsel %vm335, %v1737, 0
    %1744 = vmatpush.bf16.xpose.msra.mxu0 0
    %1745 = vmatpush.bf16.xpose.msra.mxu0 0
    %1746 = vmatpush.bf16.xpose.msra.mxu0 0
    %1747 = vmatpush.bf16.xpose.msra.mxu0 0
    %1748 = vmatpush.bf16.xpose.msra.mxu0 0
    %1749 = vmatpush.bf16.xpose.msra.mxu0 0
    %1750 = vmatpush.bf16.xpose.msra.mxu0 0
    %1751 = vmatpush.bf16.xpose.msra.mxu0 %v1742
    %1752 = vmatmul.bf16.gmra.mxu0 %v1739
    %v1753 = vpop.f32.mrf.mxu0
    %v1754 = vadd.f32 0.0, %v1753
    %v1755 = vpop.f32.mrf.mxu0
    %v1756 = vadd.f32 0.0, %v1755
    %1757 = vdwg.mxu0
    %v1758 = vsel %vm356, %v1754, -inf
    %1759 = vmax.xlane.f32.xlu0 %v1758
    %v1760 = vpop.xlane.xlu0 %1759
    %v1761 = vsel %vm360, %v1756, -inf
    %1762 = vmax.xlane.f32.xlu0 %v1761
    %v1763 = vpop.xlane.xlu0 %1762
    %v1764 = vsub.f32 %v1754, %v1760
    %v1765 = vsub.f32 %v1756, %v1763
    %v1766 = vmul.f32 %v1764, 1.442695
    %v1767 = vpow.pop %v1766
    %v1768 = vmul.f32 %v1765, 1.442695
    %v1769 = vpow.pop %v1768
    %v1770 = vsel %vm356, %v1767, 0.0
    %1771 = vadd.xlane.f32.xlu0 %v1770
    %v1772 = vpop.xlane.xlu0 %1771
    %v1773 = vsel %vm360, %v1769, 0.0
    %1774 = vadd.xlane.f32.xlu0 %v1773
    %v1775 = vpop.xlane.xlu0 %1774
    %v1776 = vrcp.pop %v1772
    %v1777 = vrcp.pop %v1775
    %v1778 = vmul.f32 %v1767, %v1776
    %v1779 = vmul.f32 %v1769, %v1777
    %v1780 = vpack.c.bf16 %v1779, %v1778
    %1781 = vrot.lane.b32.xlu0 %v1666, 56
    %v1782 = vpop.permute.xlu0 %1781
    %v1784 = vsel %vm356, %v1780, 0
    %v1787 = vand.u32 %v1782, %v389
    %1789 = vmatpush.bf16.msra.mxu0 0
    %1790 = vmatpush.bf16.msra.mxu0 0
    %1791 = vmatpush.bf16.msra.mxu0 0
    %1792 = vmatpush.bf16.msra.mxu0 0
    %1793 = vmatpush.bf16.msra.mxu0 0
    %1794 = vmatpush.bf16.msra.mxu0 0
    %1795 = vmatpush.bf16.msra.mxu0 0
    %1796 = vmatpush.bf16.msra.mxu0 %v1787
    %1797 = vmatmul.bf16.gmra.mxu0 %v1784
    %v1798 = vpop.f32.mrf.mxu0
    %v1799 = vadd.f32 0.0, %v1798
    %v1800 = vpop.f32.mrf.mxu0
    %v1801 = vadd.f32 0.0, %v1800
    %1802 = vdwg.mxu0
    %1803 = vrot.lane.b32.xlu0 %v1666, 112
    %v1804 = vpop.permute.xlu0 %1803
    %1805 = vrot.lane.b32.xlu0 %v1666, 80
    %v1806 = vpop.permute.xlu0 %1805
    %v1808 = vsel %vm335, %v1804, 0
    %v1811 = vsel %vm335, %v1806, 0
    %1813 = vmatpush.bf16.xpose.msra.mxu0 0
    %1814 = vmatpush.bf16.xpose.msra.mxu0 0
    %1815 = vmatpush.bf16.xpose.msra.mxu0 0
    %1816 = vmatpush.bf16.xpose.msra.mxu0 0
    %1817 = vmatpush.bf16.xpose.msra.mxu0 0
    %1818 = vmatpush.bf16.xpose.msra.mxu0 0
    %1819 = vmatpush.bf16.xpose.msra.mxu0 0
    %1820 = vmatpush.bf16.xpose.msra.mxu0 %v1811
    %1821 = vmatmul.bf16.gmra.mxu0 %v1808
    %v1822 = vpop.f32.mrf.mxu0
    %v1823 = vadd.f32 0.0, %v1822
    %v1824 = vpop.f32.mrf.mxu0
    %v1825 = vadd.f32 0.0, %v1824
    %1826 = vdwg.mxu0
    %v1827 = vsel %vm356, %v1823, -inf
    %1828 = vmax.xlane.f32.xlu0 %v1827
    %v1829 = vpop.xlane.xlu0 %1828
    %v1830 = vsel %vm360, %v1825, -inf
    %1831 = vmax.xlane.f32.xlu0 %v1830
    %v1832 = vpop.xlane.xlu0 %1831
    %v1833 = vsub.f32 %v1823, %v1829
    %v1834 = vsub.f32 %v1825, %v1832
    %v1835 = vmul.f32 %v1833, 1.442695
    %v1836 = vpow.pop %v1835
    %v1837 = vmul.f32 %v1834, 1.442695
    %v1838 = vpow.pop %v1837
    %v1839 = vsel %vm356, %v1836, 0.0
    %1840 = vadd.xlane.f32.xlu0 %v1839
    %v1841 = vpop.xlane.xlu0 %1840
    %v1842 = vsel %vm360, %v1838, 0.0
    %1843 = vadd.xlane.f32.xlu0 %v1842
    %v1844 = vpop.xlane.xlu0 %1843
    %v1845 = vrcp.pop %v1841
    %v1846 = vrcp.pop %v1844
    %v1847 = vmul.f32 %v1836, %v1845
    %v1848 = vmul.f32 %v1838, %v1846
    %v1849 = vpack.c.bf16 %v1848, %v1847
    %1850 = vrot.lane.b32.xlu0 %v1666, 48
    %v1851 = vpop.permute.xlu0 %1850
    %v1853 = vsel %vm356, %v1849, 0
    %v1856 = vand.u32 %v1851, %v389
    %1858 = vmatpush.bf16.msra.mxu0 0
    %1859 = vmatpush.bf16.msra.mxu0 0
    %1860 = vmatpush.bf16.msra.mxu0 0
    %1861 = vmatpush.bf16.msra.mxu0 0
    %1862 = vmatpush.bf16.msra.mxu0 0
    %1863 = vmatpush.bf16.msra.mxu0 0
    %1864 = vmatpush.bf16.msra.mxu0 0
    %1865 = vmatpush.bf16.msra.mxu0 %v1856
    %1866 = vmatmul.bf16.gmra.mxu0 %v1853
    %v1867 = vpop.f32.mrf.mxu0
    %v1868 = vadd.f32 0.0, %v1867
    %v1869 = vpop.f32.mrf.mxu0
    %v1870 = vadd.f32 0.0, %v1869
    %1871 = vdwg.mxu0
    %1872 = vrot.lane.b32.xlu0 %v1666, 104
    %v1873 = vpop.permute.xlu0 %1872
    %1874 = vrot.lane.b32.xlu0 %v1666, 72
    %v1875 = vpop.permute.xlu0 %1874
    %v1877 = vsel %vm335, %v1873, 0
    %v1880 = vsel %vm335, %v1875, 0
    %1882 = vmatpush.bf16.xpose.msra.mxu0 0
    %1883 = vmatpush.bf16.xpose.msra.mxu0 0
    %1884 = vmatpush.bf16.xpose.msra.mxu0 0
    %1885 = vmatpush.bf16.xpose.msra.mxu0 0
    %1886 = vmatpush.bf16.xpose.msra.mxu0 0
    %1887 = vmatpush.bf16.xpose.msra.mxu0 0
    %1888 = vmatpush.bf16.xpose.msra.mxu0 0
    %1889 = vmatpush.bf16.xpose.msra.mxu0 %v1880
    %1890 = vmatmul.bf16.gmra.mxu0 %v1877
    %v1891 = vpop.f32.mrf.mxu0
    %v1892 = vadd.f32 0.0, %v1891
    %v1893 = vpop.f32.mrf.mxu0
    %v1894 = vadd.f32 0.0, %v1893
    %1895 = vdwg.mxu0
    %v1896 = vsel %vm356, %v1892, -inf
    %1897 = vmax.xlane.f32.xlu0 %v1896
    %v1898 = vpop.xlane.xlu0 %1897
    %v1899 = vsel %vm360, %v1894, -inf
    %1900 = vmax.xlane.f32.xlu0 %v1899
    %v1901 = vpop.xlane.xlu0 %1900
    %v1902 = vsub.f32 %v1892, %v1898
    %v1903 = vsub.f32 %v1894, %v1901
    %v1904 = vmul.f32 %v1902, 1.442695
    %v1905 = vpow.pop %v1904
    %v1906 = vmul.f32 %v1903, 1.442695
    %v1907 = vpow.pop %v1906
    %v1908 = vsel %vm356, %v1905, 0.0
    %1909 = vadd.xlane.f32.xlu0 %v1908
    %v1910 = vpop.xlane.xlu0 %1909
    %v1911 = vsel %vm360, %v1907, 0.0
    %1912 = vadd.xlane.f32.xlu0 %v1911
    %v1913 = vpop.xlane.xlu0 %1912
    %v1914 = vrcp.pop %v1910
    %v1915 = vrcp.pop %v1913
    %v1916 = vmul.f32 %v1905, %v1914
    %v1917 = vmul.f32 %v1907, %v1915
    %v1918 = vpack.c.bf16 %v1917, %v1916
    %1919 = vrot.lane.b32.xlu0 %v1666, 40
    %v1920 = vpop.permute.xlu0 %1919
    %v1922 = vsel %vm356, %v1918, 0
    %v1925 = vand.u32 %v1920, %v389
    %1927 = vmatpush.bf16.msra.mxu0 0
    %1928 = vmatpush.bf16.msra.mxu0 0
    %1929 = vmatpush.bf16.msra.mxu0 0
    %1930 = vmatpush.bf16.msra.mxu0 0
    %1931 = vmatpush.bf16.msra.mxu0 0
    %1932 = vmatpush.bf16.msra.mxu0 0
    %1933 = vmatpush.bf16.msra.mxu0 0
    %1934 = vmatpush.bf16.msra.mxu0 %v1925
    %1935 = vmatmul.bf16.gmra.mxu0 %v1922
    %v1936 = vpop.f32.mrf.mxu0
    %v1937 = vadd.f32 0.0, %v1936
    %v1938 = vpop.f32.mrf.mxu0
    %v1939 = vadd.f32 0.0, %v1938
    %1940 = vdwg.mxu0
    %1943 = vrot.lane.b32.xlu0 %v1799, 8
    %v1944 = vpop.permute.xlu0 %1943
    %1945 = vrot.lane.b32.xlu0 %v1801, 8
    %v1946 = vpop.permute.xlu0 %1945
    %1951 = vrot.lane.b32.xlu0 %v1868, 16
    %v1952 = vpop.permute.xlu0 %1951
    %1953 = vrot.lane.b32.xlu0 %v1870, 16
    %v1954 = vpop.permute.xlu0 %1953
    %1959 = vrot.lane.b32.xlu0 %v1937, 24
    %v1960 = vpop.permute.xlu0 %1959
    %1961 = vrot.lane.b32.xlu0 %v1939, 24
    %v1962 = vpop.permute.xlu0 %1961
    %v1965 = vsel %vm335, %v1730, %v1944
    %v1966 = vsel %vm335, %v1732, %v1946
    %v1967 = vsel %vm640, %v1965, %v1952
    %v1968 = vsel %vm640, %v1966, %v1954
    %v1969 = vsel %vm643, %v1967, %v1960
    %v1970 = vsel %vm643, %v1968, %v1962
    %v1973 = vrot.slane %v1969, 7
    %v1974 = vrot.slane %v1970, 7
    %v1975 = vsel %vm963, %v1973, %v1974
    %v1978 = vsel %vm963, %v1655, %v1973
    %v1979 = vpack.c.bf16 %v1978, %v1654
    %v1980 = vpack.c.bf16 %v1975, %v1975
    %v1981 = vperm.slane %v1281, 0
    %v1986 = vunpack.c.l.b16 %v1294
    %v1987 = vunpack.c.l.b16 %v1295
    %v1988 = vunpack.c.l.b16 %v1296
    %v1989 = vunpack.c.l.b16 %v1297
    %v1990 = vpack.c.b16 %v1987, %v1986
    %v1991 = vpack.c.b16 %v1989, %v1988
    %v1995 = vsel %vm180, %v1979, 0
    %v1998 = vsel %vm180, %v1980, 0
    %2000 = vmatpush.bf16.msra.mxu0 0
    %2001 = vmatpush.bf16.msra.mxu0 0
    %2002 = vmatpush.bf16.msra.mxu0 0
    %2003 = vmatpush.bf16.msra.mxu0 0
    %2004 = vmatpush.bf16.msra.mxu0 0
    %2005 = vmatpush.bf16.msra.mxu0 0
    %2006 = vmatpush.bf16.msra.mxu0 %v1991
    %2007 = vmatpush.bf16.msra.mxu0 %v1990
    %2008 = vmatmul.bf16.gmra.mxu0 %v1995
    %v2009 = vpop.f32.mrf.mxu0
    %v2010 = vadd.f32 %v1981, %v2009
    %v2011 = vpop.f32.mrf.mxu0
    %v2012 = vadd.f32 %v1981, %v2011
    %2013 = vmatmul.bf16.gmra.mxu0 %v1998
    %v2014 = vpop.f32.mrf.mxu0
    %v2015 = vadd.f32 %v1981, %v2014
    %v2016 = vpop.f32.mrf.mxu0
    %2017 = vdwg.mxu0
    %v2018 = vadd.f32 %v2010, %v1274
    %v2019 = vadd.f32 %v2012, %v1275
    %v2020 = vadd.f32 %v2015, %v1276
    %v2021 = vsel %vm180, %v2018, 0.0
    %2022 = vadd.xlane.f32.xlu0 %v2021
    %v2023 = vpop.xlane.xlu0 %2022
    %v2024 = vsel %vm180, %v2019, 0.0
    %2025 = vadd.xlane.f32.xlu0 %v2024
    %v2026 = vpop.xlane.xlu0 %2025
    %v2027 = vsel %vm187, %v2020, 0.0
    %2028 = vadd.xlane.f32.xlu0 %v2027
    %v2029 = vpop.xlane.xlu0 %2028
    %v2030 = vmul.f32 %v2023, %v197
    %v2031 = vmul.f32 %v2026, %v197
    %v2032 = vmul.f32 %v2029, %v197
    %v2033 = vsub.f32 %v2018, %v2030
    %v2034 = vsub.f32 %v2019, %v2031
    %v2035 = vsub.f32 %v2020, %v2032
    %v2036 = vmul.f32 %v2033, %v2033
    %v2037 = vmul.f32 %v2034, %v2034
    %v2038 = vmul.f32 %v2035, %v2035
    %v2039 = vsel %vm180, %v2036, 0.0
    %2040 = vadd.xlane.f32.xlu0 %v2039
    %v2041 = vpop.xlane.xlu0 %2040
    %v2042 = vsel %vm180, %v2037, 0.0
    %2043 = vadd.xlane.f32.xlu0 %v2042
    %v2044 = vpop.xlane.xlu0 %2043
    %v2045 = vsel %vm187, %v2038, 0.0
    %2046 = vadd.xlane.f32.xlu0 %v2045
    %v2047 = vpop.xlane.xlu0 %2046
    %v2048 = vmul.f32 %v2041, %v197
    %v2049 = vmul.f32 %v2044, %v197
    %v2050 = vmul.f32 %v2047, %v197
    %v2051 = vadd.f32 %v2048, 1e-12
    %v2052 = vadd.f32 %v2049, 1e-12
    %v2053 = vadd.f32 %v2050, 1e-12
    %v2054 = vrsqrt.pop %v2051
    %v2055 = vmul.f32 %v2054, %v2051
    %v2056 = vmul.f32 %v2055, %v2054
    %v2057 = vmul.f32 0.5, %v2056
    %v2058 = vsub.f32 1.5, %v2057
    %v2059 = vmul.f32 %v2054, %v2058
    %vm2060 = vweird.f32 %v2051
    %vm2061 = vweird.f32 %v2054
    %vm2062 = vmor %vm2060, %vm2061
    %v2063 = vsel %vm2062, %v2054, %v2059
    %v2064 = vrsqrt.pop %v2052
    %v2065 = vmul.f32 %v2064, %v2052
    %v2066 = vmul.f32 %v2065, %v2064
    %v2067 = vmul.f32 0.5, %v2066
    %v2068 = vsub.f32 1.5, %v2067
    %v2069 = vmul.f32 %v2064, %v2068
    %vm2070 = vweird.f32 %v2052
    %vm2071 = vweird.f32 %v2064
    %vm2072 = vmor %vm2070, %vm2071
    %v2073 = vsel %vm2072, %v2064, %v2069
    %v2074 = vrsqrt.pop %v2053
    %v2075 = vmul.f32 %v2074, %v2053
    %v2076 = vmul.f32 %v2075, %v2074
    %v2077 = vmul.f32 0.5, %v2076
    %v2078 = vsub.f32 1.5, %v2077
    %v2079 = vmul.f32 %v2074, %v2078
    %vm2080 = vweird.f32 %v2053
    %vm2081 = vweird.f32 %v2074
    %vm2082 = vmor %vm2080, %vm2081
    %v2083 = vsel %vm2082, %v2074, %v2079
    %v2084 = vmul.f32 %v2033, %v2063
    %v2085 = vmul.f32 %v2034, %v2073
    %v2086 = vmul.f32 %v2035, %v2083
    %v2087 = vperm.slane %v1282, 0
    %v2088 = vmul.f32 %v2084, %v2087
    %v2089 = vmul.f32 %v2085, %v2087
    %v2090 = vmul.f32 %v2086, %v2087
    %v2091 = vperm.slane %v1283, 0
    %v2092 = vadd.f32 %v2088, %v2091
    %v2093 = vadd.f32 %v2089, %v2091
    %v2094 = vadd.f32 %v2090, %v2091
    %v2095 = vpack.c.bf16 %v2093, %v2092
    %v2096 = vpack.c.bf16 %v2094, %v2094
    %v2097 = vperm.slane %v1284, 0
    %v2098 = vunpack.c.h.b16 %v1289
    %v2099 = vunpack.c.h.b16 %v1290
    %v2100 = vunpack.c.h.b16 %v1291
    %v2101 = vunpack.c.h.b16 %v1292
    %v2102 = vpack.c.b16 %v2099, %v2098
    %v2103 = vpack.c.b16 %v2101, %v2100
    %v2107 = vsel %vm180, %v2095, 0
    %v2110 = vsel %vm180, %v2096, 0
    %2112 = vmatpush.bf16.msra.mxu0 0
    %2113 = vmatpush.bf16.msra.mxu0 0
    %2114 = vmatpush.bf16.msra.mxu0 0
    %2115 = vmatpush.bf16.msra.mxu0 0
    %2116 = vmatpush.bf16.msra.mxu0 0
    %2117 = vmatpush.bf16.msra.mxu0 0
    %2118 = vmatpush.bf16.msra.mxu0 %v2103
    %2119 = vmatpush.bf16.msra.mxu0 %v2102
    %2120 = vmatmul.bf16.gmra.mxu0 %v2107
    %v2121 = vpop.f32.mrf.mxu0
    %v2122 = vadd.f32 %v2097, %v2121
    %v2123 = vpop.f32.mrf.mxu0
    %v2124 = vadd.f32 %v2097, %v2123
    %2125 = vmatmul.bf16.gmra.mxu0 %v2110
    %v2126 = vpop.f32.mrf.mxu0
    %v2127 = vadd.f32 %v2097, %v2126
    %v2128 = vpop.f32.mrf.mxu0
    %2129 = vdwg.mxu0
    %v2130 = vmul.f32 %v2122, 0.5
    %v2131 = vmul.f32 %v2124, 0.5
    %v2132 = vmul.f32 %v2127, 0.5
    %v2133 = vmul.f32 %v2122, 0.044715
    %v2134 = vmul.f32 %v2124, 0.044715
    %v2135 = vmul.f32 %v2127, 0.044715
    %v2136 = vmul.f32 %v2133, %v2122
    %v2137 = vmul.f32 %v2134, %v2124
    %v2138 = vmul.f32 %v2135, %v2127
    %v2139 = vmul.f32 %v2136, %v2122
    %v2140 = vmul.f32 %v2137, %v2124
    %v2141 = vmul.f32 %v2138, %v2127
    %v2142 = vadd.f32 %v2122, %v2139
    %v2143 = vadd.f32 %v2124, %v2140
    %v2144 = vadd.f32 %v2127, %v2141
    %v2145 = vmul.f32 %v2142, 0.7978846
    %v2146 = vmul.f32 %v2143, 0.7978846
    %v2147 = vmul.f32 %v2144, 0.7978846
    %v2148 = vtanh.pop %v2145
    %v2149 = vtanh.pop %v2146
    %v2150 = vtanh.pop %v2147
    %v2151 = vadd.f32 %v2148, 1.0
    %v2152 = vadd.f32 %v2149, 1.0
    %v2153 = vadd.f32 %v2150, 1.0
    %v2154 = vmul.f32 %v2130, %v2151
    %v2155 = vmul.f32 %v2131, %v2152
    %v2156 = vmul.f32 %v2132, %v2153
    %v2157 = vpack.c.bf16 %v2155, %v2154
    %v2158 = vpack.c.bf16 %v2156, %v2156
    %v2159 = vperm.slane %v1285, 0
    %v2168 = vunpack.c.l.b16 %v1298
    %v2169 = vunpack.c.l.b16 %v1299
    %v2170 = vunpack.c.l.b16 %v1300
    %v2171 = vunpack.c.l.b16 %v1301
    %v2172 = vunpack.c.l.b16 %v1302
    %v2173 = vunpack.c.l.b16 %v1303
    %v2174 = vunpack.c.l.b16 %v1304
    %v2175 = vunpack.c.l.b16 %v1305
    %v2176 = vpack.c.b16 %v2169, %v2168
    %v2177 = vpack.c.b16 %v2171, %v2170
    %v2178 = vpack.c.b16 %v2173, %v2172
    %v2179 = vpack.c.b16 %v2175, %v2174
    %v2185 = vsel %vm1175, %v2157, 0
    %v2188 = vsel %vm1175, %v2158, 0
    %2190 = vmatpush.bf16.msra.mxu0 0
    %2191 = vmatpush.bf16.msra.mxu0 0
    %2192 = vmatpush.bf16.msra.mxu0 0
    %2193 = vmatpush.bf16.msra.mxu0 0
    %2194 = vmatpush.bf16.msra.mxu0 %v2179
    %2195 = vmatpush.bf16.msra.mxu0 %v2178
    %2196 = vmatpush.bf16.msra.mxu0 %v2177
    %2197 = vmatpush.bf16.msra.mxu0 %v2176
    %2198 = vmatmul.bf16.gmra.mxu0 %v2185
    %v2199 = vpop.f32.mrf.mxu0
    %v2200 = vadd.f32 %v2159, %v2199
    %v2201 = vpop.f32.mrf.mxu0
    %v2202 = vadd.f32 %v2159, %v2201
    %2203 = vmatmul.bf16.gmra.mxu0 %v2188
    %v2204 = vpop.f32.mrf.mxu0
    %v2205 = vadd.f32 %v2159, %v2204
    %v2206 = vpop.f32.mrf.mxu0
    %2207 = vdwg.mxu0
    %v2208 = vadd.f32 %v2200, %v2092
    %v2209 = vadd.f32 %v2202, %v2093
    %v2210 = vadd.f32 %v2205, %v2094
    %v2211 = vsel %vm180, %v2208, 0.0
    %2212 = vadd.xlane.f32.xlu0 %v2211
    %v2213 = vpop.xlane.xlu0 %2212
    %v2214 = vsel %vm180, %v2209, 0.0
    %2215 = vadd.xlane.f32.xlu0 %v2214
    %v2216 = vpop.xlane.xlu0 %2215
    %v2217 = vsel %vm187, %v2210, 0.0
    %2218 = vadd.xlane.f32.xlu0 %v2217
    %v2219 = vpop.xlane.xlu0 %2218
    %v2220 = vmul.f32 %v2213, %v197
    %v2221 = vmul.f32 %v2216, %v197
    %v2222 = vmul.f32 %v2219, %v197
    %v2223 = vsub.f32 %v2208, %v2220
    %v2224 = vsub.f32 %v2209, %v2221
    %v2225 = vsub.f32 %v2210, %v2222
    %v2226 = vmul.f32 %v2223, %v2223
    %v2227 = vmul.f32 %v2224, %v2224
    %v2228 = vmul.f32 %v2225, %v2225
    %v2229 = vsel %vm180, %v2226, 0.0
    %2230 = vadd.xlane.f32.xlu0 %v2229
    %v2231 = vpop.xlane.xlu0 %2230
    %v2232 = vsel %vm180, %v2227, 0.0
    %2233 = vadd.xlane.f32.xlu0 %v2232
    %v2234 = vpop.xlane.xlu0 %2233
    %v2235 = vsel %vm187, %v2228, 0.0
    %2236 = vadd.xlane.f32.xlu0 %v2235
    %v2237 = vpop.xlane.xlu0 %2236
    %v2238 = vmul.f32 %v2231, %v197
    %v2239 = vmul.f32 %v2234, %v197
    %v2240 = vmul.f32 %v2237, %v197
    %v2241 = vadd.f32 %v2238, 1e-12
    %v2242 = vadd.f32 %v2239, 1e-12
    %v2243 = vadd.f32 %v2240, 1e-12
    %v2244 = vrsqrt.pop %v2241
    %v2245 = vmul.f32 %v2244, %v2241
    %v2246 = vmul.f32 %v2245, %v2244
    %v2247 = vmul.f32 0.5, %v2246
    %v2248 = vsub.f32 1.5, %v2247
    %v2249 = vmul.f32 %v2244, %v2248
    %vm2250 = vweird.f32 %v2241
    %vm2251 = vweird.f32 %v2244
    %vm2252 = vmor %vm2250, %vm2251
    %v2253 = vsel %vm2252, %v2244, %v2249
    %v2254 = vrsqrt.pop %v2242
    %v2255 = vmul.f32 %v2254, %v2242
    %v2256 = vmul.f32 %v2255, %v2254
    %v2257 = vmul.f32 0.5, %v2256
    %v2258 = vsub.f32 1.5, %v2257
    %v2259 = vmul.f32 %v2254, %v2258
    %vm2260 = vweird.f32 %v2242
    %vm2261 = vweird.f32 %v2254
    %vm2262 = vmor %vm2260, %vm2261
    %v2263 = vsel %vm2262, %v2254, %v2259
    %v2264 = vrsqrt.pop %v2243
    %v2265 = vmul.f32 %v2264, %v2243
    %v2266 = vmul.f32 %v2265, %v2264
    %v2267 = vmul.f32 0.5, %v2266
    %v2268 = vsub.f32 1.5, %v2267
    %v2269 = vmul.f32 %v2264, %v2268
    %vm2270 = vweird.f32 %v2243
    %vm2271 = vweird.f32 %v2264
    %vm2272 = vmor %vm2270, %vm2271
    %v2273 = vsel %vm2272, %v2264, %v2269
    %v2274 = vmul.f32 %v2223, %v2253
    %v2275 = vmul.f32 %v2224, %v2263
    %v2276 = vmul.f32 %v2225, %v2273
    %v2277 = vperm.slane %v1286, 0
    %v2278 = vmul.f32 %v2274, %v2277
    %v2279 = vmul.f32 %v2275, %v2277
    %v2280 = vmul.f32 %v2276, %v2277
    %v2281 = vperm.slane %v1287, 0
    %v2282 = vadd.f32 %v2278, %v2281
    %v2283 = vadd.f32 %v2279, %v2281
    %v2284 = vadd.f32 %v2280, %v2281
    %v2285 = vadd.f32 %v1277, %v2282
    %v2286 = vadd.f32 %v1278, %v2283
    %v2287 = vadd.f32 %v1279, %v2284
    %2288 = vst.msk [vmem:[%s6] sm:$0xff] %vm180, %v2285
    %2289 = vst.msk [vmem:[%s6 + $0x8] sm:$0xff] %vm180, %v2286
    %2290 = vst.msk [vmem:[%s6 + $0x10] sm:$0x3] %vm187, %v2287
    // Predicated region
    $region26: #{bert_embedding_predictor.1} parent=1 // pred_check
      _
    $region27: #{bert_embedding_predictor.1} parent=1 // pred_check_branch
      %2292 = sbr.rel (0) target = $region29
    $region28: #{bert_embedding_predictor.1} parent=1 // pred_region
      _
    $region29: #{bert_embedding_predictor.1} parent=1 // pred_fallthru
      _
    // Predicated region
    $region30: #{bert_embedding_predictor.1} parent=1 // pred_check
      _
    $region31: #{bert_embedding_predictor.1} parent=1 // pred_check_branch
      %2294 = sbr.rel (0) target = $region33
    $region32: #{bert_embedding_predictor.1} parent=1 // pred_region
      _
    $region33: #{bert_embedding_predictor.1} parent=1 // pred_fallthru
      _
    %2295 = vsyncpa [#allocation6], 1

</llo_original>
